<compile_context>
chip_gen: v7x
topology: tpu7x:2x2x1
jax: 0.10.0
libtpu: 0.0.40
codegen_flags: <defaults>
</compile_context>

<pallas_src>
import jax
import jax.numpy as jnp
from jax.experimental import pallas as pl
from jax.experimental.pallas import tpu as pltpu

BN_EPS = 0.8     # nn.BatchNorm2d(out_, 0.8) -> positional arg is eps
LANES = 128      # pad GEMM output width to full lane dim
TILE_M = 512     # target row-tile (512-1024 range reaches ~85% HBM roofline)


# ---------------------------------------------------------------- kernels ---
def conv_bn_lrelu_kernel(x_ref, w_ref, shift_ref, o_ref):
    # x: (tm, K) bf16 im2col patches; w: (K, 128) bf16 with BN scale folded in
    # and zero-padded columns; shift: (1, 128) f32 folded bias/BN shift.
    y = jnp.dot(x_ref[...], w_ref[...], preferred_element_type=jnp.float32)
    y = y + shift_ref[...]
    o_ref[...] = jnp.where(y > 0.0, y, 0.2 * y).astype(o_ref.dtype)


def linear_kernel(x_ref, w_ref, b_ref, o_ref):
    o_ref[...] = (
        jnp.dot(x_ref[...], w_ref[...], preferred_element_type=jnp.float32)
        + b_ref[...]
    ).astype(o_ref.dtype)


# ------------------------------------------------------------ pallas glue ---
def _pick_tile_m(m, target=TILE_M):
    """Largest row tile <= target that divides m (fallback: full extent)."""
    t = min(target, m)
    while t > 8 and m % t:
        t //= 2
    return t if m % t == 0 else m


def _tiled_gemm(kernel, x, w, shift, out_dtype):
    """Row-tiled (M, K) @ (K, 128) + epilogue, lane-dense output."""
    m, k = x.shape
    n = w.shape[1]
    tm = _pick_tile_m(m)
    return pl.pallas_call(
        kernel,
        out_shape=jax.ShapeDtypeStruct((m, n), out_dtype),
        grid=(m // tm,),
        in_specs=[
            pl.BlockSpec((tm, k), lambda i: (i, 0)),
            pl.BlockSpec((k, n), lambda i: (0, 0)),
            pl.BlockSpec((1, n), lambda i: (0, 0)),
        ],
        out_specs=pl.BlockSpec((tm, n), lambda i: (i, 0)),
        compiler_params=pltpu.CompilerParams(
            dimension_semantics=("parallel",)),
    )(x, w, shift)


# ------------------------------------------------------------------- prep ---
def _fold_conv_params(w, b, bn):
    """Fold conv bias + eval-mode BN into (K, 128) bf16 weights + f32 shift."""
    cout = w.shape[0]
    # (Cout, Cin, kh, kw) -> (kh, kw, Cin, Cout) -> (K, Cout)
    w_mat = jnp.transpose(w, (2, 3, 1, 0)).reshape(-1, cout)
    if bn is None:
        scale = jnp.ones((cout,), jnp.float32)
        shift = jnp.zeros((cout,), jnp.float32)
    else:
        gamma, beta, mean, var = bn
        scale = gamma / jnp.sqrt(var + BN_EPS)
        shift = beta - mean * scale
    w_eff = w_mat * scale[None, :]
    shift_eff = b * scale + shift
    k = w_mat.shape[0]
    w_pad = jnp.zeros((k, LANES), jnp.float32).at[:, :cout].set(w_eff)
    s_pad = jnp.zeros((1, LANES), jnp.float32).at[0, :cout].set(shift_eff)
    return w_pad.astype(jnp.bfloat16), s_pad


def im2col(x_nhwc, ksize=3, stride=2, pad=1):
    """Patches ordered as (kh, kw, cin) along K, matching the weight reshape."""
    N, H, W, C = x_nhwc.shape
    xp = jnp.pad(x_nhwc, ((0, 0), (pad, pad), (pad, pad), (0, 0)))
    Ho = (H + 2 * pad - ksize) // stride + 1
    Wo = (W + 2 * pad - ksize) // stride + 1
    cols = []
    for kh in range(ksize):
        for kw in range(ksize):
            cols.append(xp[:, kh:kh + stride * Ho:stride,
                           kw:kw + stride * Wo:stride, :])
    patches = jnp.stack(cols, axis=3)  # (N, Ho, Wo, ksize*ksize, C)
    return patches.reshape(N * Ho * Wo, ksize * ksize * C), Ho, Wo


def init_params(key, img_shape=(3, 32, 32)):
    C0, H, _ = img_shape
    chans = [C0, 16, 32, 64, 128]
    ds = H // (2 ** 4)
    params = {"convs": [], "bns": []}
    for i in range(4):
        key, kw, kb = jax.random.split(key, 3)
        cin, cout = chans[i], chans[i + 1]
        bound = 1.0 / jnp.sqrt(cin * 9)
        w = jax.random.uniform(kw, (cout, cin, 3, 3), jnp.float32, -bound, bound)
        b = jax.random.uniform(kb, (cout,), jnp.float32, -bound, bound)
        params["convs"].append((w, b))
        if i == 0:
            params["bns"].append(None)  # block(3, 16, normalize=False)
        else:
            key, kg, kbe, km, kv = jax.random.split(key, 5)
            gamma = 1.0 + 0.1 * jax.random.normal(kg, (cout,), jnp.float32)
            beta = 0.1 * jax.random.normal(kbe, (cout,), jnp.float32)
            mean = 0.1 * jax.random.normal(km, (cout,), jnp.float32)
            var = jnp.abs(1.0 + 0.1 * jax.random.normal(kv, (cout,), jnp.float32))
            params["bns"].append((gamma, beta, mean, var))
    feat = 128 * ds * ds
    for name in ("D_A", "D_B"):
        key, kw, kb = jax.random.split(key, 3)
        bound = 1.0 / jnp.sqrt(feat)
        w = jax.random.uniform(kw, (1, feat), jnp.float32, -bound, bound)
        b = jax.random.uniform(kb, (1,), jnp.float32, -bound, bound)
        params[name] = (w, b)
    return params


# ---------------------------------------------------------------- forward ---
def d_shared(x_nchw, params):
    # TODO(synk): Dropout2d(0.25) and BatchNorm2d batch-statistics are
    # training-mode stochastic/stateful ops; eval-mode semantics implemented.
    x = jnp.transpose(x_nchw, (0, 2, 3, 1)).astype(jnp.bfloat16)  # NCHW->NHWC
    N = x.shape[0]
    for i in range(4):
        w, b = params["convs"][i]
        cout = w.shape[0]
        w_pad, s_pad = _fold_conv_params(w, b, params["bns"][i])
        patches, Ho, Wo = im2col(x)                                # (M, 9*Cin) bf16
        y = _tiled_gemm(conv_bn_lrelu_kernel, patches, w_pad, s_pad,
                        jnp.bfloat16)                              # (M, 128) bf16
        x = y[:, :cout].reshape(N, Ho, Wo, cout)
    # flatten exactly like PyTorch's .view on NCHW
    return jnp.transpose(x, (0, 3, 1, 2)).reshape(N, -1)           # (N, feat) bf16


def discriminator_forward(img_A, img_B, params):
    n = img_A.shape[0]
    x = jnp.concatenate([img_A, img_B], axis=0)      # one shared trunk pass
    feats = d_shared(x, params)                      # (2N, feat) bf16
    wA, bA = params["D_A"]
    wB, bB = params["D_B"]
    feat = wA.shape[1]
    # merged, lane-dense head: col 0 = D_A, col 1 = D_B, rest zero
    w_head = (jnp.zeros((feat, LANES), jnp.float32)
              .at[:, 0].set(wA[0]).at[:, 1].set(wB[0]))
    b_head = (jnp.zeros((1, LANES), jnp.float32)
              .at[0, 0].set(bA[0]).at[0, 1].set(bB[0]))
    out = _tiled_gemm(linear_kernel, feats, w_head.astype(jnp.bfloat16),
                      b_head, jnp.float32)           # (2N, 128) f32
    valid_A = out[:n, 0:1]
    valid_B = out[n:, 1:2]
    return valid_A, valid_B


discriminator_forward_jit = jax.jit(discriminator_forward)


if __name__ == "__main__":
    key = jax.random.PRNGKey(0)
    k_a, k_b, k_p = jax.random.split(key, 3)
    img_shape = (3, 32, 32)   # small but consistent: ds_size = 32 // 2**4 = 2
    batch = 2
    img_A = jax.random.normal(k_a, (batch, *img_shape), jnp.float32)
    img_B = jax.random.normal(k_b, (batch, *img_shape), jnp.float32)
    params = init_params(k_p, img_shape)

    valid_A, valid_B = discriminator_forward_jit(img_A, img_B, params)
    jax.block_until_ready((valid_A, valid_B))
    assert valid_A.shape == (batch, 1) and valid_B.shape == (batch, 1)
    assert jnp.all(jnp.isfinite(valid_A)) and jnp.all(jnp.isfinite(valid_B))
    print("KERNEL_OK")
</pallas_src>

<mosaic_0001>
module attributes {stable_mosaic.version = 11 : i64} {
  func.func @conv_bn_lrelu_kernel(%arg0: i32, %arg1: memref<512x27xbf16, #tpu.memory_space<vmem>>, %arg2: memref<27x128xbf16, #tpu.memory_space<vmem>>, %arg3: memref<1x128xf32, #tpu.memory_space<vmem>>, %arg4: memref<512x128xbf16, #tpu.memory_space<vmem>>) attributes {dimension_semantics = [#tpu.dimension_semantics<parallel>], iteration_bounds = array<i64: 2>, scalar_prefetch = 0 : i64, scratch_operands = 0 : i64, tpu.core_type = #tpu.core_type<tc>, window_params = [{transform_indices = @transform_0, window_bounds = array<i64: 512, 27>}, {pipeline_mode = #tpu.pipeline_mode<synchronous>, transform_indices = @transform_1, window_bounds = array<i64: 27, 128>}, {pipeline_mode = #tpu.pipeline_mode<synchronous>, transform_indices = @transform_2, window_bounds = array<i64: 1, 128>}, {transform_indices = @transform_3, window_bounds = array<i64: 512, 128>}]} {
    %c0 = arith.constant 0 : index
    %c0_0 = arith.constant 0 : index
    %0 = vector.load %arg1[%c0, %c0_0] : memref<512x27xbf16, #tpu.memory_space<vmem>>, vector<512x27xbf16>
    %c0_1 = arith.constant 0 : index
    %c0_2 = arith.constant 0 : index
    %1 = vector.load %arg2[%c0_1, %c0_2] : memref<27x128xbf16, #tpu.memory_space<vmem>>, vector<27x128xbf16>
    %cst = arith.constant dense<0.000000e+00> : vector<512x128xf32>
    %2 = tpu.matmul %0, %1, %cst {dimension_numbers = #tpu.dot_dimension_numbers<[1], [0], [0], [1], [0, 0, 1, 1], [], []>} : vector<512x27xbf16>, vector<27x128xbf16>, vector<512x128xf32> -> vector<512x128xf32>
    %c0_3 = arith.constant 0 : index
    %c0_4 = arith.constant 0 : index
    %3 = vector.load %arg3[%c0_3, %c0_4] : memref<1x128xf32, #tpu.memory_space<vmem>>, vector<1x128xf32>
    %4 = vector.broadcast %3 : vector<1x128xf32> to vector<512x128xf32>
    %5 = arith.addf %2, %4 : vector<512x128xf32>
    %cst_5 = arith.constant 0.000000e+00 : f32
    %6 = vector.broadcast %cst_5 : f32 to vector<512x128xf32>
    %7 = arith.cmpf ogt, %5, %6 : vector<512x128xf32>
    %cst_6 = arith.constant 2.000000e-01 : f32
    %8 = vector.broadcast %cst_6 : f32 to vector<512x128xf32>
    %9 = arith.mulf %8, %5 : vector<512x128xf32>
    %10 = arith.select %7, %5, %9 : vector<512x128xi1>, vector<512x128xf32>
    %11 = arith.truncf %10 : vector<512x128xf32> to vector<512x128xbf16>
    %c0_7 = arith.constant 0 : index
    %c0_8 = arith.constant 0 : index
    %12 = vector.load %arg4[%c0_7, %c0_8] : memref<512x128xbf16, #tpu.memory_space<vmem>>, vector<512x128xbf16>
    tpu.vector_store %arg4[%c0_7, %c0_8], %11 {strides = array<i32>} : memref<512x128xbf16, #tpu.memory_space<vmem>>, vector<512x128xbf16>,
    return
  }
  func.func @transform_0(%arg0: i32) -> (i32, i32) {
    %c0_i32 = arith.constant 0 : i32
    %c0_i32_0 = arith.constant 0 : i32
    return %arg0, %c0_i32 : i32, i32
  }
  func.func @transform_1(%arg0: i32) -> (i32, i32) {
    %c0_i32 = arith.constant 0 : i32
    %c0_i32_0 = arith.constant 0 : i32
    %c0_i32_1 = arith.constant 0 : i32
    return %c0_i32, %c0_i32_0 : i32, i32
  }
  func.func @transform_2(%arg0: i32) -> (i32, i32) {
    %c0_i32 = arith.constant 0 : i32
    %c0_i32_0 = arith.constant 0 : i32
    %c0_i32_1 = arith.constant 0 : i32
    return %c0_i32, %c0_i32_0 : i32, i32
  }
  func.func @transform_3(%arg0: i32) -> (i32, i32) {
    %c0_i32 = arith.constant 0 : i32
    %c0_i32_0 = arith.constant 0 : i32
    return %arg0, %c0_i32 : i32, i32
  }
}

module attributes {stable_mosaic.version = 11 : i64} {
  func.func @conv_bn_lrelu_kernel(%arg0: i32, %arg1: memref<256x144xbf16, #tpu.memory_space<vmem>>, %arg2: memref<144x128xbf16, #tpu.memory_space<vmem>>, %arg3: memref<1x128xf32, #tpu.memory_space<vmem>>, %arg4: memref<256x128xbf16, #tpu.memory_space<vmem>>) attributes {dimension_semantics = [#tpu.dimension_semantics<parallel>], iteration_bounds = array<i64: 1>, scalar_prefetch = 0 : i64, scratch_operands = 0 : i64, tpu.core_type = #tpu.core_type<tc>, window_params = [{transform_indices = @transform_0, window_bounds = array<i64: 256, 144>}, {pipeline_mode = #tpu.pipeline_mode<synchronous>, transform_indices = @transform_1, window_bounds = array<i64: 144, 128>}, {pipeline_mode = #tpu.pipeline_mode<synchronous>, transform_indices = @transform_2, window_bounds = array<i64: 1, 128>}, {transform_indices = @transform_3, window_bounds = array<i64: 256, 128>}]} {
    %c0 = arith.constant 0 : index
    %c0_0 = arith.constant 0 : index
    %0 = vector.load %arg1[%c0, %c0_0] : memref<256x144xbf16, #tpu.memory_space<vmem>>, vector<256x144xbf16>
    %c0_1 = arith.constant 0 : index
    %c0_2 = arith.constant 0 : index
    %1 = vector.load %arg2[%c0_1, %c0_2] : memref<144x128xbf16, #tpu.memory_space<vmem>>, vector<144x128xbf16>
    %cst = arith.constant dense<0.000000e+00> : vector<256x128xf32>
    %2 = tpu.matmul %0, %1, %cst {dimension_numbers = #tpu.dot_dimension_numbers<[1], [0], [0], [1], [0, 0, 1, 1], [], []>} : vector<256x144xbf16>, vector<144x128xbf16>, vector<256x128xf32> -> vector<256x128xf32>
    %c0_3 = arith.constant 0 : index
    %c0_4 = arith.constant 0 : index
    %3 = vector.load %arg3[%c0_3, %c0_4] : memref<1x128xf32, #tpu.memory_space<vmem>>, vector<1x128xf32>
    %4 = vector.broadcast %3 : vector<1x128xf32> to vector<256x128xf32>
    %5 = arith.addf %2, %4 : vector<256x128xf32>
    %cst_5 = arith.constant 0.000000e+00 : f32
    %6 = vector.broadcast %cst_5 : f32 to vector<256x128xf32>
    %7 = arith.cmpf ogt, %5, %6 : vector<256x128xf32>
    %cst_6 = arith.constant 2.000000e-01 : f32
    %8 = vector.broadcast %cst_6 : f32 to vector<256x128xf32>
    %9 = arith.mulf %8, %5 : vector<256x128xf32>
    %10 = arith.select %7, %5, %9 : vector<256x128xi1>, vector<256x128xf32>
    %11 = arith.truncf %10 : vector<256x128xf32> to vector<256x128xbf16>
    %c0_7 = arith.constant 0 : index
    %c0_8 = arith.constant 0 : index
    %12 = vector.load %arg4[%c0_7, %c0_8] : memref<256x128xbf16, #tpu.memory_space<vmem>>, vector<256x128xbf16>
    tpu.vector_store %arg4[%c0_7, %c0_8], %11 {strides = array<i32>} : memref<256x128xbf16, #tpu.memory_space<vmem>>, vector<256x128xbf16>,
    return
  }
  func.func @transform_0(%arg0: i32) -> (i32, i32) {
    %c0_i32 = arith.constant 0 : i32
    %c0_i32_0 = arith.constant 0 : i32
    return %arg0, %c0_i32 : i32, i32
  }
  func.func @transform_1(%arg0: i32) -> (i32, i32) {
    %c0_i32 = arith.constant 0 : i32
    %c0_i32_0 = arith.constant 0 : i32
    %c0_i32_1 = arith.constant 0 : i32
    return %c0_i32, %c0_i32_0 : i32, i32
  }
  func.func @transform_2(%arg0: i32) -> (i32, i32) {
    %c0_i32 = arith.constant 0 : i32
    %c0_i32_0 = arith.constant 0 : i32
    %c0_i32_1 = arith.constant 0 : i32
    return %c0_i32, %c0_i32_0 : i32, i32
  }
  func.func @transform_3(%arg0: i32) -> (i32, i32) {
    %c0_i32 = arith.constant 0 : i32
    %c0_i32_0 = arith.constant 0 : i32
    return %arg0, %c0_i32 : i32, i32
  }
}

module attributes {stable_mosaic.version = 11 : i64} {
  func.func @conv_bn_lrelu_kernel(%arg0: i32, %arg1: memref<64x288xbf16, #tpu.memory_space<vmem>>, %arg2: memref<288x128xbf16, #tpu.memory_space<vmem>>, %arg3: memref<1x128xf32, #tpu.memory_space<vmem>>, %arg4: memref<64x128xbf16, #tpu.memory_space<vmem>>) attributes {dimension_semantics = [#tpu.dimension_semantics<parallel>], iteration_bounds = array<i64: 1>, scalar_prefetch = 0 : i64, scratch_operands = 0 : i64, tpu.core_type = #tpu.core_type<tc>, window_params = [{transform_indices = @transform_0, window_bounds = array<i64: 64, 288>}, {pipeline_mode = #tpu.pipeline_mode<synchronous>, transform_indices = @transform_1, window_bounds = array<i64: 288, 128>}, {pipeline_mode = #tpu.pipeline_mode<synchronous>, transform_indices = @transform_2, window_bounds = array<i64: 1, 128>}, {transform_indices = @transform_3, window_bounds = array<i64: 64, 128>}]} {
    %c0 = arith.constant 0 : index
    %c0_0 = arith.constant 0 : index
    %0 = vector.load %arg1[%c0, %c0_0] : memref<64x288xbf16, #tpu.memory_space<vmem>>, vector<64x288xbf16>
    %c0_1 = arith.constant 0 : index
    %c0_2 = arith.constant 0 : index
    %1 = vector.load %arg2[%c0_1, %c0_2] : memref<288x128xbf16, #tpu.memory_space<vmem>>, vector<288x128xbf16>
    %cst = arith.constant dense<0.000000e+00> : vector<64x128xf32>
    %2 = tpu.matmul %0, %1, %cst {dimension_numbers = #tpu.dot_dimension_numbers<[1], [0], [0], [1], [0, 0, 1, 1], [], []>} : vector<64x288xbf16>, vector<288x128xbf16>, vector<64x128xf32> -> vector<64x128xf32>
    %c0_3 = arith.constant 0 : index
    %c0_4 = arith.constant 0 : index
    %3 = vector.load %arg3[%c0_3, %c0_4] : memref<1x128xf32, #tpu.memory_space<vmem>>, vector<1x128xf32>
    %4 = vector.broadcast %3 : vector<1x128xf32> to vector<64x128xf32>
    %5 = arith.addf %2, %4 : vector<64x128xf32>
    %cst_5 = arith.constant 0.000000e+00 : f32
    %6 = vector.broadcast %cst_5 : f32 to vector<64x128xf32>
    %7 = arith.cmpf ogt, %5, %6 : vector<64x128xf32>
    %cst_6 = arith.constant 2.000000e-01 : f32
    %8 = vector.broadcast %cst_6 : f32 to vector<64x128xf32>
    %9 = arith.mulf %8, %5 : vector<64x128xf32>
    %10 = arith.select %7, %5, %9 : vector<64x128xi1>, vector<64x128xf32>
    %11 = arith.truncf %10 : vector<64x128xf32> to vector<64x128xbf16>
    %c0_7 = arith.constant 0 : index
    %c0_8 = arith.constant 0 : index
    %12 = vector.load %arg4[%c0_7, %c0_8] : memref<64x128xbf16, #tpu.memory_space<vmem>>, vector<64x128xbf16>
    tpu.vector_store %arg4[%c0_7, %c0_8], %11 {strides = array<i32>} : memref<64x128xbf16, #tpu.memory_space<vmem>>, vector<64x128xbf16>,
    return
  }
  func.func @transform_0(%arg0: i32) -> (i32, i32) {
    %c0_i32 = arith.constant 0 : i32
    %c0_i32_0 = arith.constant 0 : i32
    return %arg0, %c0_i32 : i32, i32
  }
  func.func @transform_1(%arg0: i32) -> (i32, i32) {
    %c0_i32 = arith.constant 0 : i32
    %c0_i32_0 = arith.constant 0 : i32
    %c0_i32_1 = arith.constant 0 : i32
    return %c0_i32, %c0_i32_0 : i32, i32
  }
  func.func @transform_2(%arg0: i32) -> (i32, i32) {
    %c0_i32 = arith.constant 0 : i32
    %c0_i32_0 = arith.constant 0 : i32
    %c0_i32_1 = arith.constant 0 : i32
    return %c0_i32, %c0_i32_0 : i32, i32
  }
  func.func @transform_3(%arg0: i32) -> (i32, i32) {
    %c0_i32 = arith.constant 0 : i32
    %c0_i32_0 = arith.constant 0 : i32
    return %arg0, %c0_i32 : i32, i32
  }
}

module attributes {stable_mosaic.version = 11 : i64} {
  func.func @conv_bn_lrelu_kernel(%arg0: i32, %arg1: memref<16x576xbf16, #tpu.memory_space<vmem>>, %arg2: memref<576x128xbf16, #tpu.memory_space<vmem>>, %arg3: memref<1x128xf32, #tpu.memory_space<vmem>>, %arg4: memref<16x128xbf16, #tpu.memory_space<vmem>>) attributes {dimension_semantics = [#tpu.dimension_semantics<parallel>], iteration_bounds = array<i64: 1>, scalar_prefetch = 0 : i64, scratch_operands = 0 : i64, tpu.core_type = #tpu.core_type<tc>, window_params = [{transform_indices = @transform_0, window_bounds = array<i64: 16, 576>}, {pipeline_mode = #tpu.pipeline_mode<synchronous>, transform_indices = @transform_1, window_bounds = array<i64: 576, 128>}, {pipeline_mode = #tpu.pipeline_mode<synchronous>, transform_indices = @transform_2, window_bounds = array<i64: 1, 128>}, {transform_indices = @transform_3, window_bounds = array<i64: 16, 128>}]} {
    %c0 = arith.constant 0 : index
    %c0_0 = arith.constant 0 : index
    %0 = vector.load %arg1[%c0, %c0_0] : memref<16x576xbf16, #tpu.memory_space<vmem>>, vector<16x576xbf16>
    %c0_1 = arith.constant 0 : index
    %c0_2 = arith.constant 0 : index
    %1 = vector.load %arg2[%c0_1, %c0_2] : memref<576x128xbf16, #tpu.memory_space<vmem>>, vector<576x128xbf16>
    %cst = arith.constant dense<0.000000e+00> : vector<16x128xf32>
    %2 = tpu.matmul %0, %1, %cst {dimension_numbers = #tpu.dot_dimension_numbers<[1], [0], [0], [1], [0, 0, 1, 1], [], []>} : vector<16x576xbf16>, vector<576x128xbf16>, vector<16x128xf32> -> vector<16x128xf32>
    %c0_3 = arith.constant 0 : index
    %c0_4 = arith.constant 0 : index
    %3 = vector.load %arg3[%c0_3, %c0_4] : memref<1x128xf32, #tpu.memory_space<vmem>>, vector<1x128xf32>
    %4 = vector.broadcast %3 : vector<1x128xf32> to vector<16x128xf32>
    %5 = arith.addf %2, %4 : vector<16x128xf32>
    %cst_5 = arith.constant 0.000000e+00 : f32
    %6 = vector.broadcast %cst_5 : f32 to vector<16x128xf32>
    %7 = arith.cmpf ogt, %5, %6 : vector<16x128xf32>
    %cst_6 = arith.constant 2.000000e-01 : f32
    %8 = vector.broadcast %cst_6 : f32 to vector<16x128xf32>
    %9 = arith.mulf %8, %5 : vector<16x128xf32>
    %10 = arith.select %7, %5, %9 : vector<16x128xi1>, vector<16x128xf32>
    %11 = arith.truncf %10 : vector<16x128xf32> to vector<16x128xbf16>
    %c0_7 = arith.constant 0 : index
    %c0_8 = arith.constant 0 : index
    %12 = vector.load %arg4[%c0_7, %c0_8] : memref<16x128xbf16, #tpu.memory_space<vmem>>, vector<16x128xbf16>
    tpu.vector_store %arg4[%c0_7, %c0_8], %11 {strides = array<i32>} : memref<16x128xbf16, #tpu.memory_space<vmem>>, vector<16x128xbf16>,
    return
  }
  func.func @transform_0(%arg0: i32) -> (i32, i32) {
    %c0_i32 = arith.constant 0 : i32
    %c0_i32_0 = arith.constant 0 : i32
    return %arg0, %c0_i32 : i32, i32
  }
  func.func @transform_1(%arg0: i32) -> (i32, i32) {
    %c0_i32 = arith.constant 0 : i32
    %c0_i32_0 = arith.constant 0 : i32
    %c0_i32_1 = arith.constant 0 : i32
    return %c0_i32, %c0_i32_0 : i32, i32
  }
  func.func @transform_2(%arg0: i32) -> (i32, i32) {
    %c0_i32 = arith.constant 0 : i32
    %c0_i32_0 = arith.constant 0 : i32
    %c0_i32_1 = arith.constant 0 : i32
    return %c0_i32, %c0_i32_0 : i32, i32
  }
  func.func @transform_3(%arg0: i32) -> (i32, i32) {
    %c0_i32 = arith.constant 0 : i32
    %c0_i32_0 = arith.constant 0 : i32
    return %arg0, %c0_i32 : i32, i32
  }
}

module attributes {stable_mosaic.version = 11 : i64} {
  func.func @linear_kernel(%arg0: i32, %arg1: memref<4x512xbf16, #tpu.memory_space<vmem>>, %arg2: memref<512x128xbf16, #tpu.memory_space<vmem>>, %arg3: memref<1x128xf32, #tpu.memory_space<vmem>>, %arg4: memref<4x128xf32, #tpu.memory_space<vmem>>) attributes {dimension_semantics = [#tpu.dimension_semantics<parallel>], iteration_bounds = array<i64: 1>, scalar_prefetch = 0 : i64, scratch_operands = 0 : i64, tpu.core_type = #tpu.core_type<tc>, window_params = [{transform_indices = @transform_0, window_bounds = array<i64: 4, 512>}, {pipeline_mode = #tpu.pipeline_mode<synchronous>, transform_indices = @transform_1, window_bounds = array<i64: 512, 128>}, {pipeline_mode = #tpu.pipeline_mode<synchronous>, transform_indices = @transform_2, window_bounds = array<i64: 1, 128>}, {transform_indices = @transform_3, window_bounds = array<i64: 4, 128>}]} {
    %c0 = arith.constant 0 : index
    %c0_0 = arith.constant 0 : index
    %0 = vector.load %arg1[%c0, %c0_0] : memref<4x512xbf16, #tpu.memory_space<vmem>>, vector<4x512xbf16>
    %c0_1 = arith.constant 0 : index
    %c0_2 = arith.constant 0 : index
    %1 = vector.load %arg2[%c0_1, %c0_2] : memref<512x128xbf16, #tpu.memory_space<vmem>>, vector<512x128xbf16>
    %cst = arith.constant dense<0.000000e+00> : vector<4x128xf32>
    %2 = tpu.matmul %0, %1, %cst {dimension_numbers = #tpu.dot_dimension_numbers<[1], [0], [0], [1], [0, 0, 1, 1], [], []>} : vector<4x512xbf16>, vector<512x128xbf16>, vector<4x128xf32> -> vector<4x128xf32>
    %c0_3 = arith.constant 0 : index
    %c0_4 = arith.constant 0 : index
    %3 = vector.load %arg3[%c0_3, %c0_4] : memref<1x128xf32, #tpu.memory_space<vmem>>, vector<1x128xf32>
    %4 = vector.broadcast %3 : vector<1x128xf32> to vector<4x128xf32>
    %5 = arith.addf %2, %4 : vector<4x128xf32>
    %c0_5 = arith.constant 0 : index
    %c0_6 = arith.constant 0 : index
    %6 = vector.load %arg4[%c0_5, %c0_6] : memref<4x128xf32, #tpu.memory_space<vmem>>, vector<4x128xf32>
    tpu.vector_store %arg4[%c0_5, %c0_6], %5 {strides = array<i32>} : memref<4x128xf32, #tpu.memory_space<vmem>>, vector<4x128xf32>,
    return
  }
  func.func @transform_0(%arg0: i32) -> (i32, i32) {
    %c0_i32 = arith.constant 0 : i32
    %c0_i32_0 = arith.constant 0 : i32
    return %arg0, %c0_i32 : i32, i32
  }
  func.func @transform_1(%arg0: i32) -> (i32, i32) {
    %c0_i32 = arith.constant 0 : i32
    %c0_i32_0 = arith.constant 0 : i32
    %c0_i32_1 = arith.constant 0 : i32
    return %c0_i32, %c0_i32_0 : i32, i32
  }
  func.func @transform_2(%arg0: i32) -> (i32, i32) {
    %c0_i32 = arith.constant 0 : i32
    %c0_i32_0 = arith.constant 0 : i32
    %c0_i32_1 = arith.constant 0 : i32
    return %c0_i32, %c0_i32_0 : i32, i32
  }
  func.func @transform_3(%arg0: i32) -> (i32, i32) {
    %c0_i32 = arith.constant 0 : i32
    %c0_i32_0 = arith.constant 0 : i32
    return %arg0, %c0_i32 : i32, i32
  }
}

</mosaic_0001>

<llo_original>
// kernel: discriminator_forward.5
$region0: #{discriminator_forward.5}
  #allocation0 [shape = 'u32[]', space=smem, size = 0x4, offset = 0x4, fixed_abs, tag = 'smem constant byte address 0x4 - core index']
  #allocation1 [shape = 'u32[144,128]{1,0:T(1,128)}', space=vmem, size = 0x12000, scoped, tag = 'internal scratch']
  %s0 = inlined_call_operand.vmem [shape: bf16[1024,27], index: 0, kind: input, shape index: {}]
  %s1 = inlined_call_operand.vmem [shape: bf16[27,128], index: 1, kind: input, shape index: {}]
  %s2 = inlined_call_operand.vmem [shape: f32[1,128], index: 2, kind: input, shape index: {}]
  %s3 = inlined_call_operand.vmem [shape: bf16[1024,128], index: 3, kind: output, shape index: {}]
  %s4 = sld [smem:[#allocation0]]
  $region45: #{discriminator_forward.5} parent=0
    _
  %s6 = ssub.s32 1, %s4
  %s7 = scalar_select 0, %s6, %s4
  loop: start=0, step=1, limit=4
  $region2: #{discriminator_forward.5} parent=0 // loop_pre_header
    _
  $region3: #{discriminator_forward.5} parent=0 // loop_header
    %s9 = sphi 0, %s13
    %p10 = scmp.ge.s32.totalorder %s9, 4
    %s19 = sphi 0, %s21
    %s22 = sphi 0, %s19
    %s23 = sphi 0, %s22
    %s39 = sphi 0, %s23
    %s43 = sphi 0, %s43
    %s45 = sphi 0, %s43
    %s46 = sphi 0, %s45
    %s60 = sphi 0, %s46
    %s64 = sphi 0, %s64
    %s66 = sphi 0, %s64
    %s67 = sphi 0, %s66
    %s81 = sphi 0, %s67
    %s87 = sphi 0, %s89
    %s90 = sphi 0, %s87
    %s91 = sphi 0, %s90
    %s107 = sphi 0, %s91
  $region4: #{discriminator_forward.5} parent=0 // loop_header_branch
    %12 = sbr.rel (%p10) target = $region8
  $region5: #{discriminator_forward.5} parent=0 // loop_body
    %s14 = ssub.s32 %s9, 1
    %s15 = ssub.s32 %s9, 2
    %s16 = sadd.s32 %s9, 1
    %s17 = ssub.s32 %s9, %s16
    %p18 = scmp.eq.s32.totalorder %s17, 0
    %s20 = sadd.s32 %s19, 1
    %s21 = scalar_select %p18, %s19, %s20
    %p24 = pneg %p18
    %p25 = scmp.eq.s32.totalorder %s9, 1
    %p26 = por %p24, %p25
    %p27 = scmp.ne.s32.totalorder %s19, %s22
    %p28 = scmp.eq.s32.totalorder %s9, 0
    %p29 = por %p27, %p28
    %p30 = scmp.ne.s32.totalorder %s19, %s22
    %p31 = scmp.eq.s32.totalorder %s14, 1
    %p32 = por %p30, %p31
    %p33 = scmp.ne.s32.totalorder %s22, %s23
    %p34 = scmp.eq.s32.totalorder %s14, 0
    %p35 = por %p33, %p34
    %p36 = scmp.ne.s32.totalorder %s22, %s23
    %p37 = scmp.eq.s32.totalorder %s15, 1
    %p38 = por %p36, %p37
    %p40 = scmp.ne.s32.totalorder %s23, %s39
    %p41 = scmp.eq.s32.totalorder %s15, 0
    %p42 = por %p40, %p41
    %s44 = sadd.s32 %s43, 1
    %p47 = scmp.eq.s32.totalorder %s9, 1
    %p48 = scmp.ne.s32.totalorder %s43, %s45
    %p49 = scmp.eq.s32.totalorder %s9, 0
    %p50 = por %p48, %p49
    %p51 = scmp.ne.s32.totalorder %s43, %s45
    %p52 = scmp.eq.s32.totalorder %s14, 1
    %p53 = por %p51, %p52
    %p54 = scmp.ne.s32.totalorder %s45, %s46
    %p55 = scmp.eq.s32.totalorder %s14, 0
    %p56 = por %p54, %p55
    %p57 = scmp.ne.s32.totalorder %s45, %s46
    %p58 = scmp.eq.s32.totalorder %s15, 1
    %p59 = por %p57, %p58
    %p61 = scmp.ne.s32.totalorder %s46, %s60
    %p62 = scmp.eq.s32.totalorder %s15, 0
    %p63 = por %p61, %p62
    %s65 = sadd.s32 %s64, 1
    %p68 = scmp.eq.s32.totalorder %s9, 1
    %p69 = scmp.ne.s32.totalorder %s64, %s66
    %p70 = scmp.eq.s32.totalorder %s9, 0
    %p71 = por %p69, %p70
    %p72 = scmp.ne.s32.totalorder %s64, %s66
    %p73 = scmp.eq.s32.totalorder %s14, 1
    %p74 = por %p72, %p73
    %p75 = scmp.ne.s32.totalorder %s66, %s67
    %p76 = scmp.eq.s32.totalorder %s14, 0
    %p77 = por %p75, %p76
    %p78 = scmp.ne.s32.totalorder %s66, %s67
    %p79 = scmp.eq.s32.totalorder %s15, 1
    %p80 = por %p78, %p79
    %p82 = scmp.ne.s32.totalorder %s67, %s81
    %p83 = scmp.eq.s32.totalorder %s15, 0
    %p84 = por %p82, %p83
    %s85 = ssub.s32 %s9, %s16
    %p86 = scmp.eq.s32.totalorder %s85, 0
    %s88 = sadd.s32 %s87, 1
    %s89 = scalar_select %p86, %s87, %s88
    %p92 = pneg %p86
    %p93 = scmp.eq.s32.totalorder %s9, 1
    %p94 = por %p92, %p93
    %p95 = scmp.ne.s32.totalorder %s87, %s90
    %p96 = scmp.eq.s32.totalorder %s9, 0
    %p97 = por %p95, %p96
    %p98 = scmp.ne.s32.totalorder %s87, %s90
    %p99 = scmp.eq.s32.totalorder %s14, 1
    %p100 = por %p98, %p99
    %p101 = scmp.ne.s32.totalorder %s90, %s91
    %p102 = scmp.eq.s32.totalorder %s14, 0
    %p103 = por %p101, %p102
    %p104 = scmp.ne.s32.totalorder %s90, %s91
    %p105 = scmp.eq.s32.totalorder %s15, 1
    %p106 = por %p104, %p105
    %p108 = scmp.ne.s32.totalorder %s91, %s107
    %p109 = scmp.eq.s32.totalorder %s15, 0
    %p110 = por %p108, %p109
    %p111 = scmp.le.s32.totalorder 1, %s9
    %p112 = scmp.lt.s32.totalorder %s9, 3
    %p113 = pnand %p111, %p112
    %p114 = pneg %p113
    // Predicated region
    $region9: #{discriminator_forward.5} parent=5 // pred_check
      _
    $region10: #{discriminator_forward.5} parent=5 // pred_check_branch
      %116 = sbr.rel (%p113) target = $region12
    $region11: #{discriminator_forward.5} parent=5 // pred_region
      %s117 = ssub.s32 %s9, 1
      // Predicated region
      $region13: #{discriminator_forward.5} parent=11 // pred_check
        %p118 = pneg %p56
      $region14: #{discriminator_forward.5} parent=11 // pred_check_branch
        %120 = sbr.rel (%p118) target = $region16
      $region15: #{discriminator_forward.5} parent=11 // pred_region
        _
      $region16: #{discriminator_forward.5} parent=11 // pred_fallthru
        _
      // Predicated region
      $region17: #{discriminator_forward.5} parent=11 // pred_check
        %p121 = pneg %p77
      $region18: #{discriminator_forward.5} parent=11 // pred_check_branch
        %123 = sbr.rel (%p121) target = $region20
      $region19: #{discriminator_forward.5} parent=11 // pred_region
        _
      $region20: #{discriminator_forward.5} parent=11 // pred_fallthru
        _
    $region12: #{discriminator_forward.5} parent=5 // pred_fallthru
      _
    %p124 = scmp.lt.s32.totalorder %s9, 2
    // Predicated region
    $region21: #{discriminator_forward.5} parent=5 // pred_check
      %p125 = pneg %p124
    $region22: #{discriminator_forward.5} parent=5 // pred_check_branch
      %127 = sbr.rel (%p125) target = $region24
    $region23: #{discriminator_forward.5} parent=5 // pred_region
      // Predicated region
      $region25: #{discriminator_forward.5} parent=23 // pred_check
        %p128 = pneg %p29
      $region26: #{discriminator_forward.5} parent=23 // pred_check_branch
        %130 = sbr.rel (%p128) target = $region28
      $region27: #{discriminator_forward.5} parent=23 // pred_region
        %s131 = smul.u32 64, %s9
        %p132 = scmp.lt.s32.totalorder %s131, 127
        %s133 = scalar_select %p132, %s131, 127
        %s134 = smul.addr %s133, 4
        %s135 = scalar_lea.vmem %s0, %s134
        %s136 = smul.u32 64, %s9
      $region28: #{discriminator_forward.5} parent=23 // pred_fallthru
        _
    $region24: #{discriminator_forward.5} parent=5 // pred_fallthru
      _
    %p137 = scmp.le.s32.totalorder 1, %s9
    %p138 = scmp.lt.s32.totalorder %s9, 3
    %p139 = pnand %p137, %p138
    %p140 = pneg %p139
    // Predicated region
    $region29: #{discriminator_forward.5} parent=5 // pred_check
      _
    $region30: #{discriminator_forward.5} parent=5 // pred_check_branch
      %142 = sbr.rel (%p139) target = $region32
    $region31: #{discriminator_forward.5} parent=5 // pred_region
      %s143 = ssub.s32 %s9, 1
      %s144 = smul.u32 64, %s14
      %p145 = scmp.lt.s32.totalorder %s144, 127
      %s146 = scalar_select %p145, %s144, 127
      %s147 = smul.addr %s146, 4
      %s148 = scalar_lea.vmem %s0, %s147
      %p149 = pneg %p35
      %p150 = pneg %p32
      %p151 = pneg %p56
      %p152 = pneg %p53
      %p153 = pneg %p77
      %p154 = pneg %p74
      %p155 = pneg %p103
      %p156 = pneg %p100
      %s157 = smul.u32 64, %s14
      %p158 = scmp.lt.s32.totalorder %s157, 127
      %s159 = scalar_select %p158, %s157, 127
      %s160 = smul.addr %s159, 4
      %s161 = scalar_lea.vmem %s3, %s160
      %s162 = smul.u32 64, %s14
      %p163 = scmp.lt.s32.totalorder %s162, 127
      %s164 = scalar_select %p163, %s162, 127
      %s165 = smul.addr %s164, 4
      %s166 = scalar_lea.vmem %s0, %s165
      %s167 = smul.u32 64, %s14
      %s168 = smul.u32 64, %s14
      %p169 = scmp.lt.s32.totalorder %s168, 127
      %s170 = scalar_select %p169, %s168, 127
      %s171 = smul.addr %s170, 4
      %s172 = scalar_lea.vmem %s3, %s171
      %s173 = smul.u32 64, %s14
      %v175 = vld [vmem:[%s166] sm:$0xf]
      %v176 = vld [vmem:[%s166 + $0x4] sm:$0xf]
      %v177 = vld [vmem:[%s166 + $0x8] sm:$0xf]
      %v178 = vld [vmem:[%s166 + $0xc] sm:$0xf]
      %v179 = vld [vmem:[%s166 + $0x10] sm:$0xf]
      %v180 = vld [vmem:[%s166 + $0x14] sm:$0xf]
      %v181 = vld [vmem:[%s166 + $0x18] sm:$0xf]
      %v182 = vld [vmem:[%s166 + $0x1c] sm:$0xf]
      %v183 = vld [vmem:[%s166 + $0x20] sm:$0xf]
      %v184 = vld [vmem:[%s166 + $0x24] sm:$0xf]
      %v185 = vld [vmem:[%s166 + $0x28] sm:$0xf]
      %v186 = vld [vmem:[%s166 + $0x2c] sm:$0xf]
      %v187 = vld [vmem:[%s166 + $0x30] sm:$0xf]
      %v188 = vld [vmem:[%s166 + $0x34] sm:$0xf]
      %v189 = vld [vmem:[%s166 + $0x38] sm:$0xf]
      %v190 = vld [vmem:[%s166 + $0x3c] sm:$0xf]
      %v191 = vld [vmem:[%s166 + $0x40] sm:$0xf]
      %v192 = vld [vmem:[%s166 + $0x44] sm:$0xf]
      %v193 = vld [vmem:[%s166 + $0x48] sm:$0xf]
      %v194 = vld [vmem:[%s166 + $0x4c] sm:$0xf]
      %v195 = vld [vmem:[%s166 + $0x50] sm:$0xf]
      %v196 = vld [vmem:[%s166 + $0x54] sm:$0xf]
      %v197 = vld [vmem:[%s166 + $0x58] sm:$0xf]
      %v198 = vld [vmem:[%s166 + $0x5c] sm:$0xf]
      %v199 = vld [vmem:[%s166 + $0x60] sm:$0xf]
      %v200 = vld [vmem:[%s166 + $0x64] sm:$0xf]
      %v201 = vld [vmem:[%s166 + $0x68] sm:$0xf]
      %v202 = vld [vmem:[%s166 + $0x6c] sm:$0xf]
      %v203 = vld [vmem:[%s166 + $0x70] sm:$0xf]
      %v204 = vld [vmem:[%s166 + $0x74] sm:$0xf]
      %v205 = vld [vmem:[%s166 + $0x78] sm:$0xf]
      %v206 = vld [vmem:[%s166 + $0x7c] sm:$0xf]
      %v207 = vld [vmem:[%s166 + $0x80] sm:$0xf]
      %v208 = vld [vmem:[%s166 + $0x84] sm:$0xf]
      %v209 = vld [vmem:[%s166 + $0x88] sm:$0xf]
      %v210 = vld [vmem:[%s166 + $0x8c] sm:$0xf]
      %v211 = vld [vmem:[%s166 + $0x90] sm:$0xf]
      %v212 = vld [vmem:[%s166 + $0x94] sm:$0xf]
      %v213 = vld [vmem:[%s166 + $0x98] sm:$0xf]
      %v214 = vld [vmem:[%s166 + $0x9c] sm:$0xf]
      %v215 = vld [vmem:[%s166 + $0xa0] sm:$0xf]
      %v216 = vld [vmem:[%s166 + $0xa4] sm:$0xf]
      %v217 = vld [vmem:[%s166 + $0xa8] sm:$0xf]
      %v218 = vld [vmem:[%s166 + $0xac] sm:$0xf]
      %v219 = vld [vmem:[%s166 + $0xb0] sm:$0xf]
      %v220 = vld [vmem:[%s166 + $0xb4] sm:$0xf]
      %v221 = vld [vmem:[%s166 + $0xb8] sm:$0xf]
      %v222 = vld [vmem:[%s166 + $0xbc] sm:$0xf]
      %v223 = vld [vmem:[%s166 + $0xc0] sm:$0xf]
      %v224 = vld [vmem:[%s166 + $0xc4] sm:$0xf]
      %v225 = vld [vmem:[%s166 + $0xc8] sm:$0xf]
      %v226 = vld [vmem:[%s166 + $0xcc] sm:$0xf]
      %v227 = vld [vmem:[%s166 + $0xd0] sm:$0xf]
      %v228 = vld [vmem:[%s166 + $0xd4] sm:$0xf]
      %v229 = vld [vmem:[%s166 + $0xd8] sm:$0xf]
      %v230 = vld [vmem:[%s166 + $0xdc] sm:$0xf]
      %v231 = vld [vmem:[%s166 + $0xe0] sm:$0xf]
      %v232 = vld [vmem:[%s166 + $0xe4] sm:$0xf]
      %v233 = vld [vmem:[%s166 + $0xe8] sm:$0xf]
      %v234 = vld [vmem:[%s166 + $0xec] sm:$0xf]
      %v235 = vld [vmem:[%s166 + $0xf0] sm:$0xf]
      %v236 = vld [vmem:[%s166 + $0xf4] sm:$0xf]
      %v237 = vld [vmem:[%s166 + $0xf8] sm:$0xf]
      %v238 = vld [vmem:[%s166 + $0xfc] sm:$0xf]
      %v239 = vld [vmem:[%s1] sm:$0xf]
      %v240 = vld [vmem:[%s1 + $0x4] sm:$0xf]
      %v241 = vld [vmem:[%s1 + $0x8] sm:$0xf]
      %v242 = vld [vmem:[%s1 + $0xc] sm:$0x3]
      %v243 = vld [vmem:[%s2] sm:$0x1]
      %v245 = vlaneseq
      %v246 = vshrl.u32 %v245, 7
      %v247 = vsub.s32 0, %v246
      %v248 = vrot.slane %v243, %v247
      %v314 = vunpack.c.l.b16 %v175
      %v315 = vunpack.c.l.b16 %v176
      %v316 = vunpack.c.l.b16 %v177
      %v317 = vunpack.c.l.b16 %v178
      %v318 = vunpack.c.l.b16 %v179
      %v319 = vunpack.c.l.b16 %v180
      %v320 = vunpack.c.l.b16 %v181
      %v321 = vunpack.c.l.b16 %v182
      %v322 = vunpack.c.l.b16 %v183
      %v323 = vunpack.c.l.b16 %v184
      %v324 = vunpack.c.l.b16 %v185
      %v325 = vunpack.c.l.b16 %v186
      %v326 = vunpack.c.l.b16 %v187
      %v327 = vunpack.c.l.b16 %v188
      %v328 = vunpack.c.l.b16 %v189
      %v329 = vunpack.c.l.b16 %v190
      %v330 = vunpack.c.l.b16 %v191
      %v331 = vunpack.c.l.b16 %v192
      %v332 = vunpack.c.l.b16 %v193
      %v333 = vunpack.c.l.b16 %v194
      %v334 = vunpack.c.l.b16 %v195
      %v335 = vunpack.c.l.b16 %v196
      %v336 = vunpack.c.l.b16 %v197
      %v337 = vunpack.c.l.b16 %v198
      %v338 = vunpack.c.l.b16 %v199
      %v339 = vunpack.c.l.b16 %v200
      %v340 = vunpack.c.l.b16 %v201
      %v341 = vunpack.c.l.b16 %v202
      %v342 = vunpack.c.l.b16 %v203
      %v343 = vunpack.c.l.b16 %v204
      %v344 = vunpack.c.l.b16 %v205
      %v345 = vunpack.c.l.b16 %v206
      %v346 = vunpack.c.l.b16 %v207
      %v347 = vunpack.c.l.b16 %v208
      %v348 = vunpack.c.l.b16 %v209
      %v349 = vunpack.c.l.b16 %v210
      %v350 = vunpack.c.l.b16 %v211
      %v351 = vunpack.c.l.b16 %v212
      %v352 = vunpack.c.l.b16 %v213
      %v353 = vunpack.c.l.b16 %v214
      %v354 = vunpack.c.l.b16 %v215
      %v355 = vunpack.c.l.b16 %v216
      %v356 = vunpack.c.l.b16 %v217
      %v357 = vunpack.c.l.b16 %v218
      %v358 = vunpack.c.l.b16 %v219
      %v359 = vunpack.c.l.b16 %v220
      %v360 = vunpack.c.l.b16 %v221
      %v361 = vunpack.c.l.b16 %v222
      %v362 = vunpack.c.l.b16 %v223
      %v363 = vunpack.c.l.b16 %v224
      %v364 = vunpack.c.l.b16 %v225
      %v365 = vunpack.c.l.b16 %v226
      %v366 = vunpack.c.l.b16 %v227
      %v367 = vunpack.c.l.b16 %v228
      %v368 = vunpack.c.l.b16 %v229
      %v369 = vunpack.c.l.b16 %v230
      %v370 = vunpack.c.l.b16 %v231
      %v371 = vunpack.c.l.b16 %v232
      %v372 = vunpack.c.l.b16 %v233
      %v373 = vunpack.c.l.b16 %v234
      %v374 = vunpack.c.l.b16 %v235
      %v375 = vunpack.c.l.b16 %v236
      %v376 = vunpack.c.l.b16 %v237
      %v377 = vunpack.c.l.b16 %v238
      %v378 = vpack.c.b16 %v315, %v314
      %v379 = vpack.c.b16 %v317, %v316
      %v380 = vpack.c.b16 %v319, %v318
      %v381 = vpack.c.b16 %v321, %v320
      %v382 = vpack.c.b16 %v323, %v322
      %v383 = vpack.c.b16 %v325, %v324
      %v384 = vpack.c.b16 %v327, %v326
      %v385 = vpack.c.b16 %v329, %v328
      %v386 = vpack.c.b16 %v331, %v330
      %v387 = vpack.c.b16 %v333, %v332
      %v388 = vpack.c.b16 %v335, %v334
      %v389 = vpack.c.b16 %v337, %v336
      %v390 = vpack.c.b16 %v339, %v338
      %v391 = vpack.c.b16 %v341, %v340
      %v392 = vpack.c.b16 %v343, %v342
      %v393 = vpack.c.b16 %v345, %v344
      %v394 = vpack.c.b16 %v347, %v346
      %v395 = vpack.c.b16 %v349, %v348
      %v396 = vpack.c.b16 %v351, %v350
      %v397 = vpack.c.b16 %v353, %v352
      %v398 = vpack.c.b16 %v355, %v354
      %v399 = vpack.c.b16 %v357, %v356
      %v400 = vpack.c.b16 %v359, %v358
      %v401 = vpack.c.b16 %v361, %v360
      %v402 = vpack.c.b16 %v363, %v362
      %v403 = vpack.c.b16 %v365, %v364
      %v404 = vpack.c.b16 %v367, %v366
      %v405 = vpack.c.b16 %v369, %v368
      %v406 = vpack.c.b16 %v371, %v370
      %v407 = vpack.c.b16 %v373, %v372
      %v408 = vpack.c.b16 %v375, %v374
      %v409 = vpack.c.b16 %v377, %v376
      %v414 = vunpack.c.l.b16 %v239
      %v415 = vunpack.c.l.b16 %v240
      %v416 = vunpack.c.l.b16 %v241
      %v417 = vunpack.c.l.b16 %v242
      %v418 = vpack.c.b16 %v415, %v414
      %v419 = vpack.c.b16 %v417, %v416
      %vm421 = vcmask 220160
      %v423 = vsel %vm421, %v378, 0
      %v426 = vsel %vm421, %v379, 0
      %v429 = vsel %vm421, %v380, 0
      %v432 = vsel %vm421, %v381, 0
      %v435 = vsel %vm421, %v382, 0
      %v438 = vsel %vm421, %v383, 0
      %v441 = vsel %vm421, %v384, 0
      %v444 = vsel %vm421, %v385, 0
      %v447 = vsel %vm421, %v386, 0
      %v450 = vsel %vm421, %v387, 0
      %v453 = vsel %vm421, %v388, 0
      %v456 = vsel %vm421, %v389, 0
      %v459 = vsel %vm421, %v390, 0
      %v462 = vsel %vm421, %v391, 0
      %v465 = vsel %vm421, %v392, 0
      %v468 = vsel %vm421, %v393, 0
      %v471 = vsel %vm421, %v394, 0
      %v474 = vsel %vm421, %v395, 0
      %v477 = vsel %vm421, %v396, 0
      %v480 = vsel %vm421, %v397, 0
      %v483 = vsel %vm421, %v398, 0
      %v486 = vsel %vm421, %v399, 0
      %v489 = vsel %vm421, %v400, 0
      %v492 = vsel %vm421, %v401, 0
      %v495 = vsel %vm421, %v402, 0
      %v498 = vsel %vm421, %v403, 0
      %v501 = vsel %vm421, %v404, 0
      %v504 = vsel %vm421, %v405, 0
      %v507 = vsel %vm421, %v406, 0
      %v510 = vsel %vm421, %v407, 0
      %v513 = vsel %vm421, %v408, 0
      %v516 = vsel %vm421, %v409, 0
      %vm518 = vcmask 1044480
      %vm519 = vcmask 1045504
      %v520 = vsel %vm518, 4294967295, 65535
      %v521 = vsel %vm519, %v520, 0
      %v523 = vand.u32 %v419, %v521
      %525 = vmatprep.subr.bf16.mxu0 0
      %526 = vmatpush1.bf16.msra.mxu0 %v418
      %527 = vmatprep.subr.bf16.mxu0 0
      %528 = vmatpush1.bf16.msra.mxu0 %v523
      %529 = vmatprep.subr.bf16.mxu0 0
      %530 = vmatpush1.bf16.msra.mxu0 0
      %531 = vmatprep.subr.bf16.mxu0 0
      %532 = vmatpush1.bf16.msra.mxu0 0
      %533 = vmatprep.subr.bf16.mxu0 0
      %534 = vmatpush1.bf16.msra.mxu0 0
      %535 = vmatprep.subr.bf16.mxu0 0
      %536 = vmatpush1.bf16.msra.mxu0 0
      %537 = vmatprep.subr.bf16.mxu0 0
      %538 = vmatpush1.bf16.msra.mxu0 0
      %539 = vmatprep.subr.bf16.mxu0 0
      %540 = vmatpush1.bf16.msra.mxu0 0
      %541 = vmatprep.subr.bf16.mxu0 0
      %542 = vmatpush1.bf16.msra.mxu0 0
      %543 = vmatprep.subr.bf16.mxu0 0
      %544 = vmatpush1.bf16.msra.mxu0 0
      %545 = vmatprep.subr.bf16.mxu0 0
      %546 = vmatpush1.bf16.msra.mxu0 0
      %547 = vmatprep.subr.bf16.mxu0 0
      %548 = vmatpush1.bf16.msra.mxu0 0
      %549 = vmatprep.subr.bf16.mxu0 0
      %550 = vmatpush1.bf16.msra.mxu0 0
      %551 = vmatprep.subr.bf16.mxu0 0
      %552 = vmatpush1.bf16.msra.mxu0 0
      %553 = vmatprep.subr.bf16.mxu0 0
      %554 = vmatpush1.bf16.msra.mxu0 0
      %555 = vmatprep.subr.bf16.mxu0 0
      %556 = vmatpush1.bf16.msra.mxu0 0
      %557 = vmatprep.mubr.bf16.mxu0 0
      %558 = vmatmul.mubr.bf16.gmra.mrb[0].mxu0 %v423
      %v559 = vpop.f32.mrb[0].mxu0
      %v560 = vadd.f32 %v248, %v559
      %v561 = vpop.f32.mrb[0].mxu0
      %v562 = vpop.f32.mrb[0].mxu0
      %v563 = vadd.f32 %v248, %v562
      %v564 = vpop.f32.mrb[0].mxu0
      %565 = vmatprep.mubr.bf16.mxu0 0
      %566 = vmatmul.mubr.bf16.gmra.mrb[0].mxu0 %v426
      %v567 = vpop.f32.mrb[0].mxu0
      %v568 = vadd.f32 %v248, %v567
      %v569 = vpop.f32.mrb[0].mxu0
      %v570 = vpop.f32.mrb[0].mxu0
      %v571 = vadd.f32 %v248, %v570
      %v572 = vpop.f32.mrb[0].mxu0
      %573 = vmatprep.mubr.bf16.mxu0 0
      %574 = vmatmul.mubr.bf16.gmra.mrb[0].mxu0 %v429
      %v575 = vpop.f32.mrb[0].mxu0
      %v576 = vadd.f32 %v248, %v575
      %v577 = vpop.f32.mrb[0].mxu0
      %v578 = vpop.f32.mrb[0].mxu0
      %v579 = vadd.f32 %v248, %v578
      %v580 = vpop.f32.mrb[0].mxu0
      %581 = vmatprep.mubr.bf16.mxu0 0
      %582 = vmatmul.mubr.bf16.gmra.mrb[0].mxu0 %v432
      %v583 = vpop.f32.mrb[0].mxu0
      %v584 = vadd.f32 %v248, %v583
      %v585 = vpop.f32.mrb[0].mxu0
      %v586 = vpop.f32.mrb[0].mxu0
      %v587 = vadd.f32 %v248, %v586
      %v588 = vpop.f32.mrb[0].mxu0
      %589 = vmatprep.mubr.bf16.mxu0 0
      %590 = vmatmul.mubr.bf16.gmra.mrb[0].mxu0 %v435
      %v591 = vpop.f32.mrb[0].mxu0
      %v592 = vadd.f32 %v248, %v591
      %v593 = vpop.f32.mrb[0].mxu0
      %v594 = vpop.f32.mrb[0].mxu0
      %v595 = vadd.f32 %v248, %v594
      %v596 = vpop.f32.mrb[0].mxu0
      %597 = vmatprep.mubr.bf16.mxu0 0
      %598 = vmatmul.mubr.bf16.gmra.mrb[0].mxu0 %v438
      %v599 = vpop.f32.mrb[0].mxu0
      %v600 = vadd.f32 %v248, %v599
      %v601 = vpop.f32.mrb[0].mxu0
      %v602 = vpop.f32.mrb[0].mxu0
      %v603 = vadd.f32 %v248, %v602
      %v604 = vpop.f32.mrb[0].mxu0
      %605 = vmatprep.mubr.bf16.mxu0 0
      %606 = vmatmul.mubr.bf16.gmra.mrb[0].mxu0 %v441
      %v607 = vpop.f32.mrb[0].mxu0
      %v608 = vadd.f32 %v248, %v607
      %v609 = vpop.f32.mrb[0].mxu0
      %v610 = vpop.f32.mrb[0].mxu0
      %v611 = vadd.f32 %v248, %v610
      %v612 = vpop.f32.mrb[0].mxu0
      %613 = vmatprep.mubr.bf16.mxu0 0
      %614 = vmatmul.mubr.bf16.gmra.mrb[0].mxu0 %v444
      %v615 = vpop.f32.mrb[0].mxu0
      %v616 = vadd.f32 %v248, %v615
      %v617 = vpop.f32.mrb[0].mxu0
      %v618 = vpop.f32.mrb[0].mxu0
      %v619 = vadd.f32 %v248, %v618
      %v620 = vpop.f32.mrb[0].mxu0
      %621 = vmatprep.mubr.bf16.mxu0 0
      %622 = vmatmul.mubr.bf16.gmra.mrb[0].mxu0 %v447
      %v623 = vpop.f32.mrb[0].mxu0
      %v624 = vadd.f32 %v248, %v623
      %v625 = vpop.f32.mrb[0].mxu0
      %v626 = vpop.f32.mrb[0].mxu0
      %v627 = vadd.f32 %v248, %v626
      %v628 = vpop.f32.mrb[0].mxu0
      %629 = vmatprep.mubr.bf16.mxu0 0
      %630 = vmatmul.mubr.bf16.gmra.mrb[0].mxu0 %v450
      %v631 = vpop.f32.mrb[0].mxu0
      %v632 = vadd.f32 %v248, %v631
      %v633 = vpop.f32.mrb[0].mxu0
      %v634 = vpop.f32.mrb[0].mxu0
      %v635 = vadd.f32 %v248, %v634
      %v636 = vpop.f32.mrb[0].mxu0
      %637 = vmatprep.mubr.bf16.mxu0 0
      %638 = vmatmul.mubr.bf16.gmra.mrb[0].mxu0 %v453
      %v639 = vpop.f32.mrb[0].mxu0
      %v640 = vadd.f32 %v248, %v639
      %v641 = vpop.f32.mrb[0].mxu0
      %v642 = vpop.f32.mrb[0].mxu0
      %v643 = vadd.f32 %v248, %v642
      %v644 = vpop.f32.mrb[0].mxu0
      %645 = vmatprep.mubr.bf16.mxu0 0
      %646 = vmatmul.mubr.bf16.gmra.mrb[0].mxu0 %v456
      %v647 = vpop.f32.mrb[0].mxu0
      %v648 = vadd.f32 %v248, %v647
      %v649 = vpop.f32.mrb[0].mxu0
      %v650 = vpop.f32.mrb[0].mxu0
      %v651 = vadd.f32 %v248, %v650
      %v652 = vpop.f32.mrb[0].mxu0
      %653 = vmatprep.mubr.bf16.mxu0 0
      %654 = vmatmul.mubr.bf16.gmra.mrb[0].mxu0 %v459
      %v655 = vpop.f32.mrb[0].mxu0
      %v656 = vadd.f32 %v248, %v655
      %v657 = vpop.f32.mrb[0].mxu0
      %v658 = vpop.f32.mrb[0].mxu0
      %v659 = vadd.f32 %v248, %v658
      %v660 = vpop.f32.mrb[0].mxu0
      %661 = vmatprep.mubr.bf16.mxu0 0
      %662 = vmatmul.mubr.bf16.gmra.mrb[0].mxu0 %v462
      %v663 = vpop.f32.mrb[0].mxu0
      %v664 = vadd.f32 %v248, %v663
      %v665 = vpop.f32.mrb[0].mxu0
      %v666 = vpop.f32.mrb[0].mxu0
      %v667 = vadd.f32 %v248, %v666
      %v668 = vpop.f32.mrb[0].mxu0
      %669 = vmatprep.mubr.bf16.mxu0 0
      %670 = vmatmul.mubr.bf16.gmra.mrb[0].mxu0 %v465
      %v671 = vpop.f32.mrb[0].mxu0
      %v672 = vadd.f32 %v248, %v671
      %v673 = vpop.f32.mrb[0].mxu0
      %v674 = vpop.f32.mrb[0].mxu0
      %v675 = vadd.f32 %v248, %v674
      %v676 = vpop.f32.mrb[0].mxu0
      %677 = vmatprep.mubr.bf16.mxu0 0
      %678 = vmatmul.mubr.bf16.gmra.mrb[0].mxu0 %v468
      %v679 = vpop.f32.mrb[0].mxu0
      %v680 = vadd.f32 %v248, %v679
      %v681 = vpop.f32.mrb[0].mxu0
      %v682 = vpop.f32.mrb[0].mxu0
      %v683 = vadd.f32 %v248, %v682
      %v684 = vpop.f32.mrb[0].mxu0
      %685 = vmatprep.mubr.bf16.mxu0 0
      %686 = vmatmul.mubr.bf16.gmra.mrb[0].mxu0 %v471
      %v687 = vpop.f32.mrb[0].mxu0
      %v688 = vadd.f32 %v248, %v687
      %v689 = vpop.f32.mrb[0].mxu0
      %v690 = vpop.f32.mrb[0].mxu0
      %v691 = vadd.f32 %v248, %v690
      %v692 = vpop.f32.mrb[0].mxu0
      %693 = vmatprep.mubr.bf16.mxu0 0
      %694 = vmatmul.mubr.bf16.gmra.mrb[0].mxu0 %v474
      %v695 = vpop.f32.mrb[0].mxu0
      %v696 = vadd.f32 %v248, %v695
      %v697 = vpop.f32.mrb[0].mxu0
      %v698 = vpop.f32.mrb[0].mxu0
      %v699 = vadd.f32 %v248, %v698
      %v700 = vpop.f32.mrb[0].mxu0
      %701 = vmatprep.mubr.bf16.mxu0 0
      %702 = vmatmul.mubr.bf16.gmra.mrb[0].mxu0 %v477
      %v703 = vpop.f32.mrb[0].mxu0
      %v704 = vadd.f32 %v248, %v703
      %v705 = vpop.f32.mrb[0].mxu0
      %v706 = vpop.f32.mrb[0].mxu0
      %v707 = vadd.f32 %v248, %v706
      %v708 = vpop.f32.mrb[0].mxu0
      %709 = vmatprep.mubr.bf16.mxu0 0
      %710 = vmatmul.mubr.bf16.gmra.mrb[0].mxu0 %v480
      %v711 = vpop.f32.mrb[0].mxu0
      %v712 = vadd.f32 %v248, %v711
      %v713 = vpop.f32.mrb[0].mxu0
      %v714 = vpop.f32.mrb[0].mxu0
      %v715 = vadd.f32 %v248, %v714
      %v716 = vpop.f32.mrb[0].mxu0
      %717 = vmatprep.mubr.bf16.mxu0 0
      %718 = vmatmul.mubr.bf16.gmra.mrb[0].mxu0 %v483
      %v719 = vpop.f32.mrb[0].mxu0
      %v720 = vadd.f32 %v248, %v719
      %v721 = vpop.f32.mrb[0].mxu0
      %v722 = vpop.f32.mrb[0].mxu0
      %v723 = vadd.f32 %v248, %v722
      %v724 = vpop.f32.mrb[0].mxu0
      %725 = vmatprep.mubr.bf16.mxu0 0
      %726 = vmatmul.mubr.bf16.gmra.mrb[0].mxu0 %v486
      %v727 = vpop.f32.mrb[0].mxu0
      %v728 = vadd.f32 %v248, %v727
      %v729 = vpop.f32.mrb[0].mxu0
      %v730 = vpop.f32.mrb[0].mxu0
      %v731 = vadd.f32 %v248, %v730
      %v732 = vpop.f32.mrb[0].mxu0
      %733 = vmatprep.mubr.bf16.mxu0 0
      %734 = vmatmul.mubr.bf16.gmra.mrb[0].mxu0 %v489
      %v735 = vpop.f32.mrb[0].mxu0
      %v736 = vadd.f32 %v248, %v735
      %v737 = vpop.f32.mrb[0].mxu0
      %v738 = vpop.f32.mrb[0].mxu0
      %v739 = vadd.f32 %v248, %v738
      %v740 = vpop.f32.mrb[0].mxu0
      %741 = vmatprep.mubr.bf16.mxu0 0
      %742 = vmatmul.mubr.bf16.gmra.mrb[0].mxu0 %v492
      %v743 = vpop.f32.mrb[0].mxu0
      %v744 = vadd.f32 %v248, %v743
      %v745 = vpop.f32.mrb[0].mxu0
      %v746 = vpop.f32.mrb[0].mxu0
      %v747 = vadd.f32 %v248, %v746
      %v748 = vpop.f32.mrb[0].mxu0
      %749 = vmatprep.mubr.bf16.mxu0 0
      %750 = vmatmul.mubr.bf16.gmra.mrb[0].mxu0 %v495
      %v751 = vpop.f32.mrb[0].mxu0
      %v752 = vadd.f32 %v248, %v751
      %v753 = vpop.f32.mrb[0].mxu0
      %v754 = vpop.f32.mrb[0].mxu0
      %v755 = vadd.f32 %v248, %v754
      %v756 = vpop.f32.mrb[0].mxu0
      %757 = vmatprep.mubr.bf16.mxu0 0
      %758 = vmatmul.mubr.bf16.gmra.mrb[0].mxu0 %v498
      %v759 = vpop.f32.mrb[0].mxu0
      %v760 = vadd.f32 %v248, %v759
      %v761 = vpop.f32.mrb[0].mxu0
      %v762 = vpop.f32.mrb[0].mxu0
      %v763 = vadd.f32 %v248, %v762
      %v764 = vpop.f32.mrb[0].mxu0
      %765 = vmatprep.mubr.bf16.mxu0 0
      %766 = vmatmul.mubr.bf16.gmra.mrb[0].mxu0 %v501
      %v767 = vpop.f32.mrb[0].mxu0
      %v768 = vadd.f32 %v248, %v767
      %v769 = vpop.f32.mrb[0].mxu0
      %v770 = vpop.f32.mrb[0].mxu0
      %v771 = vadd.f32 %v248, %v770
      %v772 = vpop.f32.mrb[0].mxu0
      %773 = vmatprep.mubr.bf16.mxu0 0
      %774 = vmatmul.mubr.bf16.gmra.mrb[0].mxu0 %v504
      %v775 = vpop.f32.mrb[0].mxu0
      %v776 = vadd.f32 %v248, %v775
      %v777 = vpop.f32.mrb[0].mxu0
      %v778 = vpop.f32.mrb[0].mxu0
      %v779 = vadd.f32 %v248, %v778
      %v780 = vpop.f32.mrb[0].mxu0
      %781 = vmatprep.mubr.bf16.mxu0 0
      %782 = vmatmul.mubr.bf16.gmra.mrb[0].mxu0 %v507
      %v783 = vpop.f32.mrb[0].mxu0
      %v784 = vadd.f32 %v248, %v783
      %v785 = vpop.f32.mrb[0].mxu0
      %v786 = vpop.f32.mrb[0].mxu0
      %v787 = vadd.f32 %v248, %v786
      %v788 = vpop.f32.mrb[0].mxu0
      %789 = vmatprep.mubr.bf16.mxu0 0
      %790 = vmatmul.mubr.bf16.gmra.mrb[0].mxu0 %v510
      %v791 = vpop.f32.mrb[0].mxu0
      %v792 = vadd.f32 %v248, %v791
      %v793 = vpop.f32.mrb[0].mxu0
      %v794 = vpop.f32.mrb[0].mxu0
      %v795 = vadd.f32 %v248, %v794
      %v796 = vpop.f32.mrb[0].mxu0
      %797 = vmatprep.mubr.bf16.mxu0 0
      %798 = vmatmul.mubr.bf16.gmra.mrb[0].mxu0 %v513
      %v799 = vpop.f32.mrb[0].mxu0
      %v800 = vadd.f32 %v248, %v799
      %v801 = vpop.f32.mrb[0].mxu0
      %v802 = vpop.f32.mrb[0].mxu0
      %v803 = vadd.f32 %v248, %v802
      %v804 = vpop.f32.mrb[0].mxu0
      %805 = vmatprep.mubr.bf16.mxu0 0
      %806 = vmatmul.mubr.bf16.gmra.mrb[0].mxu0 %v516
      %v807 = vpop.f32.mrb[0].mxu0
      %v808 = vadd.f32 %v248, %v807
      %v809 = vpop.f32.mrb[0].mxu0
      %v810 = vpop.f32.mrb[0].mxu0
      %v811 = vadd.f32 %v248, %v810
      %v812 = vpop.f32.mrb[0].mxu0
      %813 = vdwg.mxu0
      %vm814 = vcmp.gt.f32.partialorder %v560, 0.0
      %vm815 = vcmp.gt.f32.partialorder %v563, 0.0
      %vm816 = vcmp.gt.f32.partialorder %v568, 0.0
      %vm817 = vcmp.gt.f32.partialorder %v571, 0.0
      %vm818 = vcmp.gt.f32.partialorder %v576, 0.0
      %vm819 = vcmp.gt.f32.partialorder %v579, 0.0
      %vm820 = vcmp.gt.f32.partialorder %v584, 0.0
      %vm821 = vcmp.gt.f32.partialorder %v587, 0.0
      %vm822 = vcmp.gt.f32.partialorder %v592, 0.0
      %vm823 = vcmp.gt.f32.partialorder %v595, 0.0
      %vm824 = vcmp.gt.f32.partialorder %v600, 0.0
      %vm825 = vcmp.gt.f32.partialorder %v603, 0.0
      %vm826 = vcmp.gt.f32.partialorder %v608, 0.0
      %vm827 = vcmp.gt.f32.partialorder %v611, 0.0
      %vm828 = vcmp.gt.f32.partialorder %v616, 0.0
      %vm829 = vcmp.gt.f32.partialorder %v619, 0.0
      %vm830 = vcmp.gt.f32.partialorder %v624, 0.0
      %vm831 = vcmp.gt.f32.partialorder %v627, 0.0
      %vm832 = vcmp.gt.f32.partialorder %v632, 0.0
      %vm833 = vcmp.gt.f32.partialorder %v635, 0.0
      %vm834 = vcmp.gt.f32.partialorder %v640, 0.0
      %vm835 = vcmp.gt.f32.partialorder %v643, 0.0
      %vm836 = vcmp.gt.f32.partialorder %v648, 0.0
      %vm837 = vcmp.gt.f32.partialorder %v651, 0.0
      %vm838 = vcmp.gt.f32.partialorder %v656, 0.0
      %vm839 = vcmp.gt.f32.partialorder %v659, 0.0
      %vm840 = vcmp.gt.f32.partialorder %v664, 0.0
      %vm841 = vcmp.gt.f32.partialorder %v667, 0.0
      %vm842 = vcmp.gt.f32.partialorder %v672, 0.0
      %vm843 = vcmp.gt.f32.partialorder %v675, 0.0
      %vm844 = vcmp.gt.f32.partialorder %v680, 0.0
      %vm845 = vcmp.gt.f32.partialorder %v683, 0.0
      %vm846 = vcmp.gt.f32.partialorder %v688, 0.0
      %vm847 = vcmp.gt.f32.partialorder %v691, 0.0
      %vm848 = vcmp.gt.f32.partialorder %v696, 0.0
      %vm849 = vcmp.gt.f32.partialorder %v699, 0.0
      %vm850 = vcmp.gt.f32.partialorder %v704, 0.0
      %vm851 = vcmp.gt.f32.partialorder %v707, 0.0
      %vm852 = vcmp.gt.f32.partialorder %v712, 0.0
      %vm853 = vcmp.gt.f32.partialorder %v715, 0.0
      %vm854 = vcmp.gt.f32.partialorder %v720, 0.0
      %vm855 = vcmp.gt.f32.partialorder %v723, 0.0
      %vm856 = vcmp.gt.f32.partialorder %v728, 0.0
      %vm857 = vcmp.gt.f32.partialorder %v731, 0.0
      %vm858 = vcmp.gt.f32.partialorder %v736, 0.0
      %vm859 = vcmp.gt.f32.partialorder %v739, 0.0
      %vm860 = vcmp.gt.f32.partialorder %v744, 0.0
      %vm861 = vcmp.gt.f32.partialorder %v747, 0.0
      %vm862 = vcmp.gt.f32.partialorder %v752, 0.0
      %vm863 = vcmp.gt.f32.partialorder %v755, 0.0
      %vm864 = vcmp.gt.f32.partialorder %v760, 0.0
      %vm865 = vcmp.gt.f32.partialorder %v763, 0.0
      %vm866 = vcmp.gt.f32.partialorder %v768, 0.0
      %vm867 = vcmp.gt.f32.partialorder %v771, 0.0
      %vm868 = vcmp.gt.f32.partialorder %v776, 0.0
      %vm869 = vcmp.gt.f32.partialorder %v779, 0.0
      %vm870 = vcmp.gt.f32.partialorder %v784, 0.0
      %vm871 = vcmp.gt.f32.partialorder %v787, 0.0
      %vm872 = vcmp.gt.f32.partialorder %v792, 0.0
      %vm873 = vcmp.gt.f32.partialorder %v795, 0.0
      %vm874 = vcmp.gt.f32.partialorder %v800, 0.0
      %vm875 = vcmp.gt.f32.partialorder %v803, 0.0
      %vm876 = vcmp.gt.f32.partialorder %v808, 0.0
      %vm877 = vcmp.gt.f32.partialorder %v811, 0.0
      %v878 = vmul.f32 %v560, 0.2
      %v879 = vmul.f32 %v563, 0.2
      %v880 = vmul.f32 %v568, 0.2
      %v881 = vmul.f32 %v571, 0.2
      %v882 = vmul.f32 %v576, 0.2
      %v883 = vmul.f32 %v579, 0.2
      %v884 = vmul.f32 %v584, 0.2
      %v885 = vmul.f32 %v587, 0.2
      %v886 = vmul.f32 %v592, 0.2
      %v887 = vmul.f32 %v595, 0.2
      %v888 = vmul.f32 %v600, 0.2
      %v889 = vmul.f32 %v603, 0.2
      %v890 = vmul.f32 %v608, 0.2
      %v891 = vmul.f32 %v611, 0.2
      %v892 = vmul.f32 %v616, 0.2
      %v893 = vmul.f32 %v619, 0.2
      %v894 = vmul.f32 %v624, 0.2
      %v895 = vmul.f32 %v627, 0.2
      %v896 = vmul.f32 %v632, 0.2
      %v897 = vmul.f32 %v635, 0.2
      %v898 = vmul.f32 %v640, 0.2
      %v899 = vmul.f32 %v643, 0.2
      %v900 = vmul.f32 %v648, 0.2
      %v901 = vmul.f32 %v651, 0.2
      %v902 = vmul.f32 %v656, 0.2
      %v903 = vmul.f32 %v659, 0.2
      %v904 = vmul.f32 %v664, 0.2
      %v905 = vmul.f32 %v667, 0.2
      %v906 = vmul.f32 %v672, 0.2
      %v907 = vmul.f32 %v675, 0.2
      %v908 = vmul.f32 %v680, 0.2
      %v909 = vmul.f32 %v683, 0.2
      %v910 = vmul.f32 %v688, 0.2
      %v911 = vmul.f32 %v691, 0.2
      %v912 = vmul.f32 %v696, 0.2
      %v913 = vmul.f32 %v699, 0.2
      %v914 = vmul.f32 %v704, 0.2
      %v915 = vmul.f32 %v707, 0.2
      %v916 = vmul.f32 %v712, 0.2
      %v917 = vmul.f32 %v715, 0.2
      %v918 = vmul.f32 %v720, 0.2
      %v919 = vmul.f32 %v723, 0.2
      %v920 = vmul.f32 %v728, 0.2
      %v921 = vmul.f32 %v731, 0.2
      %v922 = vmul.f32 %v736, 0.2
      %v923 = vmul.f32 %v739, 0.2
      %v924 = vmul.f32 %v744, 0.2
      %v925 = vmul.f32 %v747, 0.2
      %v926 = vmul.f32 %v752, 0.2
      %v927 = vmul.f32 %v755, 0.2
      %v928 = vmul.f32 %v760, 0.2
      %v929 = vmul.f32 %v763, 0.2
      %v930 = vmul.f32 %v768, 0.2
      %v931 = vmul.f32 %v771, 0.2
      %v932 = vmul.f32 %v776, 0.2
      %v933 = vmul.f32 %v779, 0.2
      %v934 = vmul.f32 %v784, 0.2
      %v935 = vmul.f32 %v787, 0.2
      %v936 = vmul.f32 %v792, 0.2
      %v937 = vmul.f32 %v795, 0.2
      %v938 = vmul.f32 %v800, 0.2
      %v939 = vmul.f32 %v803, 0.2
      %v940 = vmul.f32 %v808, 0.2
      %v941 = vmul.f32 %v811, 0.2
      %v942 = vsel %vm814, %v560, %v878
      %v943 = vsel %vm815, %v563, %v879
      %v944 = vsel %vm816, %v568, %v880
      %v945 = vsel %vm817, %v571, %v881
      %v946 = vsel %vm818, %v576, %v882
      %v947 = vsel %vm819, %v579, %v883
      %v948 = vsel %vm820, %v584, %v884
      %v949 = vsel %vm821, %v587, %v885
      %v950 = vsel %vm822, %v592, %v886
      %v951 = vsel %vm823, %v595, %v887
      %v952 = vsel %vm824, %v600, %v888
      %v953 = vsel %vm825, %v603, %v889
      %v954 = vsel %vm826, %v608, %v890
      %v955 = vsel %vm827, %v611, %v891
      %v956 = vsel %vm828, %v616, %v892
      %v957 = vsel %vm829, %v619, %v893
      %v958 = vsel %vm830, %v624, %v894
      %v959 = vsel %vm831, %v627, %v895
      %v960 = vsel %vm832, %v632, %v896
      %v961 = vsel %vm833, %v635, %v897
      %v962 = vsel %vm834, %v640, %v898
      %v963 = vsel %vm835, %v643, %v899
      %v964 = vsel %vm836, %v648, %v900
      %v965 = vsel %vm837, %v651, %v901
      %v966 = vsel %vm838, %v656, %v902
      %v967 = vsel %vm839, %v659, %v903
      %v968 = vsel %vm840, %v664, %v904
      %v969 = vsel %vm841, %v667, %v905
      %v970 = vsel %vm842, %v672, %v906
      %v971 = vsel %vm843, %v675, %v907
      %v972 = vsel %vm844, %v680, %v908
      %v973 = vsel %vm845, %v683, %v909
      %v974 = vsel %vm846, %v688, %v910
      %v975 = vsel %vm847, %v691, %v911
      %v976 = vsel %vm848, %v696, %v912
      %v977 = vsel %vm849, %v699, %v913
      %v978 = vsel %vm850, %v704, %v914
      %v979 = vsel %vm851, %v707, %v915
      %v980 = vsel %vm852, %v712, %v916
      %v981 = vsel %vm853, %v715, %v917
      %v982 = vsel %vm854, %v720, %v918
      %v983 = vsel %vm855, %v723, %v919
      %v984 = vsel %vm856, %v728, %v920
      %v985 = vsel %vm857, %v731, %v921
      %v986 = vsel %vm858, %v736, %v922
      %v987 = vsel %vm859, %v739, %v923
      %v988 = vsel %vm860, %v744, %v924
      %v989 = vsel %vm861, %v747, %v925
      %v990 = vsel %vm862, %v752, %v926
      %v991 = vsel %vm863, %v755, %v927
      %v992 = vsel %vm864, %v760, %v928
      %v993 = vsel %vm865, %v763, %v929
      %v994 = vsel %vm866, %v768, %v930
      %v995 = vsel %vm867, %v771, %v931
      %v996 = vsel %vm868, %v776, %v932
      %v997 = vsel %vm869, %v779, %v933
      %v998 = vsel %vm870, %v784, %v934
      %v999 = vsel %vm871, %v787, %v935
      %v1000 = vsel %vm872, %v792, %v936
      %v1001 = vsel %vm873, %v795, %v937
      %v1002 = vsel %vm874, %v800, %v938
      %v1003 = vsel %vm875, %v803, %v939
      %v1004 = vsel %vm876, %v808, %v940
      %v1005 = vsel %vm877, %v811, %v941
      %v1006 = vpack.c.bf16 %v943, %v942
      %v1007 = vpack.c.bf16 %v945, %v944
      %v1008 = vpack.c.bf16 %v947, %v946
      %v1009 = vpack.c.bf16 %v949, %v948
      %v1010 = vpack.c.bf16 %v951, %v950
      %v1011 = vpack.c.bf16 %v953, %v952
      %v1012 = vpack.c.bf16 %v955, %v954
      %v1013 = vpack.c.bf16 %v957, %v956
      %v1014 = vpack.c.bf16 %v959, %v958
      %v1015 = vpack.c.bf16 %v961, %v960
      %v1016 = vpack.c.bf16 %v963, %v962
      %v1017 = vpack.c.bf16 %v965, %v964
      %v1018 = vpack.c.bf16 %v967, %v966
      %v1019 = vpack.c.bf16 %v969, %v968
      %v1020 = vpack.c.bf16 %v971, %v970
      %v1021 = vpack.c.bf16 %v973, %v972
      %v1022 = vpack.c.bf16 %v975, %v974
      %v1023 = vpack.c.bf16 %v977, %v976
      %v1024 = vpack.c.bf16 %v979, %v978
      %v1025 = vpack.c.bf16 %v981, %v980
      %v1026 = vpack.c.bf16 %v983, %v982
      %v1027 = vpack.c.bf16 %v985, %v984
      %v1028 = vpack.c.bf16 %v987, %v986
      %v1029 = vpack.c.bf16 %v989, %v988
      %v1030 = vpack.c.bf16 %v991, %v990
      %v1031 = vpack.c.bf16 %v993, %v992
      %v1032 = vpack.c.bf16 %v995, %v994
      %v1033 = vpack.c.bf16 %v997, %v996
      %v1034 = vpack.c.bf16 %v999, %v998
      %v1035 = vpack.c.bf16 %v1001, %v1000
      %v1036 = vpack.c.bf16 %v1003, %v1002
      %v1037 = vpack.c.bf16 %v1005, %v1004
      %v1070 = vunpack.c.l.b16 %v1006
      %v1071 = vunpack.c.h.b16 %v1006
      %v1072 = vunpack.c.l.b16 %v1007
      %v1073 = vunpack.c.h.b16 %v1007
      %v1074 = vunpack.c.l.b16 %v1008
      %v1075 = vunpack.c.h.b16 %v1008
      %v1076 = vunpack.c.l.b16 %v1009
      %v1077 = vunpack.c.h.b16 %v1009
      %v1078 = vunpack.c.l.b16 %v1010
      %v1079 = vunpack.c.h.b16 %v1010
      %v1080 = vunpack.c.l.b16 %v1011
      %v1081 = vunpack.c.h.b16 %v1011
      %v1082 = vunpack.c.l.b16 %v1012
      %v1083 = vunpack.c.h.b16 %v1012
      %v1084 = vunpack.c.l.b16 %v1013
      %v1085 = vunpack.c.h.b16 %v1013
      %v1086 = vunpack.c.l.b16 %v1014
      %v1087 = vunpack.c.h.b16 %v1014
      %v1088 = vunpack.c.l.b16 %v1015
      %v1089 = vunpack.c.h.b16 %v1015
      %v1090 = vunpack.c.l.b16 %v1016
      %v1091 = vunpack.c.h.b16 %v1016
      %v1092 = vunpack.c.l.b16 %v1017
      %v1093 = vunpack.c.h.b16 %v1017
      %v1094 = vunpack.c.l.b16 %v1018
      %v1095 = vunpack.c.h.b16 %v1018
      %v1096 = vunpack.c.l.b16 %v1019
      %v1097 = vunpack.c.h.b16 %v1019
      %v1098 = vunpack.c.l.b16 %v1020
      %v1099 = vunpack.c.h.b16 %v1020
      %v1100 = vunpack.c.l.b16 %v1021
      %v1101 = vunpack.c.h.b16 %v1021
      %v1102 = vunpack.c.l.b16 %v1022
      %v1103 = vunpack.c.h.b16 %v1022
      %v1104 = vunpack.c.l.b16 %v1023
      %v1105 = vunpack.c.h.b16 %v1023
      %v1106 = vunpack.c.l.b16 %v1024
      %v1107 = vunpack.c.h.b16 %v1024
      %v1108 = vunpack.c.l.b16 %v1025
      %v1109 = vunpack.c.h.b16 %v1025
      %v1110 = vunpack.c.l.b16 %v1026
      %v1111 = vunpack.c.h.b16 %v1026
      %v1112 = vunpack.c.l.b16 %v1027
      %v1113 = vunpack.c.h.b16 %v1027
      %v1114 = vunpack.c.l.b16 %v1028
      %v1115 = vunpack.c.h.b16 %v1028
      %v1116 = vunpack.c.l.b16 %v1029
      %v1117 = vunpack.c.h.b16 %v1029
      %v1118 = vunpack.c.l.b16 %v1030
      %v1119 = vunpack.c.h.b16 %v1030
      %v1120 = vunpack.c.l.b16 %v1031
      %v1121 = vunpack.c.h.b16 %v1031
      %v1122 = vunpack.c.l.b16 %v1032
      %v1123 = vunpack.c.h.b16 %v1032
      %v1124 = vunpack.c.l.b16 %v1033
      %v1125 = vunpack.c.h.b16 %v1033
      %v1126 = vunpack.c.l.b16 %v1034
      %v1127 = vunpack.c.h.b16 %v1034
      %v1128 = vunpack.c.l.b16 %v1035
      %v1129 = vunpack.c.h.b16 %v1035
      %v1130 = vunpack.c.l.b16 %v1036
      %v1131 = vunpack.c.h.b16 %v1036
      %v1132 = vunpack.c.l.b16 %v1037
      %v1133 = vunpack.c.h.b16 %v1037
      %v1134 = vpack.c.b16 %v1070, %v1070
      %v1135 = vpack.c.b16 %v1071, %v1071
      %v1136 = vpack.c.b16 %v1072, %v1072
      %v1137 = vpack.c.b16 %v1073, %v1073
      %v1138 = vpack.c.b16 %v1074, %v1074
      %v1139 = vpack.c.b16 %v1075, %v1075
      %v1140 = vpack.c.b16 %v1076, %v1076
      %v1141 = vpack.c.b16 %v1077, %v1077
      %v1142 = vpack.c.b16 %v1078, %v1078
      %v1143 = vpack.c.b16 %v1079, %v1079
      %v1144 = vpack.c.b16 %v1080, %v1080
      %v1145 = vpack.c.b16 %v1081, %v1081
      %v1146 = vpack.c.b16 %v1082, %v1082
      %v1147 = vpack.c.b16 %v1083, %v1083
      %v1148 = vpack.c.b16 %v1084, %v1084
      %v1149 = vpack.c.b16 %v1085, %v1085
      %v1150 = vpack.c.b16 %v1086, %v1086
      %v1151 = vpack.c.b16 %v1087, %v1087
      %v1152 = vpack.c.b16 %v1088, %v1088
      %v1153 = vpack.c.b16 %v1089, %v1089
      %v1154 = vpack.c.b16 %v1090, %v1090
      %v1155 = vpack.c.b16 %v1091, %v1091
      %v1156 = vpack.c.b16 %v1092, %v1092
      %v1157 = vpack.c.b16 %v1093, %v1093
      %v1158 = vpack.c.b16 %v1094, %v1094
      %v1159 = vpack.c.b16 %v1095, %v1095
      %v1160 = vpack.c.b16 %v1096, %v1096
      %v1161 = vpack.c.b16 %v1097, %v1097
      %v1162 = vpack.c.b16 %v1098, %v1098
      %v1163 = vpack.c.b16 %v1099, %v1099
      %v1164 = vpack.c.b16 %v1100, %v1100
      %v1165 = vpack.c.b16 %v1101, %v1101
      %v1166 = vpack.c.b16 %v1102, %v1102
      %v1167 = vpack.c.b16 %v1103, %v1103
      %v1168 = vpack.c.b16 %v1104, %v1104
      %v1169 = vpack.c.b16 %v1105, %v1105
      %v1170 = vpack.c.b16 %v1106, %v1106
      %v1171 = vpack.c.b16 %v1107, %v1107
      %v1172 = vpack.c.b16 %v1108, %v1108
      %v1173 = vpack.c.b16 %v1109, %v1109
      %v1174 = vpack.c.b16 %v1110, %v1110
      %v1175 = vpack.c.b16 %v1111, %v1111
      %v1176 = vpack.c.b16 %v1112, %v1112
      %v1177 = vpack.c.b16 %v1113, %v1113
      %v1178 = vpack.c.b16 %v1114, %v1114
      %v1179 = vpack.c.b16 %v1115, %v1115
      %v1180 = vpack.c.b16 %v1116, %v1116
      %v1181 = vpack.c.b16 %v1117, %v1117
      %v1182 = vpack.c.b16 %v1118, %v1118
      %v1183 = vpack.c.b16 %v1119, %v1119
      %v1184 = vpack.c.b16 %v1120, %v1120
      %v1185 = vpack.c.b16 %v1121, %v1121
      %v1186 = vpack.c.b16 %v1122, %v1122
      %v1187 = vpack.c.b16 %v1123, %v1123
      %v1188 = vpack.c.b16 %v1124, %v1124
      %v1189 = vpack.c.b16 %v1125, %v1125
      %v1190 = vpack.c.b16 %v1126, %v1126
      %v1191 = vpack.c.b16 %v1127, %v1127
      %v1192 = vpack.c.b16 %v1128, %v1128
      %v1193 = vpack.c.b16 %v1129, %v1129
      %v1194 = vpack.c.b16 %v1130, %v1130
      %v1195 = vpack.c.b16 %v1131, %v1131
      %v1196 = vpack.c.b16 %v1132, %v1132
      %v1197 = vpack.c.b16 %v1133, %v1133
      %1262 = vst [vmem:[%s172] sm:$0xf] %v1134
      %1263 = vst [vmem:[%s172 + $0x4] sm:$0xf] %v1135
      %1264 = vst [vmem:[%s172 + $0x8] sm:$0xf] %v1136
      %1265 = vst [vmem:[%s172 + $0xc] sm:$0xf] %v1137
      %1266 = vst [vmem:[%s172 + $0x10] sm:$0xf] %v1138
      %1267 = vst [vmem:[%s172 + $0x14] sm:$0xf] %v1139
      %1268 = vst [vmem:[%s172 + $0x18] sm:$0xf] %v1140
      %1269 = vst [vmem:[%s172 + $0x1c] sm:$0xf] %v1141
      %1270 = vst [vmem:[%s172 + $0x20] sm:$0xf] %v1142
      %1271 = vst [vmem:[%s172 + $0x24] sm:$0xf] %v1143
      %1272 = vst [vmem:[%s172 + $0x28] sm:$0xf] %v1144
      %1273 = vst [vmem:[%s172 + $0x2c] sm:$0xf] %v1145
      %1274 = vst [vmem:[%s172 + $0x30] sm:$0xf] %v1146
      %1275 = vst [vmem:[%s172 + $0x34] sm:$0xf] %v1147
      %1276 = vst [vmem:[%s172 + $0x38] sm:$0xf] %v1148
      %1277 = vst [vmem:[%s172 + $0x3c] sm:$0xf] %v1149
      %1278 = vst [vmem:[%s172 + $0x40] sm:$0xf] %v1150
      %1279 = vst [vmem:[%s172 + $0x44] sm:$0xf] %v1151
      %1280 = vst [vmem:[%s172 + $0x48] sm:$0xf] %v1152
      %1281 = vst [vmem:[%s172 + $0x4c] sm:$0xf] %v1153
      %1282 = vst [vmem:[%s172 + $0x50] sm:$0xf] %v1154
      %1283 = vst [vmem:[%s172 + $0x54] sm:$0xf] %v1155
      %1284 = vst [vmem:[%s172 + $0x58] sm:$0xf] %v1156
      %1285 = vst [vmem:[%s172 + $0x5c] sm:$0xf] %v1157
      %1286 = vst [vmem:[%s172 + $0x60] sm:$0xf] %v1158
      %1287 = vst [vmem:[%s172 + $0x64] sm:$0xf] %v1159
      %1288 = vst [vmem:[%s172 + $0x68] sm:$0xf] %v1160
      %1289 = vst [vmem:[%s172 + $0x6c] sm:$0xf] %v1161
      %1290 = vst [vmem:[%s172 + $0x70] sm:$0xf] %v1162
      %1291 = vst [vmem:[%s172 + $0x74] sm:$0xf] %v1163
      %1292 = vst [vmem:[%s172 + $0x78] sm:$0xf] %v1164
      %1293 = vst [vmem:[%s172 + $0x7c] sm:$0xf] %v1165
      %1294 = vst [vmem:[%s172 + $0x80] sm:$0xf] %v1166
      %1295 = vst [vmem:[%s172 + $0x84] sm:$0xf] %v1167
      %1296 = vst [vmem:[%s172 + $0x88] sm:$0xf] %v1168
      %1297 = vst [vmem:[%s172 + $0x8c] sm:$0xf] %v1169
      %1298 = vst [vmem:[%s172 + $0x90] sm:$0xf] %v1170
      %1299 = vst [vmem:[%s172 + $0x94] sm:$0xf] %v1171
      %1300 = vst [vmem:[%s172 + $0x98] sm:$0xf] %v1172
      %1301 = vst [vmem:[%s172 + $0x9c] sm:$0xf] %v1173
      %1302 = vst [vmem:[%s172 + $0xa0] sm:$0xf] %v1174
      %1303 = vst [vmem:[%s172 + $0xa4] sm:$0xf] %v1175
      %1304 = vst [vmem:[%s172 + $0xa8] sm:$0xf] %v1176
      %1305 = vst [vmem:[%s172 + $0xac] sm:$0xf] %v1177
      %1306 = vst [vmem:[%s172 + $0xb0] sm:$0xf] %v1178
      %1307 = vst [vmem:[%s172 + $0xb4] sm:$0xf] %v1179
      %1308 = vst [vmem:[%s172 + $0xb8] sm:$0xf] %v1180
      %1309 = vst [vmem:[%s172 + $0xbc] sm:$0xf] %v1181
      %1310 = vst [vmem:[%s172 + $0xc0] sm:$0xf] %v1182
      %1311 = vst [vmem:[%s172 + $0xc4] sm:$0xf] %v1183
      %1312 = vst [vmem:[%s172 + $0xc8] sm:$0xf] %v1184
      %1313 = vst [vmem:[%s172 + $0xcc] sm:$0xf] %v1185
      %1314 = vst [vmem:[%s172 + $0xd0] sm:$0xf] %v1186
      %1315 = vst [vmem:[%s172 + $0xd4] sm:$0xf] %v1187
      %1316 = vst [vmem:[%s172 + $0xd8] sm:$0xf] %v1188
      %1317 = vst [vmem:[%s172 + $0xdc] sm:$0xf] %v1189
      %1318 = vst [vmem:[%s172 + $0xe0] sm:$0xf] %v1190
      %1319 = vst [vmem:[%s172 + $0xe4] sm:$0xf] %v1191
      %1320 = vst [vmem:[%s172 + $0xe8] sm:$0xf] %v1192
      %1321 = vst [vmem:[%s172 + $0xec] sm:$0xf] %v1193
      %1322 = vst [vmem:[%s172 + $0xf0] sm:$0xf] %v1194
      %1323 = vst [vmem:[%s172 + $0xf4] sm:$0xf] %v1195
      %1324 = vst [vmem:[%s172 + $0xf8] sm:$0xf] %v1196
      %1325 = vst [vmem:[%s172 + $0xfc] sm:$0xf] %v1197
      %s1326 = smul.u32 64, %s14
      %p1327 = scmp.lt.s32.totalorder %s1326, 127
      %s1328 = scalar_select %p1327, %s1326, 127
      %s1329 = smul.addr %s1328, 4
      %s1330 = scalar_lea.vmem %s3, %s1329
      // Predicated region
      $region33: #{discriminator_forward.5} parent=31 // pred_check
        %p1331 = pneg %p100
      $region34: #{discriminator_forward.5} parent=31 // pred_check_branch
        %1333 = sbr.rel (%p1331) target = $region36
      $region35: #{discriminator_forward.5} parent=31 // pred_region
        %s1334 = smul.u32 64, %s14
      $region36: #{discriminator_forward.5} parent=31 // pred_fallthru
        _
    $region32: #{discriminator_forward.5} parent=5 // pred_fallthru
      _
    %p1335 = scmp.le.s32.totalorder 2, %s9
    // Predicated region
    $region37: #{discriminator_forward.5} parent=5 // pred_check
      %p1336 = pneg %p1335
    $region38: #{discriminator_forward.5} parent=5 // pred_check_branch
      %1338 = sbr.rel (%p1336) target = $region40
    $region39: #{discriminator_forward.5} parent=5 // pred_region
      %s1339 = ssub.s32 %s9, 2
      // Predicated region
      $region41: #{discriminator_forward.5} parent=39 // pred_check
        %p1340 = pneg %p106
      $region42: #{discriminator_forward.5} parent=39 // pred_check_branch
        %1342 = sbr.rel (%p1340) target = $region44
      $region43: #{discriminator_forward.5} parent=39 // pred_region
        %s1343 = smul.u32 64, %s15
        %p1344 = scmp.lt.s32.totalorder %s1343, 127
        %s1345 = scalar_select %p1344, %s1343, 127
        %s1346 = smul.addr %s1345, 4
        %s1347 = scalar_lea.vmem %s3, %s1346
      $region44: #{discriminator_forward.5} parent=39 // pred_fallthru
        _
    $region40: #{discriminator_forward.5} parent=5 // pred_fallthru
      _
  $region6: #{discriminator_forward.5} parent=0 // loop_footer
    %s13 = sadd.s32 1, %s9
  $region7: #{discriminator_forward.5} parent=0 // loop_footer_branch
    %8 = sbr.rel target = $region3
  $region8: #{discriminator_forward.5} parent=0 // loop_exit
    _

// kernel: discriminator_forward.6
$region0: #{discriminator_forward.6}
  #allocation0 [shape = 'u32[]', space=smem, size = 0x4, offset = 0x4, fixed_abs, tag = 'smem constant byte address 0x4 - core index']
  #allocation1 [shape = 'u32[144,128]{1,0:T(1,128)}', space=vmem, size = 0x12000, scoped, tag = 'internal scratch']
  %s0 = inlined_call_operand.vmem [shape: bf16[256,144], index: 0, kind: input, shape index: {}]
  %s1 = inlined_call_operand.vmem [shape: bf16[144,128], index: 1, kind: input, shape index: {}]
  %s2 = inlined_call_operand.vmem [shape: f32[1,128], index: 2, kind: input, shape index: {}]
  %s3 = inlined_call_operand.vmem [shape: bf16[256,128], index: 3, kind: output, shape index: {}]
  %s4 = sld [smem:[#allocation0]]
  $region22: #{discriminator_forward.6} parent=0
    _
  %s6 = ssub.s32 1, %s4
  %s7 = scalar_select 0, %s6, %s4
  // Predicated region
  $region2: #{discriminator_forward.6} parent=0 // pred_check
    _
  $region3: #{discriminator_forward.6} parent=0 // pred_check_branch
    %9 = sbr.rel (0) target = $region5
  $region4: #{discriminator_forward.6} parent=0 // pred_region
    _
  $region5: #{discriminator_forward.6} parent=0 // pred_fallthru
    _
  // Predicated region
  $region6: #{discriminator_forward.6} parent=0 // pred_check
    _
  $region7: #{discriminator_forward.6} parent=0 // pred_check_branch
    %11 = sbr.rel (0) target = $region9
  $region8: #{discriminator_forward.6} parent=0 // pred_region
    _
  $region9: #{discriminator_forward.6} parent=0 // pred_fallthru
    _
  // Predicated region
  $region10: #{discriminator_forward.6} parent=0 // pred_check
    _
  $region11: #{discriminator_forward.6} parent=0 // pred_check_branch
    %13 = sbr.rel (0) target = $region13
  $region12: #{discriminator_forward.6} parent=0 // pred_region
    _
  $region13: #{discriminator_forward.6} parent=0 // pred_fallthru
    _
  %v15 = vld [vmem:[%s0] sm:$0xff]
  %v16 = vld [vmem:[%s0 + $0x8] sm:$0xff]
  %v17 = vld [vmem:[%s0 + $0x10] sm:$0xff]
  %v18 = vld [vmem:[%s0 + $0x18] sm:$0xff]
  %v19 = vld [vmem:[%s0 + $0x20] sm:$0xff]
  %v20 = vld [vmem:[%s0 + $0x28] sm:$0xff]
  %v21 = vld [vmem:[%s0 + $0x30] sm:$0xff]
  %v22 = vld [vmem:[%s0 + $0x38] sm:$0xff]
  %v23 = vld [vmem:[%s0 + $0x40] sm:$0xff]
  %v24 = vld [vmem:[%s0 + $0x48] sm:$0xff]
  %v25 = vld [vmem:[%s0 + $0x50] sm:$0xff]
  %v26 = vld [vmem:[%s0 + $0x58] sm:$0xff]
  %v27 = vld [vmem:[%s0 + $0x60] sm:$0xff]
  %v28 = vld [vmem:[%s0 + $0x68] sm:$0xff]
  %v29 = vld [vmem:[%s0 + $0x70] sm:$0xff]
  %v30 = vld [vmem:[%s0 + $0x78] sm:$0xff]
  %v31 = vld [vmem:[%s0 + $0x80] sm:$0xff]
  %v32 = vld [vmem:[%s0 + $0x88] sm:$0xff]
  %v33 = vld [vmem:[%s0 + $0x90] sm:$0xff]
  %v34 = vld [vmem:[%s0 + $0x98] sm:$0xff]
  %v35 = vld [vmem:[%s0 + $0xa0] sm:$0xff]
  %v36 = vld [vmem:[%s0 + $0xa8] sm:$0xff]
  %v37 = vld [vmem:[%s0 + $0xb0] sm:$0xff]
  %v38 = vld [vmem:[%s0 + $0xb8] sm:$0xff]
  %v39 = vld [vmem:[%s0 + $0xc0] sm:$0xff]
  %v40 = vld [vmem:[%s0 + $0xc8] sm:$0xff]
  %v41 = vld [vmem:[%s0 + $0xd0] sm:$0xff]
  %v42 = vld [vmem:[%s0 + $0xd8] sm:$0xff]
  %v43 = vld [vmem:[%s0 + $0xe0] sm:$0xff]
  %v44 = vld [vmem:[%s0 + $0xe8] sm:$0xff]
  %v45 = vld [vmem:[%s0 + $0xf0] sm:$0xff]
  %v46 = vld [vmem:[%s0 + $0xf8] sm:$0xff]
  %v47 = vld [vmem:[%s1] sm:$0xf]
  %v48 = vld [vmem:[%s1 + $0x4] sm:$0xf]
  %v49 = vld [vmem:[%s1 + $0x8] sm:$0xf]
  %v50 = vld [vmem:[%s1 + $0xc] sm:$0xf]
  %v51 = vld [vmem:[%s1 + $0x10] sm:$0xf]
  %v52 = vld [vmem:[%s1 + $0x14] sm:$0xf]
  %v53 = vld [vmem:[%s1 + $0x18] sm:$0xf]
  %v54 = vld [vmem:[%s1 + $0x1c] sm:$0xf]
  %v55 = vld [vmem:[%s1 + $0x20] sm:$0xf]
  %v56 = vld [vmem:[%s1 + $0x24] sm:$0xf]
  %v57 = vld [vmem:[%s1 + $0x28] sm:$0xf]
  %v58 = vld [vmem:[%s1 + $0x2c] sm:$0xf]
  %v59 = vld [vmem:[%s1 + $0x30] sm:$0xf]
  %v60 = vld [vmem:[%s1 + $0x34] sm:$0xf]
  %v61 = vld [vmem:[%s1 + $0x38] sm:$0xf]
  %v62 = vld [vmem:[%s1 + $0x3c] sm:$0xf]
  %v63 = vld [vmem:[%s1 + $0x40] sm:$0xf]
  %v64 = vld [vmem:[%s1 + $0x44] sm:$0xf]
  %v65 = vld [vmem:[%s2] sm:$0x1]
  %v67 = vlaneseq
  %v68 = vshrl.u32 %v67, 7
  %v69 = vsub.s32 0, %v68
  %v70 = vrot.slane %v65, %v69
  %v104 = vunpack.c.l.b16 %v15
  %v105 = vunpack.c.h.b16 %v15
  %v106 = vunpack.c.l.b16 %v16
  %v107 = vunpack.c.h.b16 %v16
  %v108 = vunpack.c.l.b16 %v17
  %v109 = vunpack.c.h.b16 %v17
  %v110 = vunpack.c.l.b16 %v18
  %v111 = vunpack.c.h.b16 %v18
  %v112 = vunpack.c.l.b16 %v19
  %v113 = vunpack.c.h.b16 %v19
  %v114 = vunpack.c.l.b16 %v20
  %v115 = vunpack.c.h.b16 %v20
  %v116 = vunpack.c.l.b16 %v21
  %v117 = vunpack.c.h.b16 %v21
  %v118 = vunpack.c.l.b16 %v22
  %v119 = vunpack.c.h.b16 %v22
  %v120 = vunpack.c.l.b16 %v23
  %v121 = vunpack.c.h.b16 %v23
  %v122 = vunpack.c.l.b16 %v24
  %v123 = vunpack.c.h.b16 %v24
  %v124 = vunpack.c.l.b16 %v25
  %v125 = vunpack.c.h.b16 %v25
  %v126 = vunpack.c.l.b16 %v26
  %v127 = vunpack.c.h.b16 %v26
  %v128 = vunpack.c.l.b16 %v27
  %v129 = vunpack.c.h.b16 %v27
  %v130 = vunpack.c.l.b16 %v28
  %v131 = vunpack.c.h.b16 %v28
  %v132 = vunpack.c.l.b16 %v29
  %v133 = vunpack.c.h.b16 %v29
  %v134 = vunpack.c.l.b16 %v30
  %v135 = vunpack.c.h.b16 %v30
  %v136 = vunpack.c.l.b16 %v31
  %v137 = vunpack.c.h.b16 %v31
  %v138 = vunpack.c.l.b16 %v32
  %v139 = vunpack.c.h.b16 %v32
  %v140 = vunpack.c.l.b16 %v33
  %v141 = vunpack.c.h.b16 %v33
  %v142 = vunpack.c.l.b16 %v34
  %v143 = vunpack.c.h.b16 %v34
  %v144 = vunpack.c.l.b16 %v35
  %v145 = vunpack.c.h.b16 %v35
  %v146 = vunpack.c.l.b16 %v36
  %v147 = vunpack.c.h.b16 %v36
  %v148 = vunpack.c.l.b16 %v37
  %v149 = vunpack.c.h.b16 %v37
  %v150 = vunpack.c.l.b16 %v38
  %v151 = vunpack.c.h.b16 %v38
  %v152 = vunpack.c.l.b16 %v39
  %v153 = vunpack.c.h.b16 %v39
  %v154 = vunpack.c.l.b16 %v40
  %v155 = vunpack.c.h.b16 %v40
  %v156 = vunpack.c.l.b16 %v41
  %v157 = vunpack.c.h.b16 %v41
  %v158 = vunpack.c.l.b16 %v42
  %v159 = vunpack.c.h.b16 %v42
  %v160 = vunpack.c.l.b16 %v43
  %v161 = vunpack.c.h.b16 %v43
  %v162 = vunpack.c.l.b16 %v44
  %v163 = vunpack.c.h.b16 %v44
  %v164 = vunpack.c.l.b16 %v45
  %v165 = vunpack.c.h.b16 %v45
  %v166 = vunpack.c.l.b16 %v46
  %v167 = vunpack.c.h.b16 %v46
  %v168 = vpack.c.b16 %v106, %v104
  %v169 = vpack.c.b16 %v107, %v105
  %v170 = vpack.c.b16 %v110, %v108
  %v171 = vpack.c.b16 %v111, %v109
  %v172 = vpack.c.b16 %v114, %v112
  %v173 = vpack.c.b16 %v115, %v113
  %v174 = vpack.c.b16 %v118, %v116
  %v175 = vpack.c.b16 %v119, %v117
  %v176 = vpack.c.b16 %v122, %v120
  %v177 = vpack.c.b16 %v123, %v121
  %v178 = vpack.c.b16 %v126, %v124
  %v179 = vpack.c.b16 %v127, %v125
  %v180 = vpack.c.b16 %v130, %v128
  %v181 = vpack.c.b16 %v131, %v129
  %v182 = vpack.c.b16 %v134, %v132
  %v183 = vpack.c.b16 %v135, %v133
  %v184 = vpack.c.b16 %v138, %v136
  %v185 = vpack.c.b16 %v139, %v137
  %v186 = vpack.c.b16 %v142, %v140
  %v187 = vpack.c.b16 %v143, %v141
  %v188 = vpack.c.b16 %v146, %v144
  %v189 = vpack.c.b16 %v147, %v145
  %v190 = vpack.c.b16 %v150, %v148
  %v191 = vpack.c.b16 %v151, %v149
  %v192 = vpack.c.b16 %v154, %v152
  %v193 = vpack.c.b16 %v155, %v153
  %v194 = vpack.c.b16 %v158, %v156
  %v195 = vpack.c.b16 %v159, %v157
  %v196 = vpack.c.b16 %v162, %v160
  %v197 = vpack.c.b16 %v163, %v161
  %v198 = vpack.c.b16 %v166, %v164
  %v199 = vpack.c.b16 %v167, %v165
  %v234 = vunpack.c.l.b16 %v47
  %v235 = vunpack.c.l.b16 %v48
  %v236 = vunpack.c.l.b16 %v49
  %v237 = vunpack.c.l.b16 %v50
  %v238 = vunpack.c.l.b16 %v51
  %v239 = vunpack.c.l.b16 %v52
  %v240 = vunpack.c.l.b16 %v53
  %v241 = vunpack.c.l.b16 %v54
  %v242 = vunpack.c.l.b16 %v55
  %v243 = vunpack.c.l.b16 %v56
  %v244 = vunpack.c.l.b16 %v57
  %v245 = vunpack.c.l.b16 %v58
  %v246 = vunpack.c.l.b16 %v59
  %v247 = vunpack.c.l.b16 %v60
  %v248 = vunpack.c.l.b16 %v61
  %v249 = vunpack.c.l.b16 %v62
  %v250 = vunpack.c.l.b16 %v63
  %v251 = vunpack.c.l.b16 %v64
  %v252 = vpack.c.b16 %v235, %v234
  %v253 = vpack.c.b16 %v237, %v236
  %v254 = vpack.c.b16 %v239, %v238
  %v255 = vpack.c.b16 %v241, %v240
  %v256 = vpack.c.b16 %v243, %v242
  %v257 = vpack.c.b16 %v245, %v244
  %v258 = vpack.c.b16 %v247, %v246
  %v259 = vpack.c.b16 %v249, %v248
  %v260 = vpack.c.b16 %v251, %v250
  %vm270 = vcmask 130048
  %v272 = vsel %vm270, %v169, 0
  %v275 = vsel %vm270, %v171, 0
  %v278 = vsel %vm270, %v173, 0
  %v281 = vsel %vm270, %v175, 0
  %v284 = vsel %vm270, %v177, 0
  %v287 = vsel %vm270, %v179, 0
  %v290 = vsel %vm270, %v181, 0
  %v293 = vsel %vm270, %v183, 0
  %v296 = vsel %vm270, %v185, 0
  %v299 = vsel %vm270, %v187, 0
  %v302 = vsel %vm270, %v189, 0
  %v305 = vsel %vm270, %v191, 0
  %v308 = vsel %vm270, %v193, 0
  %v311 = vsel %vm270, %v195, 0
  %v314 = vsel %vm270, %v197, 0
  %v317 = vsel %vm270, %v199, 0
  %319 = vmatprep.subr.bf16.mxu0 0
  %320 = vmatpush1.bf16.msra.mxu0 %v252
  %321 = vmatprep.subr.bf16.mxu0 0
  %322 = vmatpush1.bf16.msra.mxu0 %v253
  %323 = vmatprep.subr.bf16.mxu0 0
  %324 = vmatpush1.bf16.msra.mxu0 %v254
  %325 = vmatprep.subr.bf16.mxu0 0
  %326 = vmatpush1.bf16.msra.mxu0 %v255
  %327 = vmatprep.subr.bf16.mxu0 0
  %328 = vmatpush1.bf16.msra.mxu0 %v256
  %329 = vmatprep.subr.bf16.mxu0 0
  %330 = vmatpush1.bf16.msra.mxu0 %v257
  %331 = vmatprep.subr.bf16.mxu0 0
  %332 = vmatpush1.bf16.msra.mxu0 %v258
  %333 = vmatprep.subr.bf16.mxu0 0
  %334 = vmatpush1.bf16.msra.mxu0 %v259
  %335 = vmatprep.subr.bf16.mxu0 0
  %336 = vmatpush1.bf16.msra.mxu0 %v260
  %337 = vmatprep.subr.bf16.mxu0 0
  %338 = vmatpush1.bf16.msra.mxu0 0
  %339 = vmatprep.subr.bf16.mxu0 0
  %340 = vmatpush1.bf16.msra.mxu0 0
  %341 = vmatprep.subr.bf16.mxu0 0
  %342 = vmatpush1.bf16.msra.mxu0 0
  %343 = vmatprep.subr.bf16.mxu0 0
  %344 = vmatpush1.bf16.msra.mxu0 0
  %345 = vmatprep.subr.bf16.mxu0 0
  %346 = vmatpush1.bf16.msra.mxu0 0
  %347 = vmatprep.subr.bf16.mxu0 0
  %348 = vmatpush1.bf16.msra.mxu0 0
  %349 = vmatprep.subr.bf16.mxu0 0
  %350 = vmatpush1.bf16.msra.mxu0 0
  %351 = vmatprep.mubr.bf16.mxu0 %v272
  %352 = vmatmul.mubr.bf16.gmra.mrb[0].mxu0 %v168
  %v353 = vpop.f32.mrb[0].mxu0
  %v354 = vadd.f32 %v70, %v353
  %v355 = vpop.f32.mrb[0].mxu0
  %v356 = vpop.f32.mrb[0].mxu0
  %v357 = vadd.f32 %v70, %v356
  %v358 = vpop.f32.mrb[0].mxu0
  %359 = vmatprep.mubr.bf16.mxu0 %v275
  %360 = vmatmul.mubr.bf16.gmra.mrb[0].mxu0 %v170
  %v361 = vpop.f32.mrb[0].mxu0
  %v362 = vadd.f32 %v70, %v361
  %v363 = vpop.f32.mrb[0].mxu0
  %v364 = vpop.f32.mrb[0].mxu0
  %v365 = vadd.f32 %v70, %v364
  %v366 = vpop.f32.mrb[0].mxu0
  %367 = vmatprep.mubr.bf16.mxu0 %v278
  %368 = vmatmul.mubr.bf16.gmra.mrb[0].mxu0 %v172
  %v369 = vpop.f32.mrb[0].mxu0
  %v370 = vadd.f32 %v70, %v369
  %v371 = vpop.f32.mrb[0].mxu0
  %v372 = vpop.f32.mrb[0].mxu0
  %v373 = vadd.f32 %v70, %v372
  %v374 = vpop.f32.mrb[0].mxu0
  %375 = vmatprep.mubr.bf16.mxu0 %v281
  %376 = vmatmul.mubr.bf16.gmra.mrb[0].mxu0 %v174
  %v377 = vpop.f32.mrb[0].mxu0
  %v378 = vadd.f32 %v70, %v377
  %v379 = vpop.f32.mrb[0].mxu0
  %v380 = vpop.f32.mrb[0].mxu0
  %v381 = vadd.f32 %v70, %v380
  %v382 = vpop.f32.mrb[0].mxu0
  %383 = vmatprep.mubr.bf16.mxu0 %v284
  %384 = vmatmul.mubr.bf16.gmra.mrb[0].mxu0 %v176
  %v385 = vpop.f32.mrb[0].mxu0
  %v386 = vadd.f32 %v70, %v385
  %v387 = vpop.f32.mrb[0].mxu0
  %v388 = vpop.f32.mrb[0].mxu0
  %v389 = vadd.f32 %v70, %v388
  %v390 = vpop.f32.mrb[0].mxu0
  %391 = vmatprep.mubr.bf16.mxu0 %v287
  %392 = vmatmul.mubr.bf16.gmra.mrb[0].mxu0 %v178
  %v393 = vpop.f32.mrb[0].mxu0
  %v394 = vadd.f32 %v70, %v393
  %v395 = vpop.f32.mrb[0].mxu0
  %v396 = vpop.f32.mrb[0].mxu0
  %v397 = vadd.f32 %v70, %v396
  %v398 = vpop.f32.mrb[0].mxu0
  %399 = vmatprep.mubr.bf16.mxu0 %v290
  %400 = vmatmul.mubr.bf16.gmra.mrb[0].mxu0 %v180
  %v401 = vpop.f32.mrb[0].mxu0
  %v402 = vadd.f32 %v70, %v401
  %v403 = vpop.f32.mrb[0].mxu0
  %v404 = vpop.f32.mrb[0].mxu0
  %v405 = vadd.f32 %v70, %v404
  %v406 = vpop.f32.mrb[0].mxu0
  %407 = vmatprep.mubr.bf16.mxu0 %v293
  %408 = vmatmul.mubr.bf16.gmra.mrb[0].mxu0 %v182
  %v409 = vpop.f32.mrb[0].mxu0
  %v410 = vadd.f32 %v70, %v409
  %v411 = vpop.f32.mrb[0].mxu0
  %v412 = vpop.f32.mrb[0].mxu0
  %v413 = vadd.f32 %v70, %v412
  %v414 = vpop.f32.mrb[0].mxu0
  %415 = vmatprep.mubr.bf16.mxu0 %v296
  %416 = vmatmul.mubr.bf16.gmra.mrb[0].mxu0 %v184
  %v417 = vpop.f32.mrb[0].mxu0
  %v418 = vadd.f32 %v70, %v417
  %v419 = vpop.f32.mrb[0].mxu0
  %v420 = vpop.f32.mrb[0].mxu0
  %v421 = vadd.f32 %v70, %v420
  %v422 = vpop.f32.mrb[0].mxu0
  %423 = vmatprep.mubr.bf16.mxu0 %v299
  %424 = vmatmul.mubr.bf16.gmra.mrb[0].mxu0 %v186
  %v425 = vpop.f32.mrb[0].mxu0
  %v426 = vadd.f32 %v70, %v425
  %v427 = vpop.f32.mrb[0].mxu0
  %v428 = vpop.f32.mrb[0].mxu0
  %v429 = vadd.f32 %v70, %v428
  %v430 = vpop.f32.mrb[0].mxu0
  %431 = vmatprep.mubr.bf16.mxu0 %v302
  %432 = vmatmul.mubr.bf16.gmra.mrb[0].mxu0 %v188
  %v433 = vpop.f32.mrb[0].mxu0
  %v434 = vadd.f32 %v70, %v433
  %v435 = vpop.f32.mrb[0].mxu0
  %v436 = vpop.f32.mrb[0].mxu0
  %v437 = vadd.f32 %v70, %v436
  %v438 = vpop.f32.mrb[0].mxu0
  %439 = vmatprep.mubr.bf16.mxu0 %v305
  %440 = vmatmul.mubr.bf16.gmra.mrb[0].mxu0 %v190
  %v441 = vpop.f32.mrb[0].mxu0
  %v442 = vadd.f32 %v70, %v441
  %v443 = vpop.f32.mrb[0].mxu0
  %v444 = vpop.f32.mrb[0].mxu0
  %v445 = vadd.f32 %v70, %v444
  %v446 = vpop.f32.mrb[0].mxu0
  %447 = vmatprep.mubr.bf16.mxu0 %v308
  %448 = vmatmul.mubr.bf16.gmra.mrb[0].mxu0 %v192
  %v449 = vpop.f32.mrb[0].mxu0
  %v450 = vadd.f32 %v70, %v449
  %v451 = vpop.f32.mrb[0].mxu0
  %v452 = vpop.f32.mrb[0].mxu0
  %v453 = vadd.f32 %v70, %v452
  %v454 = vpop.f32.mrb[0].mxu0
  %455 = vmatprep.mubr.bf16.mxu0 %v311
  %456 = vmatmul.mubr.bf16.gmra.mrb[0].mxu0 %v194
  %v457 = vpop.f32.mrb[0].mxu0
  %v458 = vadd.f32 %v70, %v457
  %v459 = vpop.f32.mrb[0].mxu0
  %v460 = vpop.f32.mrb[0].mxu0
  %v461 = vadd.f32 %v70, %v460
  %v462 = vpop.f32.mrb[0].mxu0
  %463 = vmatprep.mubr.bf16.mxu0 %v314
  %464 = vmatmul.mubr.bf16.gmra.mrb[0].mxu0 %v196
  %v465 = vpop.f32.mrb[0].mxu0
  %v466 = vadd.f32 %v70, %v465
  %v467 = vpop.f32.mrb[0].mxu0
  %v468 = vpop.f32.mrb[0].mxu0
  %v469 = vadd.f32 %v70, %v468
  %v470 = vpop.f32.mrb[0].mxu0
  %471 = vmatprep.mubr.bf16.mxu0 %v317
  %472 = vmatmul.mubr.bf16.gmra.mrb[0].mxu0 %v198
  %v473 = vpop.f32.mrb[0].mxu0
  %v474 = vadd.f32 %v70, %v473
  %v475 = vpop.f32.mrb[0].mxu0
  %v476 = vpop.f32.mrb[0].mxu0
  %v477 = vadd.f32 %v70, %v476
  %v478 = vpop.f32.mrb[0].mxu0
  %479 = vdwg.mxu0
  %vm480 = vcmp.gt.f32.partialorder %v354, 0.0
  %vm481 = vcmp.gt.f32.partialorder %v357, 0.0
  %vm482 = vcmp.gt.f32.partialorder %v362, 0.0
  %vm483 = vcmp.gt.f32.partialorder %v365, 0.0
  %vm484 = vcmp.gt.f32.partialorder %v370, 0.0
  %vm485 = vcmp.gt.f32.partialorder %v373, 0.0
  %vm486 = vcmp.gt.f32.partialorder %v378, 0.0
  %vm487 = vcmp.gt.f32.partialorder %v381, 0.0
  %vm488 = vcmp.gt.f32.partialorder %v386, 0.0
  %vm489 = vcmp.gt.f32.partialorder %v389, 0.0
  %vm490 = vcmp.gt.f32.partialorder %v394, 0.0
  %vm491 = vcmp.gt.f32.partialorder %v397, 0.0
  %vm492 = vcmp.gt.f32.partialorder %v402, 0.0
  %vm493 = vcmp.gt.f32.partialorder %v405, 0.0
  %vm494 = vcmp.gt.f32.partialorder %v410, 0.0
  %vm495 = vcmp.gt.f32.partialorder %v413, 0.0
  %vm496 = vcmp.gt.f32.partialorder %v418, 0.0
  %vm497 = vcmp.gt.f32.partialorder %v421, 0.0
  %vm498 = vcmp.gt.f32.partialorder %v426, 0.0
  %vm499 = vcmp.gt.f32.partialorder %v429, 0.0
  %vm500 = vcmp.gt.f32.partialorder %v434, 0.0
  %vm501 = vcmp.gt.f32.partialorder %v437, 0.0
  %vm502 = vcmp.gt.f32.partialorder %v442, 0.0
  %vm503 = vcmp.gt.f32.partialorder %v445, 0.0
  %vm504 = vcmp.gt.f32.partialorder %v450, 0.0
  %vm505 = vcmp.gt.f32.partialorder %v453, 0.0
  %vm506 = vcmp.gt.f32.partialorder %v458, 0.0
  %vm507 = vcmp.gt.f32.partialorder %v461, 0.0
  %vm508 = vcmp.gt.f32.partialorder %v466, 0.0
  %vm509 = vcmp.gt.f32.partialorder %v469, 0.0
  %vm510 = vcmp.gt.f32.partialorder %v474, 0.0
  %vm511 = vcmp.gt.f32.partialorder %v477, 0.0
  %v512 = vmul.f32 %v354, 0.2
  %v513 = vmul.f32 %v357, 0.2
  %v514 = vmul.f32 %v362, 0.2
  %v515 = vmul.f32 %v365, 0.2
  %v516 = vmul.f32 %v370, 0.2
  %v517 = vmul.f32 %v373, 0.2
  %v518 = vmul.f32 %v378, 0.2
  %v519 = vmul.f32 %v381, 0.2
  %v520 = vmul.f32 %v386, 0.2
  %v521 = vmul.f32 %v389, 0.2
  %v522 = vmul.f32 %v394, 0.2
  %v523 = vmul.f32 %v397, 0.2
  %v524 = vmul.f32 %v402, 0.2
  %v525 = vmul.f32 %v405, 0.2
  %v526 = vmul.f32 %v410, 0.2
  %v527 = vmul.f32 %v413, 0.2
  %v528 = vmul.f32 %v418, 0.2
  %v529 = vmul.f32 %v421, 0.2
  %v530 = vmul.f32 %v426, 0.2
  %v531 = vmul.f32 %v429, 0.2
  %v532 = vmul.f32 %v434, 0.2
  %v533 = vmul.f32 %v437, 0.2
  %v534 = vmul.f32 %v442, 0.2
  %v535 = vmul.f32 %v445, 0.2
  %v536 = vmul.f32 %v450, 0.2
  %v537 = vmul.f32 %v453, 0.2
  %v538 = vmul.f32 %v458, 0.2
  %v539 = vmul.f32 %v461, 0.2
  %v540 = vmul.f32 %v466, 0.2
  %v541 = vmul.f32 %v469, 0.2
  %v542 = vmul.f32 %v474, 0.2
  %v543 = vmul.f32 %v477, 0.2
  %v544 = vsel %vm480, %v354, %v512
  %v545 = vsel %vm481, %v357, %v513
  %v546 = vsel %vm482, %v362, %v514
  %v547 = vsel %vm483, %v365, %v515
  %v548 = vsel %vm484, %v370, %v516
  %v549 = vsel %vm485, %v373, %v517
  %v550 = vsel %vm486, %v378, %v518
  %v551 = vsel %vm487, %v381, %v519
  %v552 = vsel %vm488, %v386, %v520
  %v553 = vsel %vm489, %v389, %v521
  %v554 = vsel %vm490, %v394, %v522
  %v555 = vsel %vm491, %v397, %v523
  %v556 = vsel %vm492, %v402, %v524
  %v557 = vsel %vm493, %v405, %v525
  %v558 = vsel %vm494, %v410, %v526
  %v559 = vsel %vm495, %v413, %v527
  %v560 = vsel %vm496, %v418, %v528
  %v561 = vsel %vm497, %v421, %v529
  %v562 = vsel %vm498, %v426, %v530
  %v563 = vsel %vm499, %v429, %v531
  %v564 = vsel %vm500, %v434, %v532
  %v565 = vsel %vm501, %v437, %v533
  %v566 = vsel %vm502, %v442, %v534
  %v567 = vsel %vm503, %v445, %v535
  %v568 = vsel %vm504, %v450, %v536
  %v569 = vsel %vm505, %v453, %v537
  %v570 = vsel %vm506, %v458, %v538
  %v571 = vsel %vm507, %v461, %v539
  %v572 = vsel %vm508, %v466, %v540
  %v573 = vsel %vm509, %v469, %v541
  %v574 = vsel %vm510, %v474, %v542
  %v575 = vsel %vm511, %v477, %v543
  %v576 = vpack.c.bf16 %v545, %v544
  %v577 = vpack.c.bf16 %v547, %v546
  %v578 = vpack.c.bf16 %v549, %v548
  %v579 = vpack.c.bf16 %v551, %v550
  %v580 = vpack.c.bf16 %v553, %v552
  %v581 = vpack.c.bf16 %v555, %v554
  %v582 = vpack.c.bf16 %v557, %v556
  %v583 = vpack.c.bf16 %v559, %v558
  %v584 = vpack.c.bf16 %v561, %v560
  %v585 = vpack.c.bf16 %v563, %v562
  %v586 = vpack.c.bf16 %v565, %v564
  %v587 = vpack.c.bf16 %v567, %v566
  %v588 = vpack.c.bf16 %v569, %v568
  %v589 = vpack.c.bf16 %v571, %v570
  %v590 = vpack.c.bf16 %v573, %v572
  %v591 = vpack.c.bf16 %v575, %v574
  %v608 = vunpack.c.l.b16 %v576
  %v609 = vunpack.c.h.b16 %v576
  %v610 = vunpack.c.l.b16 %v577
  %v611 = vunpack.c.h.b16 %v577
  %v612 = vunpack.c.l.b16 %v578
  %v613 = vunpack.c.h.b16 %v578
  %v614 = vunpack.c.l.b16 %v579
  %v615 = vunpack.c.h.b16 %v579
  %v616 = vunpack.c.l.b16 %v580
  %v617 = vunpack.c.h.b16 %v580
  %v618 = vunpack.c.l.b16 %v581
  %v619 = vunpack.c.h.b16 %v581
  %v620 = vunpack.c.l.b16 %v582
  %v621 = vunpack.c.h.b16 %v582
  %v622 = vunpack.c.l.b16 %v583
  %v623 = vunpack.c.h.b16 %v583
  %v624 = vunpack.c.l.b16 %v584
  %v625 = vunpack.c.h.b16 %v584
  %v626 = vunpack.c.l.b16 %v585
  %v627 = vunpack.c.h.b16 %v585
  %v628 = vunpack.c.l.b16 %v586
  %v629 = vunpack.c.h.b16 %v586
  %v630 = vunpack.c.l.b16 %v587
  %v631 = vunpack.c.h.b16 %v587
  %v632 = vunpack.c.l.b16 %v588
  %v633 = vunpack.c.h.b16 %v588
  %v634 = vunpack.c.l.b16 %v589
  %v635 = vunpack.c.h.b16 %v589
  %v636 = vunpack.c.l.b16 %v590
  %v637 = vunpack.c.h.b16 %v590
  %v638 = vunpack.c.l.b16 %v591
  %v639 = vunpack.c.h.b16 %v591
  %v640 = vpack.c.b16 %v608, %v608
  %v641 = vpack.c.b16 %v609, %v609
  %v642 = vpack.c.b16 %v610, %v610
  %v643 = vpack.c.b16 %v611, %v611
  %v644 = vpack.c.b16 %v612, %v612
  %v645 = vpack.c.b16 %v613, %v613
  %v646 = vpack.c.b16 %v614, %v614
  %v647 = vpack.c.b16 %v615, %v615
  %v648 = vpack.c.b16 %v616, %v616
  %v649 = vpack.c.b16 %v617, %v617
  %v650 = vpack.c.b16 %v618, %v618
  %v651 = vpack.c.b16 %v619, %v619
  %v652 = vpack.c.b16 %v620, %v620
  %v653 = vpack.c.b16 %v621, %v621
  %v654 = vpack.c.b16 %v622, %v622
  %v655 = vpack.c.b16 %v623, %v623
  %v656 = vpack.c.b16 %v624, %v624
  %v657 = vpack.c.b16 %v625, %v625
  %v658 = vpack.c.b16 %v626, %v626
  %v659 = vpack.c.b16 %v627, %v627
  %v660 = vpack.c.b16 %v628, %v628
  %v661 = vpack.c.b16 %v629, %v629
  %v662 = vpack.c.b16 %v630, %v630
  %v663 = vpack.c.b16 %v631, %v631
  %v664 = vpack.c.b16 %v632, %v632
  %v665 = vpack.c.b16 %v633, %v633
  %v666 = vpack.c.b16 %v634, %v634
  %v667 = vpack.c.b16 %v635, %v635
  %v668 = vpack.c.b16 %v636, %v636
  %v669 = vpack.c.b16 %v637, %v637
  %v670 = vpack.c.b16 %v638, %v638
  %v671 = vpack.c.b16 %v639, %v639
  %704 = vst [vmem:[%s3] sm:$0xf] %v640
  %705 = vst [vmem:[%s3 + $0x4] sm:$0xf] %v641
  %706 = vst [vmem:[%s3 + $0x8] sm:$0xf] %v642
  %707 = vst [vmem:[%s3 + $0xc] sm:$0xf] %v643
  %708 = vst [vmem:[%s3 + $0x10] sm:$0xf] %v644
  %709 = vst [vmem:[%s3 + $0x14] sm:$0xf] %v645
  %710 = vst [vmem:[%s3 + $0x18] sm:$0xf] %v646
  %711 = vst [vmem:[%s3 + $0x1c] sm:$0xf] %v647
  %712 = vst [vmem:[%s3 + $0x20] sm:$0xf] %v648
  %713 = vst [vmem:[%s3 + $0x24] sm:$0xf] %v649
  %714 = vst [vmem:[%s3 + $0x28] sm:$0xf] %v650
  %715 = vst [vmem:[%s3 + $0x2c] sm:$0xf] %v651
  %716 = vst [vmem:[%s3 + $0x30] sm:$0xf] %v652
  %717 = vst [vmem:[%s3 + $0x34] sm:$0xf] %v653
  %718 = vst [vmem:[%s3 + $0x38] sm:$0xf] %v654
  %719 = vst [vmem:[%s3 + $0x3c] sm:$0xf] %v655
  %720 = vst [vmem:[%s3 + $0x40] sm:$0xf] %v656
  %721 = vst [vmem:[%s3 + $0x44] sm:$0xf] %v657
  %722 = vst [vmem:[%s3 + $0x48] sm:$0xf] %v658
  %723 = vst [vmem:[%s3 + $0x4c] sm:$0xf] %v659
  %724 = vst [vmem:[%s3 + $0x50] sm:$0xf] %v660
  %725 = vst [vmem:[%s3 + $0x54] sm:$0xf] %v661
  %726 = vst [vmem:[%s3 + $0x58] sm:$0xf] %v662
  %727 = vst [vmem:[%s3 + $0x5c] sm:$0xf] %v663
  %728 = vst [vmem:[%s3 + $0x60] sm:$0xf] %v664
  %729 = vst [vmem:[%s3 + $0x64] sm:$0xf] %v665
  %730 = vst [vmem:[%s3 + $0x68] sm:$0xf] %v666
  %731 = vst [vmem:[%s3 + $0x6c] sm:$0xf] %v667
  %732 = vst [vmem:[%s3 + $0x70] sm:$0xf] %v668
  %733 = vst [vmem:[%s3 + $0x74] sm:$0xf] %v669
  %734 = vst [vmem:[%s3 + $0x78] sm:$0xf] %v670
  %735 = vst [vmem:[%s3 + $0x7c] sm:$0xf] %v671
  // Predicated region
  $region14: #{discriminator_forward.6} parent=0 // pred_check
    _
  $region15: #{discriminator_forward.6} parent=0 // pred_check_branch
    %737 = sbr.rel (0) target = $region17
  $region16: #{discriminator_forward.6} parent=0 // pred_region
    _
  $region17: #{discriminator_forward.6} parent=0 // pred_fallthru
    _
  // Predicated region
  $region18: #{discriminator_forward.6} parent=0 // pred_check
    _
  $region19: #{discriminator_forward.6} parent=0 // pred_check_branch
    %739 = sbr.rel (0) target = $region21
  $region20: #{discriminator_forward.6} parent=0 // pred_region
    _
  $region21: #{discriminator_forward.6} parent=0 // pred_fallthru
    _

// kernel: discriminator_forward.7
$region0: #{discriminator_forward.7}
  #allocation0 [shape = 'u32[]', space=smem, size = 0x4, offset = 0x4, fixed_abs, tag = 'smem constant byte address 0x4 - core index']
  #allocation1 [shape = 'u32[144,128]{1,0:T(1,128)}', space=vmem, size = 0x12000, scoped, tag = 'internal scratch']
  %s0 = inlined_call_operand.vmem [shape: bf16[64,288], index: 0, kind: input, shape index: {}]
  %s1 = inlined_call_operand.vmem [shape: bf16[288,128], index: 1, kind: input, shape index: {}]
  %s2 = inlined_call_operand.vmem [shape: f32[1,128], index: 2, kind: input, shape index: {}]
  %s3 = inlined_call_operand.vmem [shape: bf16[64,128], index: 3, kind: output, shape index: {}]
  %s4 = sld [smem:[#allocation0]]
  $region22: #{discriminator_forward.7} parent=0
    _
  %s6 = ssub.s32 1, %s4
  %s7 = scalar_select 0, %s6, %s4
  // Predicated region
  $region2: #{discriminator_forward.7} parent=0 // pred_check
    _
  $region3: #{discriminator_forward.7} parent=0 // pred_check_branch
    %9 = sbr.rel (0) target = $region5
  $region4: #{discriminator_forward.7} parent=0 // pred_region
    _
  $region5: #{discriminator_forward.7} parent=0 // pred_fallthru
    _
  // Predicated region
  $region6: #{discriminator_forward.7} parent=0 // pred_check
    _
  $region7: #{discriminator_forward.7} parent=0 // pred_check_branch
    %11 = sbr.rel (0) target = $region9
  $region8: #{discriminator_forward.7} parent=0 // pred_region
    _
  $region9: #{discriminator_forward.7} parent=0 // pred_fallthru
    _
  // Predicated region
  $region10: #{discriminator_forward.7} parent=0 // pred_check
    _
  $region11: #{discriminator_forward.7} parent=0 // pred_check_branch
    %13 = sbr.rel (0) target = $region13
  $region12: #{discriminator_forward.7} parent=0 // pred_region
    _
  $region13: #{discriminator_forward.7} parent=0 // pred_fallthru
    _
  %v15 = vld [vmem:[%s0] sm:$0xff]
  %v16 = vld [vmem:[%s0 + $0x8] sm:$0xf]
  %v17 = vld [vmem:[%s0 + $0xc] sm:$0xff]
  %v18 = vld [vmem:[%s0 + $0x14] sm:$0xf]
  %v19 = vld [vmem:[%s0 + $0x18] sm:$0xff]
  %v20 = vld [vmem:[%s0 + $0x20] sm:$0xf]
  %v21 = vld [vmem:[%s0 + $0x24] sm:$0xff]
  %v22 = vld [vmem:[%s0 + $0x2c] sm:$0xf]
  %v23 = vld [vmem:[%s0 + $0x30] sm:$0xff]
  %v24 = vld [vmem:[%s0 + $0x38] sm:$0xf]
  %v25 = vld [vmem:[%s0 + $0x3c] sm:$0xff]
  %v26 = vld [vmem:[%s0 + $0x44] sm:$0xf]
  %v27 = vld [vmem:[%s0 + $0x48] sm:$0xff]
  %v28 = vld [vmem:[%s0 + $0x50] sm:$0xf]
  %v29 = vld [vmem:[%s0 + $0x54] sm:$0xff]
  %v30 = vld [vmem:[%s0 + $0x5c] sm:$0xf]
  %v31 = vld [vmem:[%s1] sm:$0xf]
  %v32 = vld [vmem:[%s1 + $0x4] sm:$0xf]
  %v33 = vld [vmem:[%s1 + $0x8] sm:$0xf]
  %v34 = vld [vmem:[%s1 + $0xc] sm:$0xf]
  %v35 = vld [vmem:[%s1 + $0x10] sm:$0xf]
  %v36 = vld [vmem:[%s1 + $0x14] sm:$0xf]
  %v37 = vld [vmem:[%s1 + $0x18] sm:$0xf]
  %v38 = vld [vmem:[%s1 + $0x1c] sm:$0xf]
  %v39 = vld [vmem:[%s1 + $0x20] sm:$0xf]
  %v40 = vld [vmem:[%s1 + $0x24] sm:$0xf]
  %v41 = vld [vmem:[%s1 + $0x28] sm:$0xf]
  %v42 = vld [vmem:[%s1 + $0x2c] sm:$0xf]
  %v43 = vld [vmem:[%s1 + $0x30] sm:$0xf]
  %v44 = vld [vmem:[%s1 + $0x34] sm:$0xf]
  %v45 = vld [vmem:[%s1 + $0x38] sm:$0xf]
  %v46 = vld [vmem:[%s1 + $0x3c] sm:$0xf]
  %v47 = vld [vmem:[%s1 + $0x40] sm:$0xf]
  %v48 = vld [vmem:[%s1 + $0x44] sm:$0xf]
  %v49 = vld [vmem:[%s1 + $0x48] sm:$0xf]
  %v50 = vld [vmem:[%s1 + $0x4c] sm:$0xf]
  %v51 = vld [vmem:[%s1 + $0x50] sm:$0xf]
  %v52 = vld [vmem:[%s1 + $0x54] sm:$0xf]
  %v53 = vld [vmem:[%s1 + $0x58] sm:$0xf]
  %v54 = vld [vmem:[%s1 + $0x5c] sm:$0xf]
  %v55 = vld [vmem:[%s1 + $0x60] sm:$0xf]
  %v56 = vld [vmem:[%s1 + $0x64] sm:$0xf]
  %v57 = vld [vmem:[%s1 + $0x68] sm:$0xf]
  %v58 = vld [vmem:[%s1 + $0x6c] sm:$0xf]
  %v59 = vld [vmem:[%s1 + $0x70] sm:$0xf]
  %v60 = vld [vmem:[%s1 + $0x74] sm:$0xf]
  %v61 = vld [vmem:[%s1 + $0x78] sm:$0xf]
  %v62 = vld [vmem:[%s1 + $0x7c] sm:$0xf]
  %v63 = vld [vmem:[%s1 + $0x80] sm:$0xf]
  %v64 = vld [vmem:[%s1 + $0x84] sm:$0xf]
  %v65 = vld [vmem:[%s1 + $0x88] sm:$0xf]
  %v66 = vld [vmem:[%s1 + $0x8c] sm:$0xf]
  %v67 = vld [vmem:[%s2] sm:$0x1]
  %v69 = vlaneseq
  %v70 = vshrl.u32 %v69, 7
  %v71 = vsub.s32 0, %v70
  %v72 = vrot.slane %v67, %v71
  %v90 = vunpack.c.l.b16 %v15
  %v91 = vunpack.c.h.b16 %v15
  %v92 = vunpack.c.l.b16 %v16
  %v93 = vunpack.c.l.b16 %v17
  %v94 = vunpack.c.h.b16 %v17
  %v95 = vunpack.c.l.b16 %v18
  %v96 = vunpack.c.l.b16 %v19
  %v97 = vunpack.c.h.b16 %v19
  %v98 = vunpack.c.l.b16 %v20
  %v99 = vunpack.c.l.b16 %v21
  %v100 = vunpack.c.h.b16 %v21
  %v101 = vunpack.c.l.b16 %v22
  %v102 = vunpack.c.l.b16 %v23
  %v103 = vunpack.c.h.b16 %v23
  %v104 = vunpack.c.l.b16 %v24
  %v105 = vunpack.c.l.b16 %v25
  %v106 = vunpack.c.h.b16 %v25
  %v107 = vunpack.c.l.b16 %v26
  %v108 = vunpack.c.l.b16 %v27
  %v109 = vunpack.c.h.b16 %v27
  %v110 = vunpack.c.l.b16 %v28
  %v111 = vunpack.c.l.b16 %v29
  %v112 = vunpack.c.h.b16 %v29
  %v113 = vunpack.c.l.b16 %v30
  %v114 = vpack.c.b16 %v93, %v90
  %v115 = vpack.c.b16 %v94, %v91
  %v116 = vpack.c.b16 %v95, %v92
  %v117 = vpack.c.b16 %v99, %v96
  %v118 = vpack.c.b16 %v100, %v97
  %v119 = vpack.c.b16 %v101, %v98
  %v120 = vpack.c.b16 %v105, %v102
  %v121 = vpack.c.b16 %v106, %v103
  %v122 = vpack.c.b16 %v107, %v104
  %v123 = vpack.c.b16 %v111, %v108
  %v124 = vpack.c.b16 %v112, %v109
  %v125 = vpack.c.b16 %v113, %v110
  %v170 = vunpack.c.l.b16 %v31
  %v171 = vunpack.c.l.b16 %v32
  %v172 = vunpack.c.l.b16 %v33
  %v173 = vunpack.c.l.b16 %v34
  %v174 = vunpack.c.l.b16 %v35
  %v175 = vunpack.c.l.b16 %v36
  %v176 = vunpack.c.l.b16 %v37
  %v177 = vunpack.c.l.b16 %v38
  %v178 = vunpack.c.l.b16 %v39
  %v179 = vunpack.c.l.b16 %v40
  %v180 = vunpack.c.l.b16 %v41
  %v181 = vunpack.c.l.b16 %v42
  %v182 = vunpack.c.l.b16 %v43
  %v183 = vunpack.c.l.b16 %v44
  %v184 = vunpack.c.l.b16 %v45
  %v185 = vunpack.c.l.b16 %v46
  %v186 = vunpack.c.l.b16 %v47
  %v187 = vunpack.c.l.b16 %v48
  %v188 = vunpack.c.l.b16 %v49
  %v189 = vunpack.c.l.b16 %v50
  %v190 = vunpack.c.l.b16 %v51
  %v191 = vunpack.c.l.b16 %v52
  %v192 = vunpack.c.l.b16 %v53
  %v193 = vunpack.c.l.b16 %v54
  %v194 = vunpack.c.l.b16 %v55
  %v195 = vunpack.c.l.b16 %v56
  %v196 = vunpack.c.l.b16 %v57
  %v197 = vunpack.c.l.b16 %v58
  %v198 = vunpack.c.l.b16 %v59
  %v199 = vunpack.c.l.b16 %v60
  %v200 = vunpack.c.l.b16 %v61
  %v201 = vunpack.c.l.b16 %v62
  %v202 = vunpack.c.l.b16 %v63
  %v203 = vunpack.c.l.b16 %v64
  %v204 = vunpack.c.l.b16 %v65
  %v205 = vunpack.c.l.b16 %v66
  %v206 = vpack.c.b16 %v171, %v170
  %v207 = vpack.c.b16 %v173, %v172
  %v208 = vpack.c.b16 %v175, %v174
  %v209 = vpack.c.b16 %v177, %v176
  %v210 = vpack.c.b16 %v179, %v178
  %v211 = vpack.c.b16 %v181, %v180
  %v212 = vpack.c.b16 %v183, %v182
  %v213 = vpack.c.b16 %v185, %v184
  %v214 = vpack.c.b16 %v187, %v186
  %v215 = vpack.c.b16 %v189, %v188
  %v216 = vpack.c.b16 %v191, %v190
  %v217 = vpack.c.b16 %v193, %v192
  %v218 = vpack.c.b16 %v195, %v194
  %v219 = vpack.c.b16 %v197, %v196
  %v220 = vpack.c.b16 %v199, %v198
  %v221 = vpack.c.b16 %v201, %v200
  %v222 = vpack.c.b16 %v203, %v202
  %v223 = vpack.c.b16 %v205, %v204
  %vm242 = vcmask 261120
  %v244 = vsel %vm242, %v116, 0
  %v247 = vsel %vm242, %v119, 0
  %v250 = vsel %vm242, %v122, 0
  %v253 = vsel %vm242, %v125, 0
  %255 = vmatprep.subr.bf16.mxu0 0
  %256 = vmatpush1.bf16.msra.mxu0 %v206
  %257 = vmatprep.subr.bf16.mxu0 0
  %258 = vmatpush1.bf16.msra.mxu0 %v207
  %259 = vmatprep.subr.bf16.mxu0 0
  %260 = vmatpush1.bf16.msra.mxu0 %v208
  %261 = vmatprep.subr.bf16.mxu0 0
  %262 = vmatpush1.bf16.msra.mxu0 %v209
  %263 = vmatprep.subr.bf16.mxu0 0
  %264 = vmatpush1.bf16.msra.mxu0 %v210
  %265 = vmatprep.subr.bf16.mxu0 0
  %266 = vmatpush1.bf16.msra.mxu0 %v211
  %267 = vmatprep.subr.bf16.mxu0 0
  %268 = vmatpush1.bf16.msra.mxu0 %v212
  %269 = vmatprep.subr.bf16.mxu0 0
  %270 = vmatpush1.bf16.msra.mxu0 %v213
  %271 = vmatprep.subr.bf16.mxu0 0
  %272 = vmatpush1.bf16.msra.mxu0 %v214
  %273 = vmatprep.subr.bf16.mxu0 0
  %274 = vmatpush1.bf16.msra.mxu0 %v215
  %275 = vmatprep.subr.bf16.mxu0 0
  %276 = vmatpush1.bf16.msra.mxu0 %v216
  %277 = vmatprep.subr.bf16.mxu0 0
  %278 = vmatpush1.bf16.msra.mxu0 %v217
  %279 = vmatprep.subr.bf16.mxu0 0
  %280 = vmatpush1.bf16.msra.mxu0 %v218
  %281 = vmatprep.subr.bf16.mxu0 0
  %282 = vmatpush1.bf16.msra.mxu0 %v219
  %283 = vmatprep.subr.bf16.mxu0 0
  %284 = vmatpush1.bf16.msra.mxu0 %v220
  %285 = vmatprep.subr.bf16.mxu0 0
  %286 = vmatpush1.bf16.msra.mxu0 %v221
  %287 = vmatprep.mubr.bf16.mxu0 %v115
  %288 = vmatmul.mubr.bf16.gmra.mrb[0].mxu0 %v114
  %v289 = vpop.f32.mrb[0].mxu0
  %v290 = vadd.f32 %v72, %v289
  %v291 = vpop.f32.mrb[0].mxu0
  %v292 = vpop.f32.mrb[0].mxu0
  %v293 = vadd.f32 %v72, %v292
  %v294 = vpop.f32.mrb[0].mxu0
  %295 = vmatprep.mubr.bf16.mxu0 %v118
  %296 = vmatmul.mubr.bf16.gmra.mrb[0].mxu0 %v117
  %v297 = vpop.f32.mrb[0].mxu0
  %v298 = vadd.f32 %v72, %v297
  %v299 = vpop.f32.mrb[0].mxu0
  %v300 = vpop.f32.mrb[0].mxu0
  %v301 = vadd.f32 %v72, %v300
  %v302 = vpop.f32.mrb[0].mxu0
  %303 = vmatprep.mubr.bf16.mxu0 %v121
  %304 = vmatmul.mubr.bf16.gmra.mrb[0].mxu0 %v120
  %v305 = vpop.f32.mrb[0].mxu0
  %v306 = vadd.f32 %v72, %v305
  %v307 = vpop.f32.mrb[0].mxu0
  %v308 = vpop.f32.mrb[0].mxu0
  %v309 = vadd.f32 %v72, %v308
  %v310 = vpop.f32.mrb[0].mxu0
  %311 = vmatprep.mubr.bf16.mxu0 %v124
  %312 = vmatmul.mubr.bf16.gmra.mrb[0].mxu0 %v123
  %v313 = vpop.f32.mrb[0].mxu0
  %v314 = vadd.f32 %v72, %v313
  %v315 = vpop.f32.mrb[0].mxu0
  %v316 = vpop.f32.mrb[0].mxu0
  %v317 = vadd.f32 %v72, %v316
  %v318 = vpop.f32.mrb[0].mxu0
  %319 = vdwg.mxu0
  %320 = vmatprep.subr.bf16.mxu0 0
  %321 = vmatpush1.bf16.msra.mxu0 %v222
  %322 = vmatprep.subr.bf16.mxu0 0
  %323 = vmatpush1.bf16.msra.mxu0 %v223
  %324 = vmatprep.subr.bf16.mxu0 0
  %325 = vmatpush1.bf16.msra.mxu0 0
  %326 = vmatprep.subr.bf16.mxu0 0
  %327 = vmatpush1.bf16.msra.mxu0 0
  %328 = vmatprep.subr.bf16.mxu0 0
  %329 = vmatpush1.bf16.msra.mxu0 0
  %330 = vmatprep.subr.bf16.mxu0 0
  %331 = vmatpush1.bf16.msra.mxu0 0
  %332 = vmatprep.subr.bf16.mxu0 0
  %333 = vmatpush1.bf16.msra.mxu0 0
  %334 = vmatprep.subr.bf16.mxu0 0
  %335 = vmatpush1.bf16.msra.mxu0 0
  %336 = vmatprep.subr.bf16.mxu0 0
  %337 = vmatpush1.bf16.msra.mxu0 0
  %338 = vmatprep.subr.bf16.mxu0 0
  %339 = vmatpush1.bf16.msra.mxu0 0
  %340 = vmatprep.subr.bf16.mxu0 0
  %341 = vmatpush1.bf16.msra.mxu0 0
  %342 = vmatprep.subr.bf16.mxu0 0
  %343 = vmatpush1.bf16.msra.mxu0 0
  %344 = vmatprep.subr.bf16.mxu0 0
  %345 = vmatpush1.bf16.msra.mxu0 0
  %346 = vmatprep.subr.bf16.mxu0 0
  %347 = vmatpush1.bf16.msra.mxu0 0
  %348 = vmatprep.subr.bf16.mxu0 0
  %349 = vmatpush1.bf16.msra.mxu0 0
  %350 = vmatprep.subr.bf16.mxu0 0
  %351 = vmatpush1.bf16.msra.mxu0 0
  %352 = vmatprep.mubr.bf16.mxu0 0
  %353 = vmatmul.mubr.bf16.gmra.mrb[0].mxu0 %v244
  %v354 = vpop.f32.mrb[0].mxu0
  %v355 = vadd.f32 %v290, %v354
  %v356 = vpop.f32.mrb[0].mxu0
  %v357 = vpop.f32.mrb[0].mxu0
  %v358 = vadd.f32 %v293, %v357
  %v359 = vpop.f32.mrb[0].mxu0
  %360 = vmatprep.mubr.bf16.mxu0 0
  %361 = vmatmul.mubr.bf16.gmra.mrb[0].mxu0 %v247
  %v362 = vpop.f32.mrb[0].mxu0
  %v363 = vadd.f32 %v298, %v362
  %v364 = vpop.f32.mrb[0].mxu0
  %v365 = vpop.f32.mrb[0].mxu0
  %v366 = vadd.f32 %v301, %v365
  %v367 = vpop.f32.mrb[0].mxu0
  %368 = vmatprep.mubr.bf16.mxu0 0
  %369 = vmatmul.mubr.bf16.gmra.mrb[0].mxu0 %v250
  %v370 = vpop.f32.mrb[0].mxu0
  %v371 = vadd.f32 %v306, %v370
  %v372 = vpop.f32.mrb[0].mxu0
  %v373 = vpop.f32.mrb[0].mxu0
  %v374 = vadd.f32 %v309, %v373
  %v375 = vpop.f32.mrb[0].mxu0
  %376 = vmatprep.mubr.bf16.mxu0 0
  %377 = vmatmul.mubr.bf16.gmra.mrb[0].mxu0 %v253
  %v378 = vpop.f32.mrb[0].mxu0
  %v379 = vadd.f32 %v314, %v378
  %v380 = vpop.f32.mrb[0].mxu0
  %v381 = vpop.f32.mrb[0].mxu0
  %v382 = vadd.f32 %v317, %v381
  %v383 = vpop.f32.mrb[0].mxu0
  %384 = vdwg.mxu0
  %vm385 = vcmp.gt.f32.partialorder %v355, 0.0
  %vm386 = vcmp.gt.f32.partialorder %v358, 0.0
  %vm387 = vcmp.gt.f32.partialorder %v363, 0.0
  %vm388 = vcmp.gt.f32.partialorder %v366, 0.0
  %vm389 = vcmp.gt.f32.partialorder %v371, 0.0
  %vm390 = vcmp.gt.f32.partialorder %v374, 0.0
  %vm391 = vcmp.gt.f32.partialorder %v379, 0.0
  %vm392 = vcmp.gt.f32.partialorder %v382, 0.0
  %v393 = vmul.f32 %v355, 0.2
  %v394 = vmul.f32 %v358, 0.2
  %v395 = vmul.f32 %v363, 0.2
  %v396 = vmul.f32 %v366, 0.2
  %v397 = vmul.f32 %v371, 0.2
  %v398 = vmul.f32 %v374, 0.2
  %v399 = vmul.f32 %v379, 0.2
  %v400 = vmul.f32 %v382, 0.2
  %v401 = vsel %vm385, %v355, %v393
  %v402 = vsel %vm386, %v358, %v394
  %v403 = vsel %vm387, %v363, %v395
  %v404 = vsel %vm388, %v366, %v396
  %v405 = vsel %vm389, %v371, %v397
  %v406 = vsel %vm390, %v374, %v398
  %v407 = vsel %vm391, %v379, %v399
  %v408 = vsel %vm392, %v382, %v400
  %v409 = vpack.c.bf16 %v402, %v401
  %v410 = vpack.c.bf16 %v404, %v403
  %v411 = vpack.c.bf16 %v406, %v405
  %v412 = vpack.c.bf16 %v408, %v407
  %v417 = vunpack.c.l.b16 %v409
  %v418 = vunpack.c.h.b16 %v409
  %v419 = vunpack.c.l.b16 %v410
  %v420 = vunpack.c.h.b16 %v410
  %v421 = vunpack.c.l.b16 %v411
  %v422 = vunpack.c.h.b16 %v411
  %v423 = vunpack.c.l.b16 %v412
  %v424 = vunpack.c.h.b16 %v412
  %v425 = vpack.c.b16 %v417, %v417
  %v426 = vpack.c.b16 %v418, %v418
  %v427 = vpack.c.b16 %v419, %v419
  %v428 = vpack.c.b16 %v420, %v420
  %v429 = vpack.c.b16 %v421, %v421
  %v430 = vpack.c.b16 %v422, %v422
  %v431 = vpack.c.b16 %v423, %v423
  %v432 = vpack.c.b16 %v424, %v424
  %441 = vst [vmem:[%s3] sm:$0xf] %v425
  %442 = vst [vmem:[%s3 + $0x4] sm:$0xf] %v426
  %443 = vst [vmem:[%s3 + $0x8] sm:$0xf] %v427
  %444 = vst [vmem:[%s3 + $0xc] sm:$0xf] %v428
  %445 = vst [vmem:[%s3 + $0x10] sm:$0xf] %v429
  %446 = vst [vmem:[%s3 + $0x14] sm:$0xf] %v430
  %447 = vst [vmem:[%s3 + $0x18] sm:$0xf] %v431
  %448 = vst [vmem:[%s3 + $0x1c] sm:$0xf] %v432
  // Predicated region
  $region14: #{discriminator_forward.7} parent=0 // pred_check
    _
  $region15: #{discriminator_forward.7} parent=0 // pred_check_branch
    %450 = sbr.rel (0) target = $region17
  $region16: #{discriminator_forward.7} parent=0 // pred_region
    _
  $region17: #{discriminator_forward.7} parent=0 // pred_fallthru
    _
  // Predicated region
  $region18: #{discriminator_forward.7} parent=0 // pred_check
    _
  $region19: #{discriminator_forward.7} parent=0 // pred_check_branch
    %452 = sbr.rel (0) target = $region21
  $region20: #{discriminator_forward.7} parent=0 // pred_region
    _
  $region21: #{discriminator_forward.7} parent=0 // pred_fallthru
    _

// kernel: discriminator_forward.8
$region0: #{discriminator_forward.8}
  #allocation0 [shape = 'u32[]', space=smem, size = 0x4, offset = 0x4, fixed_abs, tag = 'smem constant byte address 0x4 - core index']
  #allocation1 [shape = 'u32[144,128]{1,0:T(1,128)}', space=vmem, size = 0x12000, scoped, tag = 'internal scratch']
  %s0 = inlined_call_operand.vmem [shape: bf16[16,576], index: 0, kind: input, shape index: {}]
  %s1 = inlined_call_operand.vmem [shape: bf16[576,128], index: 1, kind: input, shape index: {}]
  %s2 = inlined_call_operand.vmem [shape: f32[1,128], index: 2, kind: input, shape index: {}]
  %s3 = inlined_call_operand.vmem [shape: bf16[16,128], index: 3, kind: output, shape index: {}]
  %s4 = sld [smem:[#allocation0]]
  $region22: #{discriminator_forward.8} parent=0
    _
  %s6 = ssub.s32 1, %s4
  %s7 = scalar_select 0, %s6, %s4
  // Predicated region
  $region2: #{discriminator_forward.8} parent=0 // pred_check
    _
  $region3: #{discriminator_forward.8} parent=0 // pred_check_branch
    %9 = sbr.rel (0) target = $region5
  $region4: #{discriminator_forward.8} parent=0 // pred_region
    _
  $region5: #{discriminator_forward.8} parent=0 // pred_fallthru
    _
  // Predicated region
  $region6: #{discriminator_forward.8} parent=0 // pred_check
    _
  $region7: #{discriminator_forward.8} parent=0 // pred_check_branch
    %11 = sbr.rel (0) target = $region9
  $region8: #{discriminator_forward.8} parent=0 // pred_region
    _
  $region9: #{discriminator_forward.8} parent=0 // pred_fallthru
    _
  // Predicated region
  $region10: #{discriminator_forward.8} parent=0 // pred_check
    _
  $region11: #{discriminator_forward.8} parent=0 // pred_check_branch
    %13 = sbr.rel (0) target = $region13
  $region12: #{discriminator_forward.8} parent=0 // pred_region
    _
  $region13: #{discriminator_forward.8} parent=0 // pred_fallthru
    _
  %v15 = vld [vmem:[%s0] sm:$0xff]
  %v16 = vld [vmem:[%s0 + $0x8] sm:$0xff]
  %v17 = vld [vmem:[%s0 + $0x10] sm:$0xf]
  %v18 = vld [vmem:[%s0 + $0x14] sm:$0xff]
  %v19 = vld [vmem:[%s0 + $0x1c] sm:$0xff]
  %v20 = vld [vmem:[%s0 + $0x24] sm:$0xf]
  %v21 = vld [vmem:[%s1] sm:$0xf]
  %v22 = vld [vmem:[%s1 + $0x4] sm:$0xf]
  %v23 = vld [vmem:[%s1 + $0x8] sm:$0xf]
  %v24 = vld [vmem:[%s1 + $0xc] sm:$0xf]
  %v25 = vld [vmem:[%s1 + $0x10] sm:$0xf]
  %v26 = vld [vmem:[%s1 + $0x14] sm:$0xf]
  %v27 = vld [vmem:[%s1 + $0x18] sm:$0xf]
  %v28 = vld [vmem:[%s1 + $0x1c] sm:$0xf]
  %v29 = vld [vmem:[%s1 + $0x20] sm:$0xf]
  %v30 = vld [vmem:[%s1 + $0x24] sm:$0xf]
  %v31 = vld [vmem:[%s1 + $0x28] sm:$0xf]
  %v32 = vld [vmem:[%s1 + $0x2c] sm:$0xf]
  %v33 = vld [vmem:[%s1 + $0x30] sm:$0xf]
  %v34 = vld [vmem:[%s1 + $0x34] sm:$0xf]
  %v35 = vld [vmem:[%s1 + $0x38] sm:$0xf]
  %v36 = vld [vmem:[%s1 + $0x3c] sm:$0xf]
  %v37 = vld [vmem:[%s1 + $0x40] sm:$0xf]
  %v38 = vld [vmem:[%s1 + $0x44] sm:$0xf]
  %v39 = vld [vmem:[%s1 + $0x48] sm:$0xf]
  %v40 = vld [vmem:[%s1 + $0x4c] sm:$0xf]
  %v41 = vld [vmem:[%s1 + $0x50] sm:$0xf]
  %v42 = vld [vmem:[%s1 + $0x54] sm:$0xf]
  %v43 = vld [vmem:[%s1 + $0x58] sm:$0xf]
  %v44 = vld [vmem:[%s1 + $0x5c] sm:$0xf]
  %v45 = vld [vmem:[%s1 + $0x60] sm:$0xf]
  %v46 = vld [vmem:[%s1 + $0x64] sm:$0xf]
  %v47 = vld [vmem:[%s1 + $0x68] sm:$0xf]
  %v48 = vld [vmem:[%s1 + $0x6c] sm:$0xf]
  %v49 = vld [vmem:[%s1 + $0x70] sm:$0xf]
  %v50 = vld [vmem:[%s1 + $0x74] sm:$0xf]
  %v51 = vld [vmem:[%s1 + $0x78] sm:$0xf]
  %v52 = vld [vmem:[%s1 + $0x7c] sm:$0xf]
  %v53 = vld [vmem:[%s1 + $0x80] sm:$0xf]
  %v54 = vld [vmem:[%s1 + $0x84] sm:$0xf]
  %v55 = vld [vmem:[%s1 + $0x88] sm:$0xf]
  %v56 = vld [vmem:[%s1 + $0x8c] sm:$0xf]
  %v57 = vld [vmem:[%s1 + $0x90] sm:$0xf]
  %v58 = vld [vmem:[%s1 + $0x94] sm:$0xf]
  %v59 = vld [vmem:[%s1 + $0x98] sm:$0xf]
  %v60 = vld [vmem:[%s1 + $0x9c] sm:$0xf]
  %v61 = vld [vmem:[%s1 + $0xa0] sm:$0xf]
  %v62 = vld [vmem:[%s1 + $0xa4] sm:$0xf]
  %v63 = vld [vmem:[%s1 + $0xa8] sm:$0xf]
  %v64 = vld [vmem:[%s1 + $0xac] sm:$0xf]
  %v65 = vld [vmem:[%s1 + $0xb0] sm:$0xf]
  %v66 = vld [vmem:[%s1 + $0xb4] sm:$0xf]
  %v67 = vld [vmem:[%s1 + $0xb8] sm:$0xf]
  %v68 = vld [vmem:[%s1 + $0xbc] sm:$0xf]
  %v69 = vld [vmem:[%s1 + $0xc0] sm:$0xf]
  %v70 = vld [vmem:[%s1 + $0xc4] sm:$0xf]
  %v71 = vld [vmem:[%s1 + $0xc8] sm:$0xf]
  %v72 = vld [vmem:[%s1 + $0xcc] sm:$0xf]
  %v73 = vld [vmem:[%s1 + $0xd0] sm:$0xf]
  %v74 = vld [vmem:[%s1 + $0xd4] sm:$0xf]
  %v75 = vld [vmem:[%s1 + $0xd8] sm:$0xf]
  %v76 = vld [vmem:[%s1 + $0xdc] sm:$0xf]
  %v77 = vld [vmem:[%s1 + $0xe0] sm:$0xf]
  %v78 = vld [vmem:[%s1 + $0xe4] sm:$0xf]
  %v79 = vld [vmem:[%s1 + $0xe8] sm:$0xf]
  %v80 = vld [vmem:[%s1 + $0xec] sm:$0xf]
  %v81 = vld [vmem:[%s1 + $0xf0] sm:$0xf]
  %v82 = vld [vmem:[%s1 + $0xf4] sm:$0xf]
  %v83 = vld [vmem:[%s1 + $0xf8] sm:$0xf]
  %v84 = vld [vmem:[%s1 + $0xfc] sm:$0xf]
  %v85 = vld [vmem:[%s1 + $0x100] sm:$0xf]
  %v86 = vld [vmem:[%s1 + $0x104] sm:$0xf]
  %v87 = vld [vmem:[%s1 + $0x108] sm:$0xf]
  %v88 = vld [vmem:[%s1 + $0x10c] sm:$0xf]
  %v89 = vld [vmem:[%s1 + $0x110] sm:$0xf]
  %v90 = vld [vmem:[%s1 + $0x114] sm:$0xf]
  %v91 = vld [vmem:[%s1 + $0x118] sm:$0xf]
  %v92 = vld [vmem:[%s1 + $0x11c] sm:$0xf]
  %v93 = vld [vmem:[%s2] sm:$0x1]
  %v95 = vlaneseq
  %v96 = vshrl.u32 %v95, 7
  %v97 = vsub.s32 0, %v96
  %v98 = vrot.slane %v93, %v97
  %v106 = vunpack.c.l.b16 %v15
  %v107 = vunpack.c.h.b16 %v15
  %v108 = vunpack.c.l.b16 %v16
  %v109 = vunpack.c.h.b16 %v16
  %v110 = vunpack.c.l.b16 %v17
  %v111 = vunpack.c.l.b16 %v18
  %v112 = vunpack.c.h.b16 %v18
  %v113 = vunpack.c.l.b16 %v19
  %v114 = vunpack.c.h.b16 %v19
  %v115 = vunpack.c.l.b16 %v20
  %v116 = vpack.c.b16 %v111, %v106
  %v117 = vpack.c.b16 %v112, %v107
  %v118 = vpack.c.b16 %v113, %v108
  %v119 = vpack.c.b16 %v114, %v109
  %v120 = vpack.c.b16 %v115, %v110
  %v197 = vunpack.c.l.b16 %v21
  %v198 = vunpack.c.l.b16 %v22
  %v199 = vunpack.c.l.b16 %v23
  %v200 = vunpack.c.l.b16 %v24
  %v201 = vunpack.c.l.b16 %v25
  %v202 = vunpack.c.l.b16 %v26
  %v203 = vunpack.c.l.b16 %v27
  %v204 = vunpack.c.l.b16 %v28
  %v205 = vunpack.c.l.b16 %v29
  %v206 = vunpack.c.l.b16 %v30
  %v207 = vunpack.c.l.b16 %v31
  %v208 = vunpack.c.l.b16 %v32
  %v209 = vunpack.c.l.b16 %v33
  %v210 = vunpack.c.l.b16 %v34
  %v211 = vunpack.c.l.b16 %v35
  %v212 = vunpack.c.l.b16 %v36
  %v213 = vunpack.c.l.b16 %v37
  %v214 = vunpack.c.l.b16 %v38
  %v215 = vunpack.c.l.b16 %v39
  %v216 = vunpack.c.l.b16 %v40
  %v217 = vunpack.c.l.b16 %v41
  %v218 = vunpack.c.l.b16 %v42
  %v219 = vunpack.c.l.b16 %v43
  %v220 = vunpack.c.l.b16 %v44
  %v221 = vunpack.c.l.b16 %v45
  %v222 = vunpack.c.l.b16 %v46
  %v223 = vunpack.c.l.b16 %v47
  %v224 = vunpack.c.l.b16 %v48
  %v225 = vunpack.c.l.b16 %v49
  %v226 = vunpack.c.l.b16 %v50
  %v227 = vunpack.c.l.b16 %v51
  %v228 = vunpack.c.l.b16 %v52
  %v229 = vunpack.c.l.b16 %v53
  %v230 = vunpack.c.l.b16 %v54
  %v231 = vunpack.c.l.b16 %v55
  %v232 = vunpack.c.l.b16 %v56
  %v233 = vunpack.c.l.b16 %v57
  %v234 = vunpack.c.l.b16 %v58
  %v235 = vunpack.c.l.b16 %v59
  %v236 = vunpack.c.l.b16 %v60
  %v237 = vunpack.c.l.b16 %v61
  %v238 = vunpack.c.l.b16 %v62
  %v239 = vunpack.c.l.b16 %v63
  %v240 = vunpack.c.l.b16 %v64
  %v241 = vunpack.c.l.b16 %v65
  %v242 = vunpack.c.l.b16 %v66
  %v243 = vunpack.c.l.b16 %v67
  %v244 = vunpack.c.l.b16 %v68
  %v245 = vunpack.c.l.b16 %v69
  %v246 = vunpack.c.l.b16 %v70
  %v247 = vunpack.c.l.b16 %v71
  %v248 = vunpack.c.l.b16 %v72
  %v249 = vunpack.c.l.b16 %v73
  %v250 = vunpack.c.l.b16 %v74
  %v251 = vunpack.c.l.b16 %v75
  %v252 = vunpack.c.l.b16 %v76
  %v253 = vunpack.c.l.b16 %v77
  %v254 = vunpack.c.l.b16 %v78
  %v255 = vunpack.c.l.b16 %v79
  %v256 = vunpack.c.l.b16 %v80
  %v257 = vunpack.c.l.b16 %v81
  %v258 = vunpack.c.l.b16 %v82
  %v259 = vunpack.c.l.b16 %v83
  %v260 = vunpack.c.l.b16 %v84
  %v261 = vunpack.c.l.b16 %v85
  %v262 = vunpack.c.l.b16 %v86
  %v263 = vunpack.c.l.b16 %v87
  %v264 = vunpack.c.l.b16 %v88
  %v265 = vunpack.c.l.b16 %v89
  %v266 = vunpack.c.l.b16 %v90
  %v267 = vunpack.c.l.b16 %v91
  %v268 = vunpack.c.l.b16 %v92
  %v269 = vpack.c.b16 %v198, %v197
  %v270 = vpack.c.b16 %v200, %v199
  %v271 = vpack.c.b16 %v202, %v201
  %v272 = vpack.c.b16 %v204, %v203
  %v273 = vpack.c.b16 %v206, %v205
  %v274 = vpack.c.b16 %v208, %v207
  %v275 = vpack.c.b16 %v210, %v209
  %v276 = vpack.c.b16 %v212, %v211
  %v277 = vpack.c.b16 %v214, %v213
  %v278 = vpack.c.b16 %v216, %v215
  %v279 = vpack.c.b16 %v218, %v217
  %v280 = vpack.c.b16 %v220, %v219
  %v281 = vpack.c.b16 %v222, %v221
  %v282 = vpack.c.b16 %v224, %v223
  %v283 = vpack.c.b16 %v226, %v225
  %v284 = vpack.c.b16 %v228, %v227
  %v285 = vpack.c.b16 %v230, %v229
  %v286 = vpack.c.b16 %v232, %v231
  %v287 = vpack.c.b16 %v234, %v233
  %v288 = vpack.c.b16 %v236, %v235
  %v289 = vpack.c.b16 %v238, %v237
  %v290 = vpack.c.b16 %v240, %v239
  %v291 = vpack.c.b16 %v242, %v241
  %v292 = vpack.c.b16 %v244, %v243
  %v293 = vpack.c.b16 %v246, %v245
  %v294 = vpack.c.b16 %v248, %v247
  %v295 = vpack.c.b16 %v250, %v249
  %v296 = vpack.c.b16 %v252, %v251
  %v297 = vpack.c.b16 %v254, %v253
  %v298 = vpack.c.b16 %v256, %v255
  %v299 = vpack.c.b16 %v258, %v257
  %v300 = vpack.c.b16 %v260, %v259
  %v301 = vpack.c.b16 %v262, %v261
  %v302 = vpack.c.b16 %v264, %v263
  %v303 = vpack.c.b16 %v266, %v265
  %v304 = vpack.c.b16 %v268, %v267
  %vm341 = vcmask 523264
  %v343 = vsel %vm341, %v120, 0
  %345 = vmatprep.subr.bf16.mxu0 0
  %346 = vmatpush1.bf16.msra.mxu0 %v269
  %347 = vmatprep.subr.bf16.mxu0 0
  %348 = vmatpush1.bf16.msra.mxu0 %v270
  %349 = vmatprep.subr.bf16.mxu0 0
  %350 = vmatpush1.bf16.msra.mxu0 %v271
  %351 = vmatprep.subr.bf16.mxu0 0
  %352 = vmatpush1.bf16.msra.mxu0 %v272
  %353 = vmatprep.subr.bf16.mxu0 0
  %354 = vmatpush1.bf16.msra.mxu0 %v273
  %355 = vmatprep.subr.bf16.mxu0 0
  %356 = vmatpush1.bf16.msra.mxu0 %v274
  %357 = vmatprep.subr.bf16.mxu0 0
  %358 = vmatpush1.bf16.msra.mxu0 %v275
  %359 = vmatprep.subr.bf16.mxu0 0
  %360 = vmatpush1.bf16.msra.mxu0 %v276
  %361 = vmatprep.subr.bf16.mxu0 0
  %362 = vmatpush1.bf16.msra.mxu0 %v277
  %363 = vmatprep.subr.bf16.mxu0 0
  %364 = vmatpush1.bf16.msra.mxu0 %v278
  %365 = vmatprep.subr.bf16.mxu0 0
  %366 = vmatpush1.bf16.msra.mxu0 %v279
  %367 = vmatprep.subr.bf16.mxu0 0
  %368 = vmatpush1.bf16.msra.mxu0 %v280
  %369 = vmatprep.subr.bf16.mxu0 0
  %370 = vmatpush1.bf16.msra.mxu0 %v281
  %371 = vmatprep.subr.bf16.mxu0 0
  %372 = vmatpush1.bf16.msra.mxu0 %v282
  %373 = vmatprep.subr.bf16.mxu0 0
  %374 = vmatpush1.bf16.msra.mxu0 %v283
  %375 = vmatprep.subr.bf16.mxu0 0
  %376 = vmatpush1.bf16.msra.mxu0 %v284
  %377 = vmatprep.mubr.bf16.mxu0 %v117
  %378 = vmatmul.mubr.bf16.gmra.mrb[0].mxu0 %v116
  %v379 = vpop.f32.mrb[0].mxu0
  %v380 = vadd.f32 %v98, %v379
  %v381 = vpop.f32.mrb[0].mxu0
  %v382 = vpop.f32.mrb[0].mxu0
  %v383 = vadd.f32 %v98, %v382
  %v384 = vpop.f32.mrb[0].mxu0
  %385 = vdwg.mxu0
  %386 = vmatprep.subr.bf16.mxu0 0
  %387 = vmatpush1.bf16.msra.mxu0 %v285
  %388 = vmatprep.subr.bf16.mxu0 0
  %389 = vmatpush1.bf16.msra.mxu0 %v286
  %390 = vmatprep.subr.bf16.mxu0 0
  %391 = vmatpush1.bf16.msra.mxu0 %v287
  %392 = vmatprep.subr.bf16.mxu0 0
  %393 = vmatpush1.bf16.msra.mxu0 %v288
  %394 = vmatprep.subr.bf16.mxu0 0
  %395 = vmatpush1.bf16.msra.mxu0 %v289
  %396 = vmatprep.subr.bf16.mxu0 0
  %397 = vmatpush1.bf16.msra.mxu0 %v290
  %398 = vmatprep.subr.bf16.mxu0 0
  %399 = vmatpush1.bf16.msra.mxu0 %v291
  %400 = vmatprep.subr.bf16.mxu0 0
  %401 = vmatpush1.bf16.msra.mxu0 %v292
  %402 = vmatprep.subr.bf16.mxu0 0
  %403 = vmatpush1.bf16.msra.mxu0 %v293
  %404 = vmatprep.subr.bf16.mxu0 0
  %405 = vmatpush1.bf16.msra.mxu0 %v294
  %406 = vmatprep.subr.bf16.mxu0 0
  %407 = vmatpush1.bf16.msra.mxu0 %v295
  %408 = vmatprep.subr.bf16.mxu0 0
  %409 = vmatpush1.bf16.msra.mxu0 %v296
  %410 = vmatprep.subr.bf16.mxu0 0
  %411 = vmatpush1.bf16.msra.mxu0 %v297
  %412 = vmatprep.subr.bf16.mxu0 0
  %413 = vmatpush1.bf16.msra.mxu0 %v298
  %414 = vmatprep.subr.bf16.mxu0 0
  %415 = vmatpush1.bf16.msra.mxu0 %v299
  %416 = vmatprep.subr.bf16.mxu0 0
  %417 = vmatpush1.bf16.msra.mxu0 %v300
  %418 = vmatprep.mubr.bf16.mxu0 %v119
  %419 = vmatmul.mubr.bf16.gmra.mrb[0].mxu0 %v118
  %v420 = vpop.f32.mrb[0].mxu0
  %v421 = vadd.f32 %v380, %v420
  %v422 = vpop.f32.mrb[0].mxu0
  %v423 = vpop.f32.mrb[0].mxu0
  %v424 = vadd.f32 %v383, %v423
  %v425 = vpop.f32.mrb[0].mxu0
  %426 = vdwg.mxu0
  %427 = vmatprep.subr.bf16.mxu0 0
  %428 = vmatpush1.bf16.msra.mxu0 %v301
  %429 = vmatprep.subr.bf16.mxu0 0
  %430 = vmatpush1.bf16.msra.mxu0 %v302
  %431 = vmatprep.subr.bf16.mxu0 0
  %432 = vmatpush1.bf16.msra.mxu0 %v303
  %433 = vmatprep.subr.bf16.mxu0 0
  %434 = vmatpush1.bf16.msra.mxu0 %v304
  %435 = vmatprep.subr.bf16.mxu0 0
  %436 = vmatpush1.bf16.msra.mxu0 0
  %437 = vmatprep.subr.bf16.mxu0 0
  %438 = vmatpush1.bf16.msra.mxu0 0
  %439 = vmatprep.subr.bf16.mxu0 0
  %440 = vmatpush1.bf16.msra.mxu0 0
  %441 = vmatprep.subr.bf16.mxu0 0
  %442 = vmatpush1.bf16.msra.mxu0 0
  %443 = vmatprep.subr.bf16.mxu0 0
  %444 = vmatpush1.bf16.msra.mxu0 0
  %445 = vmatprep.subr.bf16.mxu0 0
  %446 = vmatpush1.bf16.msra.mxu0 0
  %447 = vmatprep.subr.bf16.mxu0 0
  %448 = vmatpush1.bf16.msra.mxu0 0
  %449 = vmatprep.subr.bf16.mxu0 0
  %450 = vmatpush1.bf16.msra.mxu0 0
  %451 = vmatprep.subr.bf16.mxu0 0
  %452 = vmatpush1.bf16.msra.mxu0 0
  %453 = vmatprep.subr.bf16.mxu0 0
  %454 = vmatpush1.bf16.msra.mxu0 0
  %455 = vmatprep.subr.bf16.mxu0 0
  %456 = vmatpush1.bf16.msra.mxu0 0
  %457 = vmatprep.subr.bf16.mxu0 0
  %458 = vmatpush1.bf16.msra.mxu0 0
  %459 = vmatprep.mubr.bf16.mxu0 0
  %460 = vmatmul.mubr.bf16.gmra.mrb[0].mxu0 %v343
  %v461 = vpop.f32.mrb[0].mxu0
  %v462 = vadd.f32 %v421, %v461
  %v463 = vpop.f32.mrb[0].mxu0
  %v464 = vpop.f32.mrb[0].mxu0
  %v465 = vadd.f32 %v424, %v464
  %v466 = vpop.f32.mrb[0].mxu0
  %467 = vdwg.mxu0
  %vm468 = vcmp.gt.f32.partialorder %v462, 0.0
  %vm469 = vcmp.gt.f32.partialorder %v465, 0.0
  %v470 = vmul.f32 %v462, 0.2
  %v471 = vmul.f32 %v465, 0.2
  %v472 = vsel %vm468, %v462, %v470
  %v473 = vsel %vm469, %v465, %v471
  %v474 = vpack.c.bf16 %v473, %v472
  %v476 = vunpack.c.l.b16 %v474
  %v477 = vunpack.c.h.b16 %v474
  %v478 = vpack.c.b16 %v476, %v476
  %v479 = vpack.c.b16 %v477, %v477
  %482 = vst [vmem:[%s3] sm:$0xf] %v478
  %483 = vst [vmem:[%s3 + $0x4] sm:$0xf] %v479
  // Predicated region
  $region14: #{discriminator_forward.8} parent=0 // pred_check
    _
  $region15: #{discriminator_forward.8} parent=0 // pred_check_branch
    %485 = sbr.rel (0) target = $region17
  $region16: #{discriminator_forward.8} parent=0 // pred_region
    _
  $region17: #{discriminator_forward.8} parent=0 // pred_fallthru
    _
  // Predicated region
  $region18: #{discriminator_forward.8} parent=0 // pred_check
    _
  $region19: #{discriminator_forward.8} parent=0 // pred_check_branch
    %487 = sbr.rel (0) target = $region21
  $region20: #{discriminator_forward.8} parent=0 // pred_region
    _
  $region21: #{discriminator_forward.8} parent=0 // pred_fallthru
    _

// kernel: discriminator_forward.9
$region0: #{discriminator_forward.9}
  #allocation0 [shape = 'u32[]', space=smem, size = 0x4, offset = 0x4, fixed_abs, tag = 'smem constant byte address 0x4 - core index']
  #allocation1 [shape = 'u32[144,128]{1,0:T(1,128)}', space=vmem, size = 0x12000, scoped, tag = 'internal scratch']
  %s0 = inlined_call_operand.vmem [shape: bf16[4,512], index: 0, kind: input, shape index: {}]
  %s1 = inlined_call_operand.vmem [shape: bf16[512,128], index: 1, kind: input, shape index: {}]
  %s2 = inlined_call_operand.vmem [shape: f32[1,128], index: 2, kind: input, shape index: {}]
  %s3 = inlined_call_operand.vmem [shape: f32[4,128], index: 3, kind: output, shape index: {}]
  %s4 = sld [smem:[#allocation0]]
  $region22: #{discriminator_forward.9} parent=0
    _
  %s6 = ssub.s32 1, %s4
  %s7 = scalar_select 0, %s6, %s4
  // Predicated region
  $region2: #{discriminator_forward.9} parent=0 // pred_check
    _
  $region3: #{discriminator_forward.9} parent=0 // pred_check_branch
    %9 = sbr.rel (0) target = $region5
  $region4: #{discriminator_forward.9} parent=0 // pred_region
    _
  $region5: #{discriminator_forward.9} parent=0 // pred_fallthru
    _
  // Predicated region
  $region6: #{discriminator_forward.9} parent=0 // pred_check
    _
  $region7: #{discriminator_forward.9} parent=0 // pred_check_branch
    %11 = sbr.rel (0) target = $region9
  $region8: #{discriminator_forward.9} parent=0 // pred_region
    _
  $region9: #{discriminator_forward.9} parent=0 // pred_fallthru
    _
  // Predicated region
  $region10: #{discriminator_forward.9} parent=0 // pred_check
    _
  $region11: #{discriminator_forward.9} parent=0 // pred_check_branch
    %13 = sbr.rel (0) target = $region13
  $region12: #{discriminator_forward.9} parent=0 // pred_region
    _
  $region13: #{discriminator_forward.9} parent=0 // pred_fallthru
    _
  %v15 = vld [vmem:[%s0] sm:$0xff]
  %v16 = vld [vmem:[%s1] sm:$0xf]
  %v17 = vld [vmem:[%s1 + $0x4] sm:$0xf]
  %v18 = vld [vmem:[%s1 + $0x8] sm:$0xf]
  %v19 = vld [vmem:[%s1 + $0xc] sm:$0xf]
  %v20 = vld [vmem:[%s1 + $0x10] sm:$0xf]
  %v21 = vld [vmem:[%s1 + $0x14] sm:$0xf]
  %v22 = vld [vmem:[%s1 + $0x18] sm:$0xf]
  %v23 = vld [vmem:[%s1 + $0x1c] sm:$0xf]
  %v24 = vld [vmem:[%s1 + $0x20] sm:$0xf]
  %v25 = vld [vmem:[%s1 + $0x24] sm:$0xf]
  %v26 = vld [vmem:[%s1 + $0x28] sm:$0xf]
  %v27 = vld [vmem:[%s1 + $0x2c] sm:$0xf]
  %v28 = vld [vmem:[%s1 + $0x30] sm:$0xf]
  %v29 = vld [vmem:[%s1 + $0x34] sm:$0xf]
  %v30 = vld [vmem:[%s1 + $0x38] sm:$0xf]
  %v31 = vld [vmem:[%s1 + $0x3c] sm:$0xf]
  %v32 = vld [vmem:[%s1 + $0x40] sm:$0xf]
  %v33 = vld [vmem:[%s1 + $0x44] sm:$0xf]
  %v34 = vld [vmem:[%s1 + $0x48] sm:$0xf]
  %v35 = vld [vmem:[%s1 + $0x4c] sm:$0xf]
  %v36 = vld [vmem:[%s1 + $0x50] sm:$0xf]
  %v37 = vld [vmem:[%s1 + $0x54] sm:$0xf]
  %v38 = vld [vmem:[%s1 + $0x58] sm:$0xf]
  %v39 = vld [vmem:[%s1 + $0x5c] sm:$0xf]
  %v40 = vld [vmem:[%s1 + $0x60] sm:$0xf]
  %v41 = vld [vmem:[%s1 + $0x64] sm:$0xf]
  %v42 = vld [vmem:[%s1 + $0x68] sm:$0xf]
  %v43 = vld [vmem:[%s1 + $0x6c] sm:$0xf]
  %v44 = vld [vmem:[%s1 + $0x70] sm:$0xf]
  %v45 = vld [vmem:[%s1 + $0x74] sm:$0xf]
  %v46 = vld [vmem:[%s1 + $0x78] sm:$0xf]
  %v47 = vld [vmem:[%s1 + $0x7c] sm:$0xf]
  %v48 = vld [vmem:[%s1 + $0x80] sm:$0xf]
  %v49 = vld [vmem:[%s1 + $0x84] sm:$0xf]
  %v50 = vld [vmem:[%s1 + $0x88] sm:$0xf]
  %v51 = vld [vmem:[%s1 + $0x8c] sm:$0xf]
  %v52 = vld [vmem:[%s1 + $0x90] sm:$0xf]
  %v53 = vld [vmem:[%s1 + $0x94] sm:$0xf]
  %v54 = vld [vmem:[%s1 + $0x98] sm:$0xf]
  %v55 = vld [vmem:[%s1 + $0x9c] sm:$0xf]
  %v56 = vld [vmem:[%s1 + $0xa0] sm:$0xf]
  %v57 = vld [vmem:[%s1 + $0xa4] sm:$0xf]
  %v58 = vld [vmem:[%s1 + $0xa8] sm:$0xf]
  %v59 = vld [vmem:[%s1 + $0xac] sm:$0xf]
  %v60 = vld [vmem:[%s1 + $0xb0] sm:$0xf]
  %v61 = vld [vmem:[%s1 + $0xb4] sm:$0xf]
  %v62 = vld [vmem:[%s1 + $0xb8] sm:$0xf]
  %v63 = vld [vmem:[%s1 + $0xbc] sm:$0xf]
  %v64 = vld [vmem:[%s1 + $0xc0] sm:$0xf]
  %v65 = vld [vmem:[%s1 + $0xc4] sm:$0xf]
  %v66 = vld [vmem:[%s1 + $0xc8] sm:$0xf]
  %v67 = vld [vmem:[%s1 + $0xcc] sm:$0xf]
  %v68 = vld [vmem:[%s1 + $0xd0] sm:$0xf]
  %v69 = vld [vmem:[%s1 + $0xd4] sm:$0xf]
  %v70 = vld [vmem:[%s1 + $0xd8] sm:$0xf]
  %v71 = vld [vmem:[%s1 + $0xdc] sm:$0xf]
  %v72 = vld [vmem:[%s1 + $0xe0] sm:$0xf]
  %v73 = vld [vmem:[%s1 + $0xe4] sm:$0xf]
  %v74 = vld [vmem:[%s1 + $0xe8] sm:$0xf]
  %v75 = vld [vmem:[%s1 + $0xec] sm:$0xf]
  %v76 = vld [vmem:[%s1 + $0xf0] sm:$0xf]
  %v77 = vld [vmem:[%s1 + $0xf4] sm:$0xf]
  %v78 = vld [vmem:[%s1 + $0xf8] sm:$0xf]
  %v79 = vld [vmem:[%s1 + $0xfc] sm:$0xf]
  %v80 = vld [vmem:[%s2] sm:$0x1]
  %v82 = vlaneseq
  %v83 = vshrl.u32 %v82, 7
  %v84 = vsub.s32 0, %v83
  %v85 = vrot.slane %v80, %v84
  %v88 = vcombine.high %v15, %v15
  %v90 = vunpack.c.l.s4 1983009808
  %v91 = vunpack.c.0.s8 %v90
  %v92 = vlaneseq
  %v93 = vshrl.u32 %v92, 7
  %v94 = vsub.s32 %v91, %v93
  %v95 = vrot.slane %v15, %v94
  %v97 = vunpack.c.l.s4 1983009808
  %v98 = vunpack.c.0.s8 %v97
  %v99 = vlaneseq
  %v100 = vshrl.u32 %v99, 7
  %v101 = vsub.s32 %v98, %v100
  %v102 = vrot.slane %v88, %v101
  %v103 = vcombine.high %v95, %v95
  %v104 = vcombine.high %v102, %v102
  %v173 = vunpack.c.l.b16 %v16
  %v174 = vunpack.c.l.b16 %v17
  %v175 = vunpack.c.l.b16 %v18
  %v176 = vunpack.c.l.b16 %v19
  %v177 = vunpack.c.l.b16 %v20
  %v178 = vunpack.c.l.b16 %v21
  %v179 = vunpack.c.l.b16 %v22
  %v180 = vunpack.c.l.b16 %v23
  %v181 = vunpack.c.l.b16 %v24
  %v182 = vunpack.c.l.b16 %v25
  %v183 = vunpack.c.l.b16 %v26
  %v184 = vunpack.c.l.b16 %v27
  %v185 = vunpack.c.l.b16 %v28
  %v186 = vunpack.c.l.b16 %v29
  %v187 = vunpack.c.l.b16 %v30
  %v188 = vunpack.c.l.b16 %v31
  %v189 = vunpack.c.l.b16 %v32
  %v190 = vunpack.c.l.b16 %v33
  %v191 = vunpack.c.l.b16 %v34
  %v192 = vunpack.c.l.b16 %v35
  %v193 = vunpack.c.l.b16 %v36
  %v194 = vunpack.c.l.b16 %v37
  %v195 = vunpack.c.l.b16 %v38
  %v196 = vunpack.c.l.b16 %v39
  %v197 = vunpack.c.l.b16 %v40
  %v198 = vunpack.c.l.b16 %v41
  %v199 = vunpack.c.l.b16 %v42
  %v200 = vunpack.c.l.b16 %v43
  %v201 = vunpack.c.l.b16 %v44
  %v202 = vunpack.c.l.b16 %v45
  %v203 = vunpack.c.l.b16 %v46
  %v204 = vunpack.c.l.b16 %v47
  %v205 = vunpack.c.l.b16 %v48
  %v206 = vunpack.c.l.b16 %v49
  %v207 = vunpack.c.l.b16 %v50
  %v208 = vunpack.c.l.b16 %v51
  %v209 = vunpack.c.l.b16 %v52
  %v210 = vunpack.c.l.b16 %v53
  %v211 = vunpack.c.l.b16 %v54
  %v212 = vunpack.c.l.b16 %v55
  %v213 = vunpack.c.l.b16 %v56
  %v214 = vunpack.c.l.b16 %v57
  %v215 = vunpack.c.l.b16 %v58
  %v216 = vunpack.c.l.b16 %v59
  %v217 = vunpack.c.l.b16 %v60
  %v218 = vunpack.c.l.b16 %v61
  %v219 = vunpack.c.l.b16 %v62
  %v220 = vunpack.c.l.b16 %v63
  %v221 = vunpack.c.l.b16 %v64
  %v222 = vunpack.c.l.b16 %v65
  %v223 = vunpack.c.l.b16 %v66
  %v224 = vunpack.c.l.b16 %v67
  %v225 = vunpack.c.l.b16 %v68
  %v226 = vunpack.c.l.b16 %v69
  %v227 = vunpack.c.l.b16 %v70
  %v228 = vunpack.c.l.b16 %v71
  %v229 = vunpack.c.l.b16 %v72
  %v230 = vunpack.c.l.b16 %v73
  %v231 = vunpack.c.l.b16 %v74
  %v232 = vunpack.c.l.b16 %v75
  %v233 = vunpack.c.l.b16 %v76
  %v234 = vunpack.c.l.b16 %v77
  %v235 = vunpack.c.l.b16 %v78
  %v236 = vunpack.c.l.b16 %v79
  %v237 = vpack.c.b16 %v174, %v173
  %v238 = vpack.c.b16 %v176, %v175
  %v239 = vpack.c.b16 %v178, %v177
  %v240 = vpack.c.b16 %v180, %v179
  %v241 = vpack.c.b16 %v182, %v181
  %v242 = vpack.c.b16 %v184, %v183
  %v243 = vpack.c.b16 %v186, %v185
  %v244 = vpack.c.b16 %v188, %v187
  %v245 = vpack.c.b16 %v190, %v189
  %v246 = vpack.c.b16 %v192, %v191
  %v247 = vpack.c.b16 %v194, %v193
  %v248 = vpack.c.b16 %v196, %v195
  %v249 = vpack.c.b16 %v198, %v197
  %v250 = vpack.c.b16 %v200, %v199
  %v251 = vpack.c.b16 %v202, %v201
  %v252 = vpack.c.b16 %v204, %v203
  %v253 = vpack.c.b16 %v206, %v205
  %v254 = vpack.c.b16 %v208, %v207
  %v255 = vpack.c.b16 %v210, %v209
  %v256 = vpack.c.b16 %v212, %v211
  %v257 = vpack.c.b16 %v214, %v213
  %v258 = vpack.c.b16 %v216, %v215
  %v259 = vpack.c.b16 %v218, %v217
  %v260 = vpack.c.b16 %v220, %v219
  %v261 = vpack.c.b16 %v222, %v221
  %v262 = vpack.c.b16 %v224, %v223
  %v263 = vpack.c.b16 %v226, %v225
  %v264 = vpack.c.b16 %v228, %v227
  %v265 = vpack.c.b16 %v230, %v229
  %v266 = vpack.c.b16 %v232, %v231
  %v267 = vpack.c.b16 %v234, %v233
  %v268 = vpack.c.b16 %v236, %v235
  %301 = vmatprep.subr.bf16.mxu0 0
  %302 = vmatpush1.bf16.msra.mxu0 %v237
  %303 = vmatprep.subr.bf16.mxu0 0
  %304 = vmatpush1.bf16.msra.mxu0 %v238
  %305 = vmatprep.subr.bf16.mxu0 0
  %306 = vmatpush1.bf16.msra.mxu0 %v239
  %307 = vmatprep.subr.bf16.mxu0 0
  %308 = vmatpush1.bf16.msra.mxu0 %v240
  %309 = vmatprep.subr.bf16.mxu0 0
  %310 = vmatpush1.bf16.msra.mxu0 %v241
  %311 = vmatprep.subr.bf16.mxu0 0
  %312 = vmatpush1.bf16.msra.mxu0 %v242
  %313 = vmatprep.subr.bf16.mxu0 0
  %314 = vmatpush1.bf16.msra.mxu0 %v243
  %315 = vmatprep.subr.bf16.mxu0 0
  %316 = vmatpush1.bf16.msra.mxu0 %v244
  %317 = vmatprep.subr.bf16.mxu0 0
  %318 = vmatpush1.bf16.msra.mxu0 %v245
  %319 = vmatprep.subr.bf16.mxu0 0
  %320 = vmatpush1.bf16.msra.mxu0 %v246
  %321 = vmatprep.subr.bf16.mxu0 0
  %322 = vmatpush1.bf16.msra.mxu0 %v247
  %323 = vmatprep.subr.bf16.mxu0 0
  %324 = vmatpush1.bf16.msra.mxu0 %v248
  %325 = vmatprep.subr.bf16.mxu0 0
  %326 = vmatpush1.bf16.msra.mxu0 %v249
  %327 = vmatprep.subr.bf16.mxu0 0
  %328 = vmatpush1.bf16.msra.mxu0 %v250
  %329 = vmatprep.subr.bf16.mxu0 0
  %330 = vmatpush1.bf16.msra.mxu0 %v251
  %331 = vmatprep.subr.bf16.mxu0 0
  %332 = vmatpush1.bf16.msra.mxu0 %v252
  %333 = vmatprep.mubr.bf16.mxu0 %v103
  %334 = vmatmul.mubr.bf16.gmra.mrb[0].mxu0 %v95
  %v335 = vpop.f32.mrb[0].mxu0
  %v336 = vadd.f32 %v85, %v335
  %v337 = vpop.f32.mrb[0].mxu0
  %v338 = vpop.f32.mrb[0].mxu0
  %v339 = vpop.f32.mrb[0].mxu0
  %340 = vdwg.mxu0
  %341 = vmatprep.subr.bf16.mxu0 0
  %342 = vmatpush1.bf16.msra.mxu0 %v253
  %343 = vmatprep.subr.bf16.mxu0 0
  %344 = vmatpush1.bf16.msra.mxu0 %v254
  %345 = vmatprep.subr.bf16.mxu0 0
  %346 = vmatpush1.bf16.msra.mxu0 %v255
  %347 = vmatprep.subr.bf16.mxu0 0
  %348 = vmatpush1.bf16.msra.mxu0 %v256
  %349 = vmatprep.subr.bf16.mxu0 0
  %350 = vmatpush1.bf16.msra.mxu0 %v257
  %351 = vmatprep.subr.bf16.mxu0 0
  %352 = vmatpush1.bf16.msra.mxu0 %v258
  %353 = vmatprep.subr.bf16.mxu0 0
  %354 = vmatpush1.bf16.msra.mxu0 %v259
  %355 = vmatprep.subr.bf16.mxu0 0
  %356 = vmatpush1.bf16.msra.mxu0 %v260
  %357 = vmatprep.subr.bf16.mxu0 0
  %358 = vmatpush1.bf16.msra.mxu0 %v261
  %359 = vmatprep.subr.bf16.mxu0 0
  %360 = vmatpush1.bf16.msra.mxu0 %v262
  %361 = vmatprep.subr.bf16.mxu0 0
  %362 = vmatpush1.bf16.msra.mxu0 %v263
  %363 = vmatprep.subr.bf16.mxu0 0
  %364 = vmatpush1.bf16.msra.mxu0 %v264
  %365 = vmatprep.subr.bf16.mxu0 0
  %366 = vmatpush1.bf16.msra.mxu0 %v265
  %367 = vmatprep.subr.bf16.mxu0 0
  %368 = vmatpush1.bf16.msra.mxu0 %v266
  %369 = vmatprep.subr.bf16.mxu0 0
  %370 = vmatpush1.bf16.msra.mxu0 %v267
  %371 = vmatprep.subr.bf16.mxu0 0
  %372 = vmatpush1.bf16.msra.mxu0 %v268
  %373 = vmatprep.mubr.bf16.mxu0 %v104
  %374 = vmatmul.mubr.bf16.gmra.mrb[0].mxu0 %v102
  %v375 = vpop.f32.mrb[0].mxu0
  %v376 = vadd.f32 %v336, %v375
  %v377 = vpop.f32.mrb[0].mxu0
  %v378 = vpop.f32.mrb[0].mxu0
  %v379 = vpop.f32.mrb[0].mxu0
  %380 = vdwg.mxu0
  %381 = vst [vmem:[%s3] sm:$0xf] %v376
  // Predicated region
  $region14: #{discriminator_forward.9} parent=0 // pred_check
    _
  $region15: #{discriminator_forward.9} parent=0 // pred_check_branch
    %383 = sbr.rel (0) target = $region17
  $region16: #{discriminator_forward.9} parent=0 // pred_region
    _
  $region17: #{discriminator_forward.9} parent=0 // pred_fallthru
    _
  // Predicated region
  $region18: #{discriminator_forward.9} parent=0 // pred_check
    _
  $region19: #{discriminator_forward.9} parent=0 // pred_check_branch
    %385 = sbr.rel (0) target = $region21
  $region20: #{discriminator_forward.9} parent=0 // pred_region
    _
  $region21: #{discriminator_forward.9} parent=0 // pred_fallthru
    _

</llo_original>
